<compile_context>
chip_gen: v7x
topology: tpu7x:2x2x1
jax: 0.10.0
libtpu: 0.0.40
codegen_flags: <defaults>
</compile_context>

<pallas_src>
import functools

import jax
import jax.numpy as jnp
from jax.experimental import pallas as pl
from jax.experimental.pallas import tpu as pltpu

NEG_INF = -1e30


def _gelu(x):
    # tanh-approximation GELU (EUP tanh), f32 math.
    c = 0.7978845608028654  # sqrt(2/pi)
    return 0.5 * x * (1.0 + jnp.tanh(c * (x + 0.044715 * x * x * x)))


def _round_down_to_multiple(x, c):
    """(x // c) * c for non-negative int32 x; bitwise when c is a power of 2."""
    if c & (c - 1) == 0:
        return x - jnp.bitwise_and(x, c - 1)
    return (x // c) * c


def _mod_const(x, c):
    """x % c for non-negative int32 x; bitwise when c is a power of 2."""
    if c & (c - 1) == 0:
        return jnp.bitwise_and(x, c - 1)
    return x % c


def _mha(x_bf, bias, w_qkv, b_qkv, w_out, b_out, num_heads, dk):
    """Multi-head attention over M = Bb*T rows with an additive [M, M] bias.

    x_bf: [M, D] bf16; bias: [M, M] f32 (0 = attendable, -1e30 = masked, and it
    already encodes same-sequence + key-validity + window/group membership);
    w_qkv: [D, 3*dk] bf16; b_qkv: [1, 3*dk] f32; w_out: [dk, D] bf16;
    b_out: [1, D] f32.
    """
    f32 = jnp.float32
    bf16 = jnp.bfloat16
    M = x_bf.shape[0]
    dh = dk // num_heads
    scale = 1.0 / float(dh) ** 0.5

    # One stacked projection for q, k, v (v = key input, prev_stage_feat=None).
    qkv = jnp.dot(x_bf, w_qkv, preferred_element_type=f32) + b_qkv        # [M, 3dk] f32
    qkv_bf = qkv.astype(bf16)

    y = jnp.zeros((M, w_out.shape[-1]), f32)
    for h in range(num_heads):                  # static, tiny head count (dh=8)
        q = qkv_bf[:, h * dh:(h + 1) * dh]
        k = qkv_bf[:, dk + h * dh:dk + (h + 1) * dh]
        v = qkv_bf[:, 2 * dk + h * dh:2 * dk + (h + 1) * dh]
        s = jax.lax.dot_general(q, k, (((1,), (1,)), ((), ())),
                                preferred_element_type=f32) * scale + bias  # [M, M]
        s = s - jnp.max(s, axis=-1, keepdims=True)
        e = jnp.exp(s)
        p = e * pl.reciprocal(jnp.sum(e, axis=-1, keepdims=True), approx=True)
        o = jnp.dot(p.astype(bf16), v, preferred_element_type=f32)          # [M, dh]
        # out_proj = GELU -> 1x1 conv.  GELU is elementwise and the projection
        # is linear, so project each head with its own weight rows and sum --
        # this removes the lane-concat of per-head outputs.
        y = y + jnp.dot(_gelu(o).astype(bf16), w_out[h * dh:(h + 1) * dh, :],
                        preferred_element_type=f32)
    return y + b_out


# ------------------------------ fused kernel --------------------------------

def _ltc_block_kernel(vlen_ref,                         # SMEM [B] int32 (prefetch)
                      x_ref,                            # (Bb, D, T) NCW input
                      cw_ref, cb_ref,                   # conv: (3, D, D) bf16, (1, D) f32
                      wq_w_ref, wq_b_ref, wo_w_ref, wo_b_ref,   # windowed MHA
                      lq_w_ref, lq_b_ref, lo_w_ref, lo_b_ref,   # LTC MHA
                      lin_w_ref, lin_b_ref,             # out_linear: (D, D), (1, D)
                      o_ref,                            # (Bb, D, T) NCW output
                      *, Bb, T, dilation, win_w, ltc_g, num_heads, dk):
    f32 = jnp.float32
    bf16 = jnp.bfloat16
    M = Bb * T
    g = pl.program_id(0)

    # --- per-sequence valid lengths (SMEM scalar prefetch, no mask DMA) -----
    vl = [vlen_ref[g * Bb + i] for i in range(Bb)]

    # --- per-row bookkeeping: local frame index + valid-frame mask ----------
    r1 = jax.lax.broadcasted_iota(jnp.int32, (M, 1), 0)
    seq_r1 = jnp.zeros((M, 1), jnp.int32)
    vl_r1 = jnp.zeros((M, 1), jnp.int32)
    for i in range(Bb):                                   # static, tiny Bb
        sel = r1 >= i * T
        seq_r1 = jnp.where(sel, i, seq_r1)
        vl_r1 = jnp.where(sel, vl[i], vl_r1)
    t_r1 = r1 - seq_r1 * T                                # local time per row
    tmask = (t_r1 < vl_r1).astype(f32)                    # (M, 1)

    # --- in-kernel attention biases (window / LTC group / validity) ---------
    rr = jax.lax.broadcasted_iota(jnp.int32, (M, M), 0)
    cc = jax.lax.broadcasted_iota(jnp.int32, (M, M), 1)
    seq_r = jnp.zeros((M, M), jnp.int32)
    seq_c = jnp.zeros((M, M), jnp.int32)
    vl_c = jnp.zeros((M, M), jnp.int32)
    for i in range(Bb):
        seq_r = jnp.where(rr >= i * T, i, seq_r)
        sel_c = cc >= i * T
        seq_c = jnp.where(sel_c, i, seq_c)
        vl_c = jnp.where(sel_c, vl[i], vl_c)
    t_r = rr - seq_r * T                                  # query local time
    t_c = cc - seq_c * T                                  # key local time
    base_ok = (seq_r == seq_c) & (t_c < vl_c)             # same seq & valid key

    # Windowed attention: query patch p = t // w attends keys in the
    # overlapping window [p*w - w//2, p*w + 3*w//2)  (convert_to_patches with
    # overlapping_patches=True).
    start = _round_down_to_multiple(t_r, win_w) - win_w // 2
    win_ok = base_ok & (t_c >= start) & (t_c < start + 2 * win_w)
    # LTC attention: query t attends keys u with u % g == t % g.
    ltc_ok = base_ok & (_mod_const(t_r, ltc_g) == _mod_const(t_c, ltc_g))
    win_bias = jnp.where(win_ok, 0.0, NEG_INF).astype(f32)
    ltc_bias = jnp.where(ltc_ok, 0.0, NEG_INF).astype(f32)

    # --- NCW -> time-major (M, D) activations (in-kernel layout change) -----
    x_td = jnp.concatenate(
        [jnp.transpose(x_ref[i].astype(f32)) for i in range(Bb)], axis=0)   # (M, D)
    # Zero padding frames so the dilated-conv taps never read garbage; the
    # final residual is unchanged because everything is re-masked at the end.
    x_td = x_td * tmask

    # --- DilatedConv(k=3, dilation, padding=dilation) + GELU + mask ---------
    # Taps built with XLU rolls along the (sublane) row axis; rows that wrap
    # across the sequence boundary are masked with the local-time iota.
    d = dilation
    x_prev = jnp.where(t_r1 >= d, pltpu.roll(x_td, d, axis=0), 0.0)          # x[t-d]
    x_next = jnp.where(t_r1 < T - d, pltpu.roll(x_td, (M - d) % M, axis=0), 0.0)  # x[t+d]
    conv = (jnp.dot(x_prev.astype(bf16), cw_ref[0], preferred_element_type=f32)
            + jnp.dot(x_td.astype(bf16), cw_ref[1], preferred_element_type=f32)
            + jnp.dot(x_next.astype(bf16), cw_ref[2], preferred_element_type=f32)
            + cb_ref[...])
    out0 = _gelu(conv) * tmask                                               # (M, D) f32

    # instance_norm == nn.Identity()  (use_instance_norm=True)

    # --- windowed attention (+ residual) -------------------------------------
    attn_w = _mha(out0.astype(bf16), win_bias,
                  wq_w_ref[...], wq_b_ref[...], wo_w_ref[...], wo_b_ref[...],
                  num_heads, dk)
    out1 = attn_w * tmask + out0

    # --- long-term-context attention (+ residual) ----------------------------
    attn_l = _mha(out1.astype(bf16), ltc_bias,
                  lq_w_ref[...], lq_b_ref[...], lo_w_ref[...], lo_b_ref[...],
                  num_heads, dk)
    out2 = out1 + attn_l * tmask

    # --- out_linear + dropout (eval no-op) + residual(inputs) + mask, to NCW -
    y = jnp.dot(out2.astype(bf16), lin_w_ref[...], preferred_element_type=f32) \
        + lin_b_ref[...]
    y = (y + x_td) * tmask                                                   # (M, D)
    # NOTE: at D=32 / T=20 neither layout is lane-dense; revisit out layout if
    # the real model_dim / sequence lengths make the store path binding.
    for i in range(Bb):
        o_ref[i] = jnp.transpose(y[i * T:(i + 1) * T, :]).astype(o_ref.dtype)


# -------------------------------- wrapper ------------------------------------

def _pick_block_batch(batch):
    """Largest divisor of `batch` that keeps the grid >= 2 steps (v7x dual-TC)."""
    if batch <= 1:
        return 1
    for bb in range(batch // 2, 0, -1):
        if batch % bb == 0:
            return bb
    return 1


def ltc_block_forward(inputs, masks, params, cfg, block_batch=None):
    """inputs: [B, model_dim, T] (NCW), masks: [B, 1, T] -> [B, model_dim, T] (NCW)."""
    B, D, T = inputs.shape
    dk = params["win"]["w_qkv"].shape[1] // 3
    Bb = _pick_block_batch(B) if block_batch is None else block_batch
    assert B % Bb == 0

    # Binary prefix masks -> per-sequence valid lengths (SMEM scalar prefetch).
    vlen = jnp.round(jnp.sum(masks, axis=(1, 2))).astype(jnp.int32)          # [B]

    kernel = functools.partial(
        _ltc_block_kernel, Bb=Bb, T=T, dilation=cfg["dilation"],
        win_w=cfg["windowed_attn_w"], ltc_g=cfg["long_term_attn_g"],
        num_heads=cfg["num_attn_heads"], dk=dk)

    def const(shape):
        return pl.BlockSpec(shape, lambda g, vl: (0,) * len(shape))

    bf16 = jnp.bfloat16
    out = pl.pallas_call(
        kernel,
        out_shape=jax.ShapeDtypeStruct((B, D, T), inputs.dtype),
        grid_spec=pltpu.PrefetchScalarGridSpec(
            num_scalar_prefetch=1,
            grid=(B // Bb,),
            in_specs=[
                pl.BlockSpec((Bb, D, T), lambda g, vl: (g, 0, 0)),    # x (NCW)
                const((3, D, D)), const((1, D)),                      # dilated conv
                const((D, 3 * dk)), const((1, 3 * dk)),               # win qkv proj
                const((dk, D)), const((1, D)),                        # win out proj
                const((D, 3 * dk)), const((1, 3 * dk)),               # ltc qkv proj
                const((dk, D)), const((1, D)),                        # ltc out proj
                const((D, D)), const((1, D)),                         # out_linear
            ],
            out_specs=pl.BlockSpec((Bb, D, T), lambda g, vl: (g, 0, 0)),
        ),
        compiler_params=pltpu.CompilerParams(
            dimension_semantics=("parallel",),
            vmem_limit_bytes=32 * 1024 * 1024),
    )(vlen, inputs,
      params["conv_w"].astype(bf16), params["conv_b"],
      params["win"]["w_qkv"].astype(bf16), params["win"]["b_qkv"],
      params["win"]["w_out"].astype(bf16), params["win"]["b_out"],
      params["ltc"]["w_qkv"].astype(bf16), params["ltc"]["b_qkv"],
      params["ltc"]["w_out"].astype(bf16), params["ltc"]["b_out"],
      params["lin_w"].astype(bf16), params["lin_b"])

    return out                                                               # [B, D, T]


# ------------------------------ parameters -----------------------------------

def init_params(key, model_dim):
    D = model_dim
    dk = D // 2                    # dim_key == dim_value == model_dim // 2
    keys = iter(jax.random.split(key, 16))

    def nrm(shape, scale=0.1):
        return scale * jax.random.normal(next(keys), shape, jnp.float32)

    def mha():
        # w_qkv columns: [0:dk]=query proj, [dk:2dk]=key proj, [2dk:3dk]=value proj.
        return dict(w_qkv=nrm((D, 3 * dk)), b_qkv=nrm((1, 3 * dk)),
                    w_out=nrm((dk, D)), b_out=nrm((1, D)))

    return dict(
        # conv_w[k] is the (C_in, C_out) matrix for tap k (k=0: x[t-d], k=1: x[t],
        # k=2: x[t+d]); i.e. torch Conv1d weight [Cout, Cin, K] -> W[:, :, k].T.
        conv_w=nrm((3, D, D)),
        conv_b=nrm((1, D)),
        win=mha(),
        ltc=mha(),
        lin_w=nrm((D, D)),
        lin_b=nrm((1, D)),
    )


CONFIG = dict(
    model_dim=32,
    dilation=2,
    windowed_attn_w=8,
    long_term_attn_g=4,
    num_attn_heads=2,          # AttentionParams.num_attn_heads
    use_instance_norm=True,
    dropout_prob=0.0,
)


if __name__ == "__main__":
    cfg = CONFIG
    B, D, T = 4, cfg["model_dim"], 20

    key = jax.random.PRNGKey(0)
    kx, kp = jax.random.split(key)
    inputs = jax.random.normal(kx, (B, D, T), jnp.float32)           # [B, model_dim, T]
    valid_len = jnp.array([T, T - 6, T, T - 11], jnp.int32)
    masks = (jnp.arange(T)[None, None, :]
             < valid_len[:, None, None]).astype(jnp.float32)         # [B, 1, T]

    params = init_params(kp, D)

    fwd = jax.jit(functools.partial(ltc_block_forward, cfg=cfg))
    out = jax.block_until_ready(fwd(inputs, masks, params))
    assert out.shape == (B, D, T)
    assert bool(jnp.all(jnp.isfinite(out)))
    print("KERNEL_OK")
</pallas_src>

<mosaic_0001>
module attributes {stable_mosaic.version = 11 : i64} {
  func.func @_ltc_block_kernel(%arg0: i32, %arg1: memref<4xi32, #tpu.memory_space<smem>>, %arg2: memref<2x32x20xf32, #tpu.memory_space<vmem>>, %arg3: memref<3x32x32xbf16, #tpu.memory_space<vmem>>, %arg4: memref<1x32xf32, #tpu.memory_space<vmem>>, %arg5: memref<32x48xbf16, #tpu.memory_space<vmem>>, %arg6: memref<1x48xf32, #tpu.memory_space<vmem>>, %arg7: memref<16x32xbf16, #tpu.memory_space<vmem>>, %arg8: memref<1x32xf32, #tpu.memory_space<vmem>>, %arg9: memref<32x48xbf16, #tpu.memory_space<vmem>>, %arg10: memref<1x48xf32, #tpu.memory_space<vmem>>, %arg11: memref<16x32xbf16, #tpu.memory_space<vmem>>, %arg12: memref<1x32xf32, #tpu.memory_space<vmem>>, %arg13: memref<32x32xbf16, #tpu.memory_space<vmem>>, %arg14: memref<1x32xf32, #tpu.memory_space<vmem>>, %arg15: memref<2x32x20xf32, #tpu.memory_space<vmem>>) attributes {dimension_semantics = [#tpu.dimension_semantics<parallel>], iteration_bounds = array<i64: 2>, scalar_prefetch = 1 : i64, scratch_operands = 0 : i64, tpu.core_type = #tpu.core_type<tc>, window_params = [{transform_indices = @transform_0, window_bounds = array<i64: 2, 32, 20>}, {pipeline_mode = #tpu.pipeline_mode<synchronous>, transform_indices = @transform_1, window_bounds = array<i64: 3, 32, 32>}, {pipeline_mode = #tpu.pipeline_mode<synchronous>, transform_indices = @transform_2, window_bounds = array<i64: 1, 32>}, {pipeline_mode = #tpu.pipeline_mode<synchronous>, transform_indices = @transform_3, window_bounds = array<i64: 32, 48>}, {pipeline_mode = #tpu.pipeline_mode<synchronous>, transform_indices = @transform_4, window_bounds = array<i64: 1, 48>}, {pipeline_mode = #tpu.pipeline_mode<synchronous>, transform_indices = @transform_5, window_bounds = array<i64: 16, 32>}, {pipeline_mode = #tpu.pipeline_mode<synchronous>, transform_indices = @transform_6, window_bounds = array<i64: 1, 32>}, {pipeline_mode = #tpu.pipeline_mode<synchronous>, transform_indices = @transform_7, window_bounds = array<i64: 32, 48>}, {pipeline_mode = #tpu.pipeline_mode<synchronous>, transform_indices = @transform_8, window_bounds = array<i64: 1, 48>}, {pipeline_mode = #tpu.pipeline_mode<synchronous>, transform_indices = @transform_9, window_bounds = array<i64: 16, 32>}, {pipeline_mode = #tpu.pipeline_mode<synchronous>, transform_indices = @transform_10, window_bounds = array<i64: 1, 32>}, {pipeline_mode = #tpu.pipeline_mode<synchronous>, transform_indices = @transform_11, window_bounds = array<i64: 32, 32>}, {pipeline_mode = #tpu.pipeline_mode<synchronous>, transform_indices = @transform_12, window_bounds = array<i64: 1, 32>}, {transform_indices = @transform_13, window_bounds = array<i64: 2, 32, 20>}]} {
    %c2_i32 = arith.constant 2 : i32
    %0 = arith.muli %arg0, %c2_i32 : i32
    %c0_i32 = arith.constant 0 : i32
    %1 = arith.addi %0, %c0_i32 : i32
    %2 = arith.index_cast %1 : i32 to index
    %3 = memref.load %arg1[%2] : memref<4xi32, #tpu.memory_space<smem>>
    %c2_i32_0 = arith.constant 2 : i32
    %4 = arith.muli %arg0, %c2_i32_0 : i32
    %c1_i32 = arith.constant 1 : i32
    %5 = arith.addi %4, %c1_i32 : i32
    %6 = arith.index_cast %5 : i32 to index
    %7 = memref.load %arg1[%6] : memref<4xi32, #tpu.memory_space<smem>>
    %8 = tpu.iota {dimensions = array<i32: 0>} : vector<40x1xi32>
    %c0_i32_1 = arith.constant 0 : i32
    %9 = vector.broadcast %c0_i32_1 : i32 to vector<40x1xi32>
    %c0_i32_2 = arith.constant 0 : i32
    %10 = vector.broadcast %c0_i32_2 : i32 to vector<40x1xi32>
    %c0_i32_3 = arith.constant 0 : i32
    %11 = vector.broadcast %c0_i32_3 : i32 to vector<40x1xi32>
    %12 = arith.cmpi sge, %8, %11 : vector<40x1xi32>
    %c0_i32_4 = arith.constant 0 : i32
    %13 = vector.broadcast %c0_i32_4 : i32 to vector<40x1xi32>
    %14 = arith.select %12, %13, %9 : vector<40x1xi1>, vector<40x1xi32>
    %15 = vector.broadcast %3 : i32 to vector<40x1xi32>
    %16 = arith.select %12, %15, %10 : vector<40x1xi1>, vector<40x1xi32>
    %c20_i32 = arith.constant 20 : i32
    %17 = vector.broadcast %c20_i32 : i32 to vector<40x1xi32>
    %18 = arith.cmpi sge, %8, %17 : vector<40x1xi32>
    %c1_i32_5 = arith.constant 1 : i32
    %19 = vector.broadcast %c1_i32_5 : i32 to vector<40x1xi32>
    %20 = arith.select %18, %19, %14 : vector<40x1xi1>, vector<40x1xi32>
    %21 = vector.broadcast %7 : i32 to vector<40x1xi32>
    %22 = arith.select %18, %21, %16 : vector<40x1xi1>, vector<40x1xi32>
    %c20_i32_6 = arith.constant 20 : i32
    %23 = vector.broadcast %c20_i32_6 : i32 to vector<40x1xi32>
    %24 = arith.muli %20, %23 : vector<40x1xi32>
    %25 = arith.subi %8, %24 : vector<40x1xi32>
    %26 = arith.cmpi slt, %25, %22 : vector<40x1xi32>
    %27 = arith.extui %26 : vector<40x1xi1> to vector<40x1xi32>
    %28 = arith.sitofp %27 : vector<40x1xi32> to vector<40x1xf32>
    %29 = tpu.iota {dimensions = array<i32: 0>} : vector<40x40xi32>
    %30 = tpu.iota {dimensions = array<i32: 1>} : vector<40x40xi32>
    %c0_i32_7 = arith.constant 0 : i32
    %31 = vector.broadcast %c0_i32_7 : i32 to vector<40x40xi32>
    %c0_i32_8 = arith.constant 0 : i32
    %32 = vector.broadcast %c0_i32_8 : i32 to vector<40x40xi32>
    %c0_i32_9 = arith.constant 0 : i32
    %33 = vector.broadcast %c0_i32_9 : i32 to vector<40x40xi32>
    %c0_i32_10 = arith.constant 0 : i32
    %34 = vector.broadcast %c0_i32_10 : i32 to vector<40x40xi32>
    %35 = arith.cmpi sge, %29, %34 : vector<40x40xi32>
    %c0_i32_11 = arith.constant 0 : i32
    %36 = vector.broadcast %c0_i32_11 : i32 to vector<40x40xi32>
    %37 = arith.select %35, %36, %31 : vector<40x40xi1>, vector<40x40xi32>
    %c0_i32_12 = arith.constant 0 : i32
    %38 = vector.broadcast %c0_i32_12 : i32 to vector<40x40xi32>
    %39 = arith.cmpi sge, %30, %38 : vector<40x40xi32>
    %c0_i32_13 = arith.constant 0 : i32
    %40 = vector.broadcast %c0_i32_13 : i32 to vector<40x40xi32>
    %41 = arith.select %39, %40, %32 : vector<40x40xi1>, vector<40x40xi32>
    %42 = vector.broadcast %3 : i32 to vector<40x40xi32>
    %43 = arith.select %39, %42, %33 : vector<40x40xi1>, vector<40x40xi32>
    %c20_i32_14 = arith.constant 20 : i32
    %44 = vector.broadcast %c20_i32_14 : i32 to vector<40x40xi32>
    %45 = arith.cmpi sge, %29, %44 : vector<40x40xi32>
    %c1_i32_15 = arith.constant 1 : i32
    %46 = vector.broadcast %c1_i32_15 : i32 to vector<40x40xi32>
    %47 = arith.select %45, %46, %37 : vector<40x40xi1>, vector<40x40xi32>
    %c20_i32_16 = arith.constant 20 : i32
    %48 = vector.broadcast %c20_i32_16 : i32 to vector<40x40xi32>
    %49 = arith.cmpi sge, %30, %48 : vector<40x40xi32>
    %c1_i32_17 = arith.constant 1 : i32
    %50 = vector.broadcast %c1_i32_17 : i32 to vector<40x40xi32>
    %51 = arith.select %49, %50, %41 : vector<40x40xi1>, vector<40x40xi32>
    %52 = vector.broadcast %7 : i32 to vector<40x40xi32>
    %53 = arith.select %49, %52, %43 : vector<40x40xi1>, vector<40x40xi32>
    %c20_i32_18 = arith.constant 20 : i32
    %54 = vector.broadcast %c20_i32_18 : i32 to vector<40x40xi32>
    %55 = arith.muli %47, %54 : vector<40x40xi32>
    %56 = arith.subi %29, %55 : vector<40x40xi32>
    %c20_i32_19 = arith.constant 20 : i32
    %57 = vector.broadcast %c20_i32_19 : i32 to vector<40x40xi32>
    %58 = arith.muli %51, %57 : vector<40x40xi32>
    %59 = arith.subi %30, %58 : vector<40x40xi32>
    %60 = arith.cmpi eq, %47, %51 : vector<40x40xi32>
    %61 = arith.cmpi slt, %59, %53 : vector<40x40xi32>
    %62 = arith.andi %60, %61 : vector<40x40xi1>
    %c7_i32 = arith.constant 7 : i32
    %63 = vector.broadcast %c7_i32 : i32 to vector<40x40xi32>
    %64 = arith.andi %56, %63 : vector<40x40xi32>
    %65 = arith.subi %56, %64 : vector<40x40xi32>
    %c4_i32 = arith.constant 4 : i32
    %66 = vector.broadcast %c4_i32 : i32 to vector<40x40xi32>
    %67 = arith.subi %65, %66 : vector<40x40xi32>
    %68 = arith.cmpi sge, %59, %67 : vector<40x40xi32>
    %69 = arith.andi %62, %68 : vector<40x40xi1>
    %c16_i32 = arith.constant 16 : i32
    %70 = vector.broadcast %c16_i32 : i32 to vector<40x40xi32>
    %71 = arith.addi %67, %70 : vector<40x40xi32>
    %72 = arith.cmpi slt, %59, %71 : vector<40x40xi32>
    %73 = arith.andi %69, %72 : vector<40x40xi1>
    %c3_i32 = arith.constant 3 : i32
    %74 = vector.broadcast %c3_i32 : i32 to vector<40x40xi32>
    %75 = arith.andi %56, %74 : vector<40x40xi32>
    %c3_i32_20 = arith.constant 3 : i32
    %76 = vector.broadcast %c3_i32_20 : i32 to vector<40x40xi32>
    %77 = arith.andi %59, %76 : vector<40x40xi32>
    %78 = arith.cmpi eq, %75, %77 : vector<40x40xi32>
    %79 = arith.andi %62, %78 : vector<40x40xi1>
    %cst = arith.constant 0.000000e+00 : f32
    %cst_21 = arith.constant -1.000000e+30 : f32
    %80 = vector.broadcast %cst : f32 to vector<40x40xf32>
    %81 = vector.broadcast %cst_21 : f32 to vector<40x40xf32>
    %82 = arith.select %73, %80, %81 : vector<40x40xi1>, vector<40x40xf32>
    %cst_22 = arith.constant 0.000000e+00 : f32
    %cst_23 = arith.constant -1.000000e+30 : f32
    %83 = vector.broadcast %cst_22 : f32 to vector<40x40xf32>
    %84 = vector.broadcast %cst_23 : f32 to vector<40x40xf32>
    %85 = arith.select %79, %83, %84 : vector<40x40xi1>, vector<40x40xf32>
    %c0 = arith.constant 0 : index
    %c0_24 = arith.constant 0 : index
    %c0_25 = arith.constant 0 : index
    %86 = vector.load %arg2[%c0, %c0_24, %c0_25] : memref<2x32x20xf32, #tpu.memory_space<vmem>>, vector<1x32x20xf32>
    %87 = vector.shape_cast %86 : vector<1x32x20xf32> to vector<32x20xf32>
    %88 = tpu.transpose %87, [1, 0] : vector<32x20xf32> -> vector<20x32xf32>
    %c1 = arith.constant 1 : index
    %c0_26 = arith.constant 0 : index
    %c0_27 = arith.constant 0 : index
    %89 = vector.load %arg2[%c1, %c0_26, %c0_27] : memref<2x32x20xf32, #tpu.memory_space<vmem>>, vector<1x32x20xf32>
    %90 = vector.shape_cast %89 : vector<1x32x20xf32> to vector<32x20xf32>
    %91 = tpu.transpose %90, [1, 0] : vector<32x20xf32> -> vector<20x32xf32>
    %92 = tpu.concatenate %88, %91 in 0 : vector<20x32xf32>, vector<20x32xf32> -> vector<40x32xf32>
    %93 = vector.broadcast %28 : vector<40x1xf32> to vector<40x32xf32>
    %94 = arith.mulf %92, %93 : vector<40x32xf32>
    %c2_i32_28 = arith.constant 2 : i32
    %95 = vector.broadcast %c2_i32_28 : i32 to vector<40x1xi32>
    %96 = arith.cmpi sge, %25, %95 : vector<40x1xi32>
    %c2_i32_29 = arith.constant 2 : i32
    %97 = tpu.dynamic_rotate %94 by %c2_i32_29 dim 0 : vector<40x32xf32>, i32 -> vector<40x32xf32>
    %cst_30 = arith.constant 0.000000e+00 : f32
    %98 = vector.shape_cast %96 : vector<40x1xi1> to vector<40x1xi1>
    %99 = vector.broadcast %98 : vector<40x1xi1> to vector<40x32xi1>
    %100 = vector.broadcast %cst_30 : f32 to vector<40x32xf32>
    %101 = arith.select %99, %97, %100 : vector<40x32xi1>, vector<40x32xf32>
    %c18_i32 = arith.constant 18 : i32
    %102 = vector.broadcast %c18_i32 : i32 to vector<40x1xi32>
    %103 = arith.cmpi slt, %25, %102 : vector<40x1xi32>
    %c38_i32 = arith.constant 38 : i32
    %104 = tpu.dynamic_rotate %94 by %c38_i32 dim 0 : vector<40x32xf32>, i32 -> vector<40x32xf32>
    %cst_31 = arith.constant 0.000000e+00 : f32
    %105 = vector.shape_cast %103 : vector<40x1xi1> to vector<40x1xi1>
    %106 = vector.broadcast %105 : vector<40x1xi1> to vector<40x32xi1>
    %107 = vector.broadcast %cst_31 : f32 to vector<40x32xf32>
    %108 = arith.select %106, %104, %107 : vector<40x32xi1>, vector<40x32xf32>
    %109 = arith.truncf %101 : vector<40x32xf32> to vector<40x32xbf16>
    %c0_32 = arith.constant 0 : index
    %c0_33 = arith.constant 0 : index
    %c0_34 = arith.constant 0 : index
    %110 = vector.load %arg3[%c0_32, %c0_33, %c0_34] : memref<3x32x32xbf16, #tpu.memory_space<vmem>>, vector<1x32x32xbf16>
    %111 = vector.shape_cast %110 : vector<1x32x32xbf16> to vector<32x32xbf16>
    %cst_35 = arith.constant dense<0.000000e+00> : vector<40x32xf32>
    %112 = tpu.matmul %109, %111, %cst_35 {dimension_numbers = #tpu.dot_dimension_numbers<[1], [0], [0], [1], [0, 0, 1, 1], [], []>} : vector<40x32xbf16>, vector<32x32xbf16>, vector<40x32xf32> -> vector<40x32xf32>
    %113 = arith.truncf %94 : vector<40x32xf32> to vector<40x32xbf16>
    %c1_36 = arith.constant 1 : index
    %c0_37 = arith.constant 0 : index
    %c0_38 = arith.constant 0 : index
    %114 = vector.load %arg3[%c1_36, %c0_37, %c0_38] : memref<3x32x32xbf16, #tpu.memory_space<vmem>>, vector<1x32x32xbf16>
    %115 = vector.shape_cast %114 : vector<1x32x32xbf16> to vector<32x32xbf16>
    %cst_39 = arith.constant dense<0.000000e+00> : vector<40x32xf32>
    %116 = tpu.matmul %113, %115, %cst_39 {dimension_numbers = #tpu.dot_dimension_numbers<[1], [0], [0], [1], [0, 0, 1, 1], [], []>} : vector<40x32xbf16>, vector<32x32xbf16>, vector<40x32xf32> -> vector<40x32xf32>
    %117 = arith.addf %112, %116 : vector<40x32xf32>
    %118 = arith.truncf %108 : vector<40x32xf32> to vector<40x32xbf16>
    %c2 = arith.constant 2 : index
    %c0_40 = arith.constant 0 : index
    %c0_41 = arith.constant 0 : index
    %119 = vector.load %arg3[%c2, %c0_40, %c0_41] : memref<3x32x32xbf16, #tpu.memory_space<vmem>>, vector<1x32x32xbf16>
    %120 = vector.shape_cast %119 : vector<1x32x32xbf16> to vector<32x32xbf16>
    %cst_42 = arith.constant dense<0.000000e+00> : vector<40x32xf32>
    %121 = tpu.matmul %118, %120, %cst_42 {dimension_numbers = #tpu.dot_dimension_numbers<[1], [0], [0], [1], [0, 0, 1, 1], [], []>} : vector<40x32xbf16>, vector<32x32xbf16>, vector<40x32xf32> -> vector<40x32xf32>
    %122 = arith.addf %117, %121 : vector<40x32xf32>
    %c0_43 = arith.constant 0 : index
    %c0_44 = arith.constant 0 : index
    %123 = vector.load %arg4[%c0_43, %c0_44] : memref<1x32xf32, #tpu.memory_space<vmem>>, vector<1x32xf32>
    %124 = vector.broadcast %123 : vector<1x32xf32> to vector<40x32xf32>
    %125 = arith.addf %122, %124 : vector<40x32xf32>
    %cst_45 = arith.constant 5.000000e-01 : f32
    %126 = vector.broadcast %cst_45 : f32 to vector<40x32xf32>
    %127 = arith.mulf %126, %125 : vector<40x32xf32>
    %cst_46 = arith.constant 4.471500e-02 : f32
    %128 = vector.broadcast %cst_46 : f32 to vector<40x32xf32>
    %129 = arith.mulf %128, %125 : vector<40x32xf32>
    %130 = arith.mulf %129, %125 : vector<40x32xf32>
    %131 = arith.mulf %130, %125 : vector<40x32xf32>
    %132 = arith.addf %125, %131 : vector<40x32xf32>
    %cst_47 = arith.constant 0.797884583 : f32
    %133 = vector.broadcast %cst_47 : f32 to vector<40x32xf32>
    %134 = arith.mulf %133, %132 : vector<40x32xf32>
    %135 = math.tanh %134 : vector<40x32xf32>
    %cst_48 = arith.constant 1.000000e+00 : f32
    %136 = vector.broadcast %cst_48 : f32 to vector<40x32xf32>
    %137 = arith.addf %136, %135 : vector<40x32xf32>
    %138 = arith.mulf %127, %137 : vector<40x32xf32>
    %139 = vector.broadcast %28 : vector<40x1xf32> to vector<40x32xf32>
    %140 = arith.mulf %138, %139 : vector<40x32xf32>
    %141 = arith.truncf %140 : vector<40x32xf32> to vector<40x32xbf16>
    %c0_49 = arith.constant 0 : index
    %c0_50 = arith.constant 0 : index
    %142 = vector.load %arg5[%c0_49, %c0_50] : memref<32x48xbf16, #tpu.memory_space<vmem>>, vector<32x48xbf16>
    %c0_51 = arith.constant 0 : index
    %c0_52 = arith.constant 0 : index
    %143 = vector.load %arg6[%c0_51, %c0_52] : memref<1x48xf32, #tpu.memory_space<vmem>>, vector<1x48xf32>
    %c0_53 = arith.constant 0 : index
    %c0_54 = arith.constant 0 : index
    %144 = vector.load %arg7[%c0_53, %c0_54] : memref<16x32xbf16, #tpu.memory_space<vmem>>, vector<16x32xbf16>
    %c0_55 = arith.constant 0 : index
    %c0_56 = arith.constant 0 : index
    %145 = vector.load %arg8[%c0_55, %c0_56] : memref<1x32xf32, #tpu.memory_space<vmem>>, vector<1x32xf32>
    %cst_57 = arith.constant dense<0.000000e+00> : vector<40x48xf32>
    %146 = tpu.matmul %141, %142, %cst_57 {dimension_numbers = #tpu.dot_dimension_numbers<[1], [0], [0], [1], [0, 0, 1, 1], [], []>} : vector<40x32xbf16>, vector<32x48xbf16>, vector<40x48xf32> -> vector<40x48xf32>
    %147 = vector.broadcast %143 : vector<1x48xf32> to vector<40x48xf32>
    %148 = arith.addf %146, %147 : vector<40x48xf32>
    %149 = arith.truncf %148 : vector<40x48xf32> to vector<40x48xbf16>
    %cst_58 = arith.constant 0.000000e+00 : f32
    %150 = vector.broadcast %cst_58 : f32 to vector<40x32xf32>
    %151 = vector.extract_strided_slice %149 {offsets = [0, 0], sizes = [40, 8], strides = [1, 1]} : vector<40x48xbf16> to vector<40x8xbf16>
    %152 = vector.extract_strided_slice %149 {offsets = [0, 16], sizes = [40, 8], strides = [1, 1]} : vector<40x48xbf16> to vector<40x8xbf16>
    %153 = vector.extract_strided_slice %149 {offsets = [0, 32], sizes = [40, 8], strides = [1, 1]} : vector<40x48xbf16> to vector<40x8xbf16>
    %cst_59 = arith.constant dense<0.000000e+00> : vector<40x40xf32>
    %154 = tpu.matmul %151, %152, %cst_59 {dimension_numbers = #tpu.dot_dimension_numbers<[1], [1], [0], [0], [0, 0, 1, 0], [], []>} : vector<40x8xbf16>, vector<40x8xbf16>, vector<40x40xf32> -> vector<40x40xf32>
    %cst_60 = arith.constant 0.353553385 : f32
    %155 = vector.broadcast %cst_60 : f32 to vector<40x40xf32>
    %156 = arith.mulf %154, %155 : vector<40x40xf32>
    %157 = arith.addf %156, %82 : vector<40x40xf32>
    %cst_61 = arith.constant dense<0xFF800000> : vector<40xf32>
    %158 = vector.multi_reduction <maximumf>, %157, %cst_61 [1] : vector<40x40xf32> to vector<40xf32>
    %159 = vector.shape_cast %158 : vector<40xf32> to vector<40x1xf32>
    %160 = vector.broadcast %159 : vector<40x1xf32> to vector<40x40xf32>
    %161 = arith.subf %157, %160 : vector<40x40xf32>
    %162 = math.exp %161 : vector<40x40xf32>
    %cst_62 = arith.constant dense<0.000000e+00> : vector<40xf32>
    %163 = vector.multi_reduction <add>, %162, %cst_62 [1] : vector<40x40xf32> to vector<40xf32>
    %164 = vector.shape_cast %163 : vector<40xf32> to vector<40x1xf32>
    %165 = tpu.reciprocal %164 {approx = true} : vector<40x1xf32> -> vector<40x1xf32>
    %166 = vector.broadcast %165 : vector<40x1xf32> to vector<40x40xf32>
    %167 = arith.mulf %162, %166 : vector<40x40xf32>
    %168 = arith.truncf %167 : vector<40x40xf32> to vector<40x40xbf16>
    %cst_63 = arith.constant dense<0.000000e+00> : vector<40x8xf32>
    %169 = tpu.matmul %168, %153, %cst_63 {dimension_numbers = #tpu.dot_dimension_numbers<[1], [0], [0], [1], [0, 0, 1, 1], [], []>} : vector<40x40xbf16>, vector<40x8xbf16>, vector<40x8xf32> -> vector<40x8xf32>
    %cst_64 = arith.constant 5.000000e-01 : f32
    %170 = vector.broadcast %cst_64 : f32 to vector<40x8xf32>
    %171 = arith.mulf %170, %169 : vector<40x8xf32>
    %cst_65 = arith.constant 4.471500e-02 : f32
    %172 = vector.broadcast %cst_65 : f32 to vector<40x8xf32>
    %173 = arith.mulf %172, %169 : vector<40x8xf32>
    %174 = arith.mulf %173, %169 : vector<40x8xf32>
    %175 = arith.mulf %174, %169 : vector<40x8xf32>
    %176 = arith.addf %169, %175 : vector<40x8xf32>
    %cst_66 = arith.constant 0.797884583 : f32
    %177 = vector.broadcast %cst_66 : f32 to vector<40x8xf32>
    %178 = arith.mulf %177, %176 : vector<40x8xf32>
    %179 = math.tanh %178 : vector<40x8xf32>
    %cst_67 = arith.constant 1.000000e+00 : f32
    %180 = vector.broadcast %cst_67 : f32 to vector<40x8xf32>
    %181 = arith.addf %180, %179 : vector<40x8xf32>
    %182 = arith.mulf %171, %181 : vector<40x8xf32>
    %183 = arith.truncf %182 : vector<40x8xf32> to vector<40x8xbf16>
    %184 = vector.extract_strided_slice %144 {offsets = [0, 0], sizes = [8, 32], strides = [1, 1]} : vector<16x32xbf16> to vector<8x32xbf16>
    %cst_68 = arith.constant dense<0.000000e+00> : vector<40x32xf32>
    %185 = tpu.matmul %183, %184, %cst_68 {dimension_numbers = #tpu.dot_dimension_numbers<[1], [0], [0], [1], [0, 0, 1, 1], [], []>} : vector<40x8xbf16>, vector<8x32xbf16>, vector<40x32xf32> -> vector<40x32xf32>
    %186 = arith.addf %150, %185 : vector<40x32xf32>
    %187 = vector.extract_strided_slice %149 {offsets = [0, 8], sizes = [40, 8], strides = [1, 1]} : vector<40x48xbf16> to vector<40x8xbf16>
    %188 = vector.extract_strided_slice %149 {offsets = [0, 24], sizes = [40, 8], strides = [1, 1]} : vector<40x48xbf16> to vector<40x8xbf16>
    %189 = vector.extract_strided_slice %149 {offsets = [0, 40], sizes = [40, 8], strides = [1, 1]} : vector<40x48xbf16> to vector<40x8xbf16>
    %cst_69 = arith.constant dense<0.000000e+00> : vector<40x40xf32>
    %190 = tpu.matmul %187, %188, %cst_69 {dimension_numbers = #tpu.dot_dimension_numbers<[1], [1], [0], [0], [0, 0, 1, 0], [], []>} : vector<40x8xbf16>, vector<40x8xbf16>, vector<40x40xf32> -> vector<40x40xf32>
    %cst_70 = arith.constant 0.353553385 : f32
    %191 = vector.broadcast %cst_70 : f32 to vector<40x40xf32>
    %192 = arith.mulf %190, %191 : vector<40x40xf32>
    %193 = arith.addf %192, %82 : vector<40x40xf32>
    %cst_71 = arith.constant dense<0xFF800000> : vector<40xf32>
    %194 = vector.multi_reduction <maximumf>, %193, %cst_71 [1] : vector<40x40xf32> to vector<40xf32>
    %195 = vector.shape_cast %194 : vector<40xf32> to vector<40x1xf32>
    %196 = vector.broadcast %195 : vector<40x1xf32> to vector<40x40xf32>
    %197 = arith.subf %193, %196 : vector<40x40xf32>
    %198 = math.exp %197 : vector<40x40xf32>
    %cst_72 = arith.constant dense<0.000000e+00> : vector<40xf32>
    %199 = vector.multi_reduction <add>, %198, %cst_72 [1] : vector<40x40xf32> to vector<40xf32>
    %200 = vector.shape_cast %199 : vector<40xf32> to vector<40x1xf32>
    %201 = tpu.reciprocal %200 {approx = true} : vector<40x1xf32> -> vector<40x1xf32>
    %202 = vector.broadcast %201 : vector<40x1xf32> to vector<40x40xf32>
    %203 = arith.mulf %198, %202 : vector<40x40xf32>
    %204 = arith.truncf %203 : vector<40x40xf32> to vector<40x40xbf16>
    %cst_73 = arith.constant dense<0.000000e+00> : vector<40x8xf32>
    %205 = tpu.matmul %204, %189, %cst_73 {dimension_numbers = #tpu.dot_dimension_numbers<[1], [0], [0], [1], [0, 0, 1, 1], [], []>} : vector<40x40xbf16>, vector<40x8xbf16>, vector<40x8xf32> -> vector<40x8xf32>
    %cst_74 = arith.constant 5.000000e-01 : f32
    %206 = vector.broadcast %cst_74 : f32 to vector<40x8xf32>
    %207 = arith.mulf %206, %205 : vector<40x8xf32>
    %cst_75 = arith.constant 4.471500e-02 : f32
    %208 = vector.broadcast %cst_75 : f32 to vector<40x8xf32>
    %209 = arith.mulf %208, %205 : vector<40x8xf32>
    %210 = arith.mulf %209, %205 : vector<40x8xf32>
    %211 = arith.mulf %210, %205 : vector<40x8xf32>
    %212 = arith.addf %205, %211 : vector<40x8xf32>
    %cst_76 = arith.constant 0.797884583 : f32
    %213 = vector.broadcast %cst_76 : f32 to vector<40x8xf32>
    %214 = arith.mulf %213, %212 : vector<40x8xf32>
    %215 = math.tanh %214 : vector<40x8xf32>
    %cst_77 = arith.constant 1.000000e+00 : f32
    %216 = vector.broadcast %cst_77 : f32 to vector<40x8xf32>
    %217 = arith.addf %216, %215 : vector<40x8xf32>
    %218 = arith.mulf %207, %217 : vector<40x8xf32>
    %219 = arith.truncf %218 : vector<40x8xf32> to vector<40x8xbf16>
    %220 = vector.extract_strided_slice %144 {offsets = [8, 0], sizes = [8, 32], strides = [1, 1]} : vector<16x32xbf16> to vector<8x32xbf16>
    %cst_78 = arith.constant dense<0.000000e+00> : vector<40x32xf32>
    %221 = tpu.matmul %219, %220, %cst_78 {dimension_numbers = #tpu.dot_dimension_numbers<[1], [0], [0], [1], [0, 0, 1, 1], [], []>} : vector<40x8xbf16>, vector<8x32xbf16>, vector<40x32xf32> -> vector<40x32xf32>
    %222 = arith.addf %186, %221 : vector<40x32xf32>
    %223 = vector.broadcast %145 : vector<1x32xf32> to vector<40x32xf32>
    %224 = arith.addf %222, %223 : vector<40x32xf32>
    %225 = vector.broadcast %28 : vector<40x1xf32> to vector<40x32xf32>
    %226 = arith.mulf %224, %225 : vector<40x32xf32>
    %227 = arith.addf %226, %140 : vector<40x32xf32>
    %228 = arith.truncf %227 : vector<40x32xf32> to vector<40x32xbf16>
    %c0_79 = arith.constant 0 : index
    %c0_80 = arith.constant 0 : index
    %229 = vector.load %arg9[%c0_79, %c0_80] : memref<32x48xbf16, #tpu.memory_space<vmem>>, vector<32x48xbf16>
    %c0_81 = arith.constant 0 : index
    %c0_82 = arith.constant 0 : index
    %230 = vector.load %arg10[%c0_81, %c0_82] : memref<1x48xf32, #tpu.memory_space<vmem>>, vector<1x48xf32>
    %c0_83 = arith.constant 0 : index
    %c0_84 = arith.constant 0 : index
    %231 = vector.load %arg11[%c0_83, %c0_84] : memref<16x32xbf16, #tpu.memory_space<vmem>>, vector<16x32xbf16>
    %c0_85 = arith.constant 0 : index
    %c0_86 = arith.constant 0 : index
    %232 = vector.load %arg12[%c0_85, %c0_86] : memref<1x32xf32, #tpu.memory_space<vmem>>, vector<1x32xf32>
    %cst_87 = arith.constant dense<0.000000e+00> : vector<40x48xf32>
    %233 = tpu.matmul %228, %229, %cst_87 {dimension_numbers = #tpu.dot_dimension_numbers<[1], [0], [0], [1], [0, 0, 1, 1], [], []>} : vector<40x32xbf16>, vector<32x48xbf16>, vector<40x48xf32> -> vector<40x48xf32>
    %234 = vector.broadcast %230 : vector<1x48xf32> to vector<40x48xf32>
    %235 = arith.addf %233, %234 : vector<40x48xf32>
    %236 = arith.truncf %235 : vector<40x48xf32> to vector<40x48xbf16>
    %cst_88 = arith.constant 0.000000e+00 : f32
    %237 = vector.broadcast %cst_88 : f32 to vector<40x32xf32>
    %238 = vector.extract_strided_slice %236 {offsets = [0, 0], sizes = [40, 8], strides = [1, 1]} : vector<40x48xbf16> to vector<40x8xbf16>
    %239 = vector.extract_strided_slice %236 {offsets = [0, 16], sizes = [40, 8], strides = [1, 1]} : vector<40x48xbf16> to vector<40x8xbf16>
    %240 = vector.extract_strided_slice %236 {offsets = [0, 32], sizes = [40, 8], strides = [1, 1]} : vector<40x48xbf16> to vector<40x8xbf16>
    %cst_89 = arith.constant dense<0.000000e+00> : vector<40x40xf32>
    %241 = tpu.matmul %238, %239, %cst_89 {dimension_numbers = #tpu.dot_dimension_numbers<[1], [1], [0], [0], [0, 0, 1, 0], [], []>} : vector<40x8xbf16>, vector<40x8xbf16>, vector<40x40xf32> -> vector<40x40xf32>
    %cst_90 = arith.constant 0.353553385 : f32
    %242 = vector.broadcast %cst_90 : f32 to vector<40x40xf32>
    %243 = arith.mulf %241, %242 : vector<40x40xf32>
    %244 = arith.addf %243, %85 : vector<40x40xf32>
    %cst_91 = arith.constant dense<0xFF800000> : vector<40xf32>
    %245 = vector.multi_reduction <maximumf>, %244, %cst_91 [1] : vector<40x40xf32> to vector<40xf32>
    %246 = vector.shape_cast %245 : vector<40xf32> to vector<40x1xf32>
    %247 = vector.broadcast %246 : vector<40x1xf32> to vector<40x40xf32>
    %248 = arith.subf %244, %247 : vector<40x40xf32>
    %249 = math.exp %248 : vector<40x40xf32>
    %cst_92 = arith.constant dense<0.000000e+00> : vector<40xf32>
    %250 = vector.multi_reduction <add>, %249, %cst_92 [1] : vector<40x40xf32> to vector<40xf32>
    %251 = vector.shape_cast %250 : vector<40xf32> to vector<40x1xf32>
    %252 = tpu.reciprocal %251 {approx = true} : vector<40x1xf32> -> vector<40x1xf32>
    %253 = vector.broadcast %252 : vector<40x1xf32> to vector<40x40xf32>
    %254 = arith.mulf %249, %253 : vector<40x40xf32>
    %255 = arith.truncf %254 : vector<40x40xf32> to vector<40x40xbf16>
    %cst_93 = arith.constant dense<0.000000e+00> : vector<40x8xf32>
    %256 = tpu.matmul %255, %240, %cst_93 {dimension_numbers = #tpu.dot_dimension_numbers<[1], [0], [0], [1], [0, 0, 1, 1], [], []>} : vector<40x40xbf16>, vector<40x8xbf16>, vector<40x8xf32> -> vector<40x8xf32>
    %cst_94 = arith.constant 5.000000e-01 : f32
    %257 = vector.broadcast %cst_94 : f32 to vector<40x8xf32>
    %258 = arith.mulf %257, %256 : vector<40x8xf32>
    %cst_95 = arith.constant 4.471500e-02 : f32
    %259 = vector.broadcast %cst_95 : f32 to vector<40x8xf32>
    %260 = arith.mulf %259, %256 : vector<40x8xf32>
    %261 = arith.mulf %260, %256 : vector<40x8xf32>
    %262 = arith.mulf %261, %256 : vector<40x8xf32>
    %263 = arith.addf %256, %262 : vector<40x8xf32>
    %cst_96 = arith.constant 0.797884583 : f32
    %264 = vector.broadcast %cst_96 : f32 to vector<40x8xf32>
    %265 = arith.mulf %264, %263 : vector<40x8xf32>
    %266 = math.tanh %265 : vector<40x8xf32>
    %cst_97 = arith.constant 1.000000e+00 : f32
    %267 = vector.broadcast %cst_97 : f32 to vector<40x8xf32>
    %268 = arith.addf %267, %266 : vector<40x8xf32>
    %269 = arith.mulf %258, %268 : vector<40x8xf32>
    %270 = arith.truncf %269 : vector<40x8xf32> to vector<40x8xbf16>
    %271 = vector.extract_strided_slice %231 {offsets = [0, 0], sizes = [8, 32], strides = [1, 1]} : vector<16x32xbf16> to vector<8x32xbf16>
    %cst_98 = arith.constant dense<0.000000e+00> : vector<40x32xf32>
    %272 = tpu.matmul %270, %271, %cst_98 {dimension_numbers = #tpu.dot_dimension_numbers<[1], [0], [0], [1], [0, 0, 1, 1], [], []>} : vector<40x8xbf16>, vector<8x32xbf16>, vector<40x32xf32> -> vector<40x32xf32>
    %273 = arith.addf %237, %272 : vector<40x32xf32>
    %274 = vector.extract_strided_slice %236 {offsets = [0, 8], sizes = [40, 8], strides = [1, 1]} : vector<40x48xbf16> to vector<40x8xbf16>
    %275 = vector.extract_strided_slice %236 {offsets = [0, 24], sizes = [40, 8], strides = [1, 1]} : vector<40x48xbf16> to vector<40x8xbf16>
    %276 = vector.extract_strided_slice %236 {offsets = [0, 40], sizes = [40, 8], strides = [1, 1]} : vector<40x48xbf16> to vector<40x8xbf16>
    %cst_99 = arith.constant dense<0.000000e+00> : vector<40x40xf32>
    %277 = tpu.matmul %274, %275, %cst_99 {dimension_numbers = #tpu.dot_dimension_numbers<[1], [1], [0], [0], [0, 0, 1, 0], [], []>} : vector<40x8xbf16>, vector<40x8xbf16>, vector<40x40xf32> -> vector<40x40xf32>
    %cst_100 = arith.constant 0.353553385 : f32
    %278 = vector.broadcast %cst_100 : f32 to vector<40x40xf32>
    %279 = arith.mulf %277, %278 : vector<40x40xf32>
    %280 = arith.addf %279, %85 : vector<40x40xf32>
    %cst_101 = arith.constant dense<0xFF800000> : vector<40xf32>
    %281 = vector.multi_reduction <maximumf>, %280, %cst_101 [1] : vector<40x40xf32> to vector<40xf32>
    %282 = vector.shape_cast %281 : vector<40xf32> to vector<40x1xf32>
    %283 = vector.broadcast %282 : vector<40x1xf32> to vector<40x40xf32>
    %284 = arith.subf %280, %283 : vector<40x40xf32>
    %285 = math.exp %284 : vector<40x40xf32>
    %cst_102 = arith.constant dense<0.000000e+00> : vector<40xf32>
    %286 = vector.multi_reduction <add>, %285, %cst_102 [1] : vector<40x40xf32> to vector<40xf32>
    %287 = vector.shape_cast %286 : vector<40xf32> to vector<40x1xf32>
    %288 = tpu.reciprocal %287 {approx = true} : vector<40x1xf32> -> vector<40x1xf32>
    %289 = vector.broadcast %288 : vector<40x1xf32> to vector<40x40xf32>
    %290 = arith.mulf %285, %289 : vector<40x40xf32>
    %291 = arith.truncf %290 : vector<40x40xf32> to vector<40x40xbf16>
    %cst_103 = arith.constant dense<0.000000e+00> : vector<40x8xf32>
    %292 = tpu.matmul %291, %276, %cst_103 {dimension_numbers = #tpu.dot_dimension_numbers<[1], [0], [0], [1], [0, 0, 1, 1], [], []>} : vector<40x40xbf16>, vector<40x8xbf16>, vector<40x8xf32> -> vector<40x8xf32>
    %cst_104 = arith.constant 5.000000e-01 : f32
    %293 = vector.broadcast %cst_104 : f32 to vector<40x8xf32>
    %294 = arith.mulf %293, %292 : vector<40x8xf32>
    %cst_105 = arith.constant 4.471500e-02 : f32
    %295 = vector.broadcast %cst_105 : f32 to vector<40x8xf32>
    %296 = arith.mulf %295, %292 : vector<40x8xf32>
    %297 = arith.mulf %296, %292 : vector<40x8xf32>
    %298 = arith.mulf %297, %292 : vector<40x8xf32>
    %299 = arith.addf %292, %298 : vector<40x8xf32>
    %cst_106 = arith.constant 0.797884583 : f32
    %300 = vector.broadcast %cst_106 : f32 to vector<40x8xf32>
    %301 = arith.mulf %300, %299 : vector<40x8xf32>
    %302 = math.tanh %301 : vector<40x8xf32>
    %cst_107 = arith.constant 1.000000e+00 : f32
    %303 = vector.broadcast %cst_107 : f32 to vector<40x8xf32>
    %304 = arith.addf %303, %302 : vector<40x8xf32>
    %305 = arith.mulf %294, %304 : vector<40x8xf32>
    %306 = arith.truncf %305 : vector<40x8xf32> to vector<40x8xbf16>
    %307 = vector.extract_strided_slice %231 {offsets = [8, 0], sizes = [8, 32], strides = [1, 1]} : vector<16x32xbf16> to vector<8x32xbf16>
    %cst_108 = arith.constant dense<0.000000e+00> : vector<40x32xf32>
    %308 = tpu.matmul %306, %307, %cst_108 {dimension_numbers = #tpu.dot_dimension_numbers<[1], [0], [0], [1], [0, 0, 1, 1], [], []>} : vector<40x8xbf16>, vector<8x32xbf16>, vector<40x32xf32> -> vector<40x32xf32>
    %309 = arith.addf %273, %308 : vector<40x32xf32>
    %310 = vector.broadcast %232 : vector<1x32xf32> to vector<40x32xf32>
    %311 = arith.addf %309, %310 : vector<40x32xf32>
    %312 = vector.broadcast %28 : vector<40x1xf32> to vector<40x32xf32>
    %313 = arith.mulf %311, %312 : vector<40x32xf32>
    %314 = arith.addf %227, %313 : vector<40x32xf32>
    %315 = arith.truncf %314 : vector<40x32xf32> to vector<40x32xbf16>
    %c0_109 = arith.constant 0 : index
    %c0_110 = arith.constant 0 : index
    %316 = vector.load %arg13[%c0_109, %c0_110] : memref<32x32xbf16, #tpu.memory_space<vmem>>, vector<32x32xbf16>
    %cst_111 = arith.constant dense<0.000000e+00> : vector<40x32xf32>
    %317 = tpu.matmul %315, %316, %cst_111 {dimension_numbers = #tpu.dot_dimension_numbers<[1], [0], [0], [1], [0, 0, 1, 1], [], []>} : vector<40x32xbf16>, vector<32x32xbf16>, vector<40x32xf32> -> vector<40x32xf32>
    %c0_112 = arith.constant 0 : index
    %c0_113 = arith.constant 0 : index
    %318 = vector.load %arg14[%c0_112, %c0_113] : memref<1x32xf32, #tpu.memory_space<vmem>>, vector<1x32xf32>
    %319 = vector.broadcast %318 : vector<1x32xf32> to vector<40x32xf32>
    %320 = arith.addf %317, %319 : vector<40x32xf32>
    %321 = arith.addf %320, %94 : vector<40x32xf32>
    %322 = vector.broadcast %28 : vector<40x1xf32> to vector<40x32xf32>
    %323 = arith.mulf %321, %322 : vector<40x32xf32>
    %324 = vector.extract_strided_slice %323 {offsets = [0, 0], sizes = [20, 32], strides = [1, 1]} : vector<40x32xf32> to vector<20x32xf32>
    %325 = tpu.transpose %324, [1, 0] : vector<20x32xf32> -> vector<32x20xf32>
    %c0_114 = arith.constant 0 : index
    %c0_115 = arith.constant 0 : index
    %c0_116 = arith.constant 0 : index
    %326 = vector.load %arg15[%c0_114, %c0_115, %c0_116] : memref<2x32x20xf32, #tpu.memory_space<vmem>>, vector<1x32x20xf32>
    %327 = vector.shape_cast %326 : vector<1x32x20xf32> to vector<32x20xf32>
    %328 = vector.shape_cast %325 : vector<32x20xf32> to vector<1x32x20xf32>
    tpu.vector_store %arg15[%c0_114, %c0_115, %c0_116], %328 {strides = array<i32>} : memref<2x32x20xf32, #tpu.memory_space<vmem>>, vector<1x32x20xf32>,
    %329 = vector.extract_strided_slice %323 {offsets = [20, 0], sizes = [20, 32], strides = [1, 1]} : vector<40x32xf32> to vector<20x32xf32>
    %330 = tpu.transpose %329, [1, 0] : vector<20x32xf32> -> vector<32x20xf32>
    %c1_117 = arith.constant 1 : index
    %c0_118 = arith.constant 0 : index
    %c0_119 = arith.constant 0 : index
    %331 = vector.load %arg15[%c1_117, %c0_118, %c0_119] : memref<2x32x20xf32, #tpu.memory_space<vmem>>, vector<1x32x20xf32>
    %332 = vector.shape_cast %331 : vector<1x32x20xf32> to vector<32x20xf32>
    %333 = vector.shape_cast %330 : vector<32x20xf32> to vector<1x32x20xf32>
    tpu.vector_store %arg15[%c1_117, %c0_118, %c0_119], %333 {strides = array<i32>} : memref<2x32x20xf32, #tpu.memory_space<vmem>>, vector<1x32x20xf32>,
    return
  }
  func.func @transform_0(%arg0: i32, %arg1: memref<4xi32, #tpu.memory_space<smem>>) -> (i32, i32, i32) {
    %c0_i32 = arith.constant 0 : i32
    %c0_i32_0 = arith.constant 0 : i32
    %c0_i32_1 = arith.constant 0 : i32
    return %arg0, %c0_i32, %c0_i32_0 : i32, i32, i32
  }
  func.func @transform_1(%arg0: i32, %arg1: memref<4xi32, #tpu.memory_space<smem>>) -> (i32, i32, i32) {
    %c0_i32 = arith.constant 0 : i32
    %c0_i32_0 = arith.constant 0 : i32
    %c0_i32_1 = arith.constant 0 : i32
    %c0_i32_2 = arith.constant 0 : i32
    return %c0_i32, %c0_i32_0, %c0_i32_1 : i32, i32, i32
  }
  func.func @transform_2(%arg0: i32, %arg1: memref<4xi32, #tpu.memory_space<smem>>) -> (i32, i32) {
    %c0_i32 = arith.constant 0 : i32
    %c0_i32_0 = arith.constant 0 : i32
    %c0_i32_1 = arith.constant 0 : i32
    return %c0_i32, %c0_i32_0 : i32, i32
  }
  func.func @transform_3(%arg0: i32, %arg1: memref<4xi32, #tpu.memory_space<smem>>) -> (i32, i32) {
    %c0_i32 = arith.constant 0 : i32
    %c0_i32_0 = arith.constant 0 : i32
    %c0_i32_1 = arith.constant 0 : i32
    return %c0_i32, %c0_i32_0 : i32, i32
  }
  func.func @transform_4(%arg0: i32, %arg1: memref<4xi32, #tpu.memory_space<smem>>) -> (i32, i32) {
    %c0_i32 = arith.constant 0 : i32
    %c0_i32_0 = arith.constant 0 : i32
    %c0_i32_1 = arith.constant 0 : i32
    return %c0_i32, %c0_i32_0 : i32, i32
  }
  func.func @transform_5(%arg0: i32, %arg1: memref<4xi32, #tpu.memory_space<smem>>) -> (i32, i32) {
    %c0_i32 = arith.constant 0 : i32
    %c0_i32_0 = arith.constant 0 : i32
    %c0_i32_1 = arith.constant 0 : i32
    return %c0_i32, %c0_i32_0 : i32, i32
  }
  func.func @transform_6(%arg0: i32, %arg1: memref<4xi32, #tpu.memory_space<smem>>) -> (i32, i32) {
    %c0_i32 = arith.constant 0 : i32
    %c0_i32_0 = arith.constant 0 : i32
    %c0_i32_1 = arith.constant 0 : i32
    return %c0_i32, %c0_i32_0 : i32, i32
  }
  func.func @transform_7(%arg0: i32, %arg1: memref<4xi32, #tpu.memory_space<smem>>) -> (i32, i32) {
    %c0_i32 = arith.constant 0 : i32
    %c0_i32_0 = arith.constant 0 : i32
    %c0_i32_1 = arith.constant 0 : i32
    return %c0_i32, %c0_i32_0 : i32, i32
  }
  func.func @transform_8(%arg0: i32, %arg1: memref<4xi32, #tpu.memory_space<smem>>) -> (i32, i32) {
    %c0_i32 = arith.constant 0 : i32
    %c0_i32_0 = arith.constant 0 : i32
    %c0_i32_1 = arith.constant 0 : i32
    return %c0_i32, %c0_i32_0 : i32, i32
  }
  func.func @transform_9(%arg0: i32, %arg1: memref<4xi32, #tpu.memory_space<smem>>) -> (i32, i32) {
    %c0_i32 = arith.constant 0 : i32
    %c0_i32_0 = arith.constant 0 : i32
    %c0_i32_1 = arith.constant 0 : i32
    return %c0_i32, %c0_i32_0 : i32, i32
  }
  func.func @transform_10(%arg0: i32, %arg1: memref<4xi32, #tpu.memory_space<smem>>) -> (i32, i32) {
    %c0_i32 = arith.constant 0 : i32
    %c0_i32_0 = arith.constant 0 : i32
    %c0_i32_1 = arith.constant 0 : i32
    return %c0_i32, %c0_i32_0 : i32, i32
  }
  func.func @transform_11(%arg0: i32, %arg1: memref<4xi32, #tpu.memory_space<smem>>) -> (i32, i32) {
    %c0_i32 = arith.constant 0 : i32
    %c0_i32_0 = arith.constant 0 : i32
    %c0_i32_1 = arith.constant 0 : i32
    return %c0_i32, %c0_i32_0 : i32, i32
  }
  func.func @transform_12(%arg0: i32, %arg1: memref<4xi32, #tpu.memory_space<smem>>) -> (i32, i32) {
    %c0_i32 = arith.constant 0 : i32
    %c0_i32_0 = arith.constant 0 : i32
    %c0_i32_1 = arith.constant 0 : i32
    return %c0_i32, %c0_i32_0 : i32, i32
  }
  func.func @transform_13(%arg0: i32, %arg1: memref<4xi32, #tpu.memory_space<smem>>) -> (i32, i32, i32) {
    %c0_i32 = arith.constant 0 : i32
    %c0_i32_0 = arith.constant 0 : i32
    %c0_i32_1 = arith.constant 0 : i32
    return %arg0, %c0_i32, %c0_i32_0 : i32, i32, i32
  }
}

</mosaic_0001>

<llo_original>
// kernel: ltc_block_forward.1
$region0: #{ltc_block_forward.1}
  #allocation0 [shape = 'u32[]', space=smem, size = 0x4, offset = 0x4, fixed_abs, tag = 'smem constant byte address 0x4 - core index']
  #allocation1 [shape = 'u32[144,128]{1,0:T(1,128)}', space=vmem, size = 0x12000, scoped, tag = 'internal scratch']
  #allocation2 [shape = 's32[1]{0}', space=sflag, size = 0x4, scoped, tag = 'scoped memory for ltc_block_forward.1']
  #allocation3 [shape = 'u8[512]{0}', space=smem, size = 0x200, scoped, tag = 'prefetched SMEM operand 0']
  %s0 = inlined_call_operand.vmem [shape: s32[4], index: 0, kind: input, shape index: {}]
  %s1 = inlined_call_operand.vmem [shape: f32[4,32,20], index: 1, kind: input, shape index: {}]
  %s2 = inlined_call_operand.vmem [shape: bf16[3,32,32], index: 2, kind: input, shape index: {}]
  %s3 = inlined_call_operand.vmem [shape: f32[1,32], index: 3, kind: input, shape index: {}]
  %s4 = inlined_call_operand.vmem [shape: bf16[32,48], index: 4, kind: input, shape index: {}]
  %s5 = inlined_call_operand.vmem [shape: f32[1,48], index: 5, kind: input, shape index: {}]
  %s6 = inlined_call_operand.vmem [shape: bf16[16,32], index: 6, kind: input, shape index: {}]
  %s7 = inlined_call_operand.vmem [shape: f32[1,32], index: 7, kind: input, shape index: {}]
  %s8 = inlined_call_operand.vmem [shape: bf16[32,48], index: 8, kind: input, shape index: {}]
  %s9 = inlined_call_operand.vmem [shape: f32[1,48], index: 9, kind: input, shape index: {}]
  %s10 = inlined_call_operand.vmem [shape: bf16[16,32], index: 10, kind: input, shape index: {}]
  %s11 = inlined_call_operand.vmem [shape: f32[1,32], index: 11, kind: input, shape index: {}]
  %s12 = inlined_call_operand.vmem [shape: bf16[32,32], index: 12, kind: input, shape index: {}]
  %s13 = inlined_call_operand.vmem [shape: f32[1,32], index: 13, kind: input, shape index: {}]
  %s14 = inlined_call_operand.vmem [shape: f32[4,32,20], index: 14, kind: output, shape index: {}]
  %s15 = sld [smem:[#allocation0]]
  $region85: #{ltc_block_forward.1} parent=0
    _
  %s17 = ssub.s32 1, %s15
  %s18 = scalar_select 0, %s17, %s15
  %s19 = sshll.u32 %s0, 4
  %s20 = int_to_ptr.vmem [resolvable:$true] %s19
  %22 = dma.vmem_to_smem %s20, 16, [#allocation3], [#allocation2]
  %23 = dma.done [#allocation2], 16
  %24 = sfence
  loop: start=0, step=1, limit=4
  $region2: #{ltc_block_forward.1} parent=0 // loop_pre_header
    _
  $region3: #{ltc_block_forward.1} parent=0 // loop_header
    %s26 = sphi 0, %s30
    %p27 = scmp.ge.s32.totalorder %s26, 4
    %s36 = sphi 0, %s38
    %s39 = sphi 0, %s36
    %s40 = sphi 0, %s39
    %s56 = sphi 0, %s40
    %s60 = sphi 0, %s60
    %s62 = sphi 0, %s60
    %s63 = sphi 0, %s62
    %s77 = sphi 0, %s63
    %s81 = sphi 0, %s81
    %s83 = sphi 0, %s81
    %s84 = sphi 0, %s83
    %s98 = sphi 0, %s84
    %s102 = sphi 0, %s102
    %s104 = sphi 0, %s102
    %s105 = sphi 0, %s104
    %s119 = sphi 0, %s105
    %s123 = sphi 0, %s123
    %s125 = sphi 0, %s123
    %s126 = sphi 0, %s125
    %s140 = sphi 0, %s126
    %s144 = sphi 0, %s144
    %s146 = sphi 0, %s144
    %s147 = sphi 0, %s146
    %s161 = sphi 0, %s147
    %s165 = sphi 0, %s165
    %s167 = sphi 0, %s165
    %s168 = sphi 0, %s167
    %s182 = sphi 0, %s168
    %s186 = sphi 0, %s186
    %s188 = sphi 0, %s186
    %s189 = sphi 0, %s188
    %s203 = sphi 0, %s189
    %s207 = sphi 0, %s207
    %s209 = sphi 0, %s207
    %s210 = sphi 0, %s209
    %s224 = sphi 0, %s210
    %s228 = sphi 0, %s228
    %s230 = sphi 0, %s228
    %s231 = sphi 0, %s230
    %s245 = sphi 0, %s231
    %s249 = sphi 0, %s249
    %s251 = sphi 0, %s249
    %s252 = sphi 0, %s251
    %s266 = sphi 0, %s252
    %s270 = sphi 0, %s270
    %s272 = sphi 0, %s270
    %s273 = sphi 0, %s272
    %s287 = sphi 0, %s273
    %s291 = sphi 0, %s291
    %s293 = sphi 0, %s291
    %s294 = sphi 0, %s293
    %s308 = sphi 0, %s294
    %s314 = sphi 0, %s316
    %s317 = sphi 0, %s314
    %s318 = sphi 0, %s317
    %s334 = sphi 0, %s318
  $region4: #{ltc_block_forward.1} parent=0 // loop_header_branch
    %29 = sbr.rel (%p27) target = $region8
  $region5: #{ltc_block_forward.1} parent=0 // loop_body
    %s31 = ssub.s32 %s26, 1
    %s32 = ssub.s32 %s26, 2
    %s33 = sadd.s32 %s26, 1
    %s34 = ssub.s32 %s26, %s33
    %p35 = scmp.eq.s32.totalorder %s34, 0
    %s37 = sadd.s32 %s36, 1
    %s38 = scalar_select %p35, %s36, %s37
    %p41 = pneg %p35
    %p42 = scmp.eq.s32.totalorder %s26, 1
    %p43 = por %p41, %p42
    %p44 = scmp.ne.s32.totalorder %s36, %s39
    %p45 = scmp.eq.s32.totalorder %s26, 0
    %p46 = por %p44, %p45
    %p47 = scmp.ne.s32.totalorder %s36, %s39
    %p48 = scmp.eq.s32.totalorder %s31, 1
    %p49 = por %p47, %p48
    %p50 = scmp.ne.s32.totalorder %s39, %s40
    %p51 = scmp.eq.s32.totalorder %s31, 0
    %p52 = por %p50, %p51
    %p53 = scmp.ne.s32.totalorder %s39, %s40
    %p54 = scmp.eq.s32.totalorder %s32, 1
    %p55 = por %p53, %p54
    %p57 = scmp.ne.s32.totalorder %s40, %s56
    %p58 = scmp.eq.s32.totalorder %s32, 0
    %p59 = por %p57, %p58
    %s61 = sadd.s32 %s60, 1
    %p64 = scmp.eq.s32.totalorder %s26, 1
    %p65 = scmp.ne.s32.totalorder %s60, %s62
    %p66 = scmp.eq.s32.totalorder %s26, 0
    %p67 = por %p65, %p66
    %p68 = scmp.ne.s32.totalorder %s60, %s62
    %p69 = scmp.eq.s32.totalorder %s31, 1
    %p70 = por %p68, %p69
    %p71 = scmp.ne.s32.totalorder %s62, %s63
    %p72 = scmp.eq.s32.totalorder %s31, 0
    %p73 = por %p71, %p72
    %p74 = scmp.ne.s32.totalorder %s62, %s63
    %p75 = scmp.eq.s32.totalorder %s32, 1
    %p76 = por %p74, %p75
    %p78 = scmp.ne.s32.totalorder %s63, %s77
    %p79 = scmp.eq.s32.totalorder %s32, 0
    %p80 = por %p78, %p79
    %s82 = sadd.s32 %s81, 1
    %p85 = scmp.eq.s32.totalorder %s26, 1
    %p86 = scmp.ne.s32.totalorder %s81, %s83
    %p87 = scmp.eq.s32.totalorder %s26, 0
    %p88 = por %p86, %p87
    %p89 = scmp.ne.s32.totalorder %s81, %s83
    %p90 = scmp.eq.s32.totalorder %s31, 1
    %p91 = por %p89, %p90
    %p92 = scmp.ne.s32.totalorder %s83, %s84
    %p93 = scmp.eq.s32.totalorder %s31, 0
    %p94 = por %p92, %p93
    %p95 = scmp.ne.s32.totalorder %s83, %s84
    %p96 = scmp.eq.s32.totalorder %s32, 1
    %p97 = por %p95, %p96
    %p99 = scmp.ne.s32.totalorder %s84, %s98
    %p100 = scmp.eq.s32.totalorder %s32, 0
    %p101 = por %p99, %p100
    %s103 = sadd.s32 %s102, 1
    %p106 = scmp.eq.s32.totalorder %s26, 1
    %p107 = scmp.ne.s32.totalorder %s102, %s104
    %p108 = scmp.eq.s32.totalorder %s26, 0
    %p109 = por %p107, %p108
    %p110 = scmp.ne.s32.totalorder %s102, %s104
    %p111 = scmp.eq.s32.totalorder %s31, 1
    %p112 = por %p110, %p111
    %p113 = scmp.ne.s32.totalorder %s104, %s105
    %p114 = scmp.eq.s32.totalorder %s31, 0
    %p115 = por %p113, %p114
    %p116 = scmp.ne.s32.totalorder %s104, %s105
    %p117 = scmp.eq.s32.totalorder %s32, 1
    %p118 = por %p116, %p117
    %p120 = scmp.ne.s32.totalorder %s105, %s119
    %p121 = scmp.eq.s32.totalorder %s32, 0
    %p122 = por %p120, %p121
    %s124 = sadd.s32 %s123, 1
    %p127 = scmp.eq.s32.totalorder %s26, 1
    %p128 = scmp.ne.s32.totalorder %s123, %s125
    %p129 = scmp.eq.s32.totalorder %s26, 0
    %p130 = por %p128, %p129
    %p131 = scmp.ne.s32.totalorder %s123, %s125
    %p132 = scmp.eq.s32.totalorder %s31, 1
    %p133 = por %p131, %p132
    %p134 = scmp.ne.s32.totalorder %s125, %s126
    %p135 = scmp.eq.s32.totalorder %s31, 0
    %p136 = por %p134, %p135
    %p137 = scmp.ne.s32.totalorder %s125, %s126
    %p138 = scmp.eq.s32.totalorder %s32, 1
    %p139 = por %p137, %p138
    %p141 = scmp.ne.s32.totalorder %s126, %s140
    %p142 = scmp.eq.s32.totalorder %s32, 0
    %p143 = por %p141, %p142
    %s145 = sadd.s32 %s144, 1
    %p148 = scmp.eq.s32.totalorder %s26, 1
    %p149 = scmp.ne.s32.totalorder %s144, %s146
    %p150 = scmp.eq.s32.totalorder %s26, 0
    %p151 = por %p149, %p150
    %p152 = scmp.ne.s32.totalorder %s144, %s146
    %p153 = scmp.eq.s32.totalorder %s31, 1
    %p154 = por %p152, %p153
    %p155 = scmp.ne.s32.totalorder %s146, %s147
    %p156 = scmp.eq.s32.totalorder %s31, 0
    %p157 = por %p155, %p156
    %p158 = scmp.ne.s32.totalorder %s146, %s147
    %p159 = scmp.eq.s32.totalorder %s32, 1
    %p160 = por %p158, %p159
    %p162 = scmp.ne.s32.totalorder %s147, %s161
    %p163 = scmp.eq.s32.totalorder %s32, 0
    %p164 = por %p162, %p163
    %s166 = sadd.s32 %s165, 1
    %p169 = scmp.eq.s32.totalorder %s26, 1
    %p170 = scmp.ne.s32.totalorder %s165, %s167
    %p171 = scmp.eq.s32.totalorder %s26, 0
    %p172 = por %p170, %p171
    %p173 = scmp.ne.s32.totalorder %s165, %s167
    %p174 = scmp.eq.s32.totalorder %s31, 1
    %p175 = por %p173, %p174
    %p176 = scmp.ne.s32.totalorder %s167, %s168
    %p177 = scmp.eq.s32.totalorder %s31, 0
    %p178 = por %p176, %p177
    %p179 = scmp.ne.s32.totalorder %s167, %s168
    %p180 = scmp.eq.s32.totalorder %s32, 1
    %p181 = por %p179, %p180
    %p183 = scmp.ne.s32.totalorder %s168, %s182
    %p184 = scmp.eq.s32.totalorder %s32, 0
    %p185 = por %p183, %p184
    %s187 = sadd.s32 %s186, 1
    %p190 = scmp.eq.s32.totalorder %s26, 1
    %p191 = scmp.ne.s32.totalorder %s186, %s188
    %p192 = scmp.eq.s32.totalorder %s26, 0
    %p193 = por %p191, %p192
    %p194 = scmp.ne.s32.totalorder %s186, %s188
    %p195 = scmp.eq.s32.totalorder %s31, 1
    %p196 = por %p194, %p195
    %p197 = scmp.ne.s32.totalorder %s188, %s189
    %p198 = scmp.eq.s32.totalorder %s31, 0
    %p199 = por %p197, %p198
    %p200 = scmp.ne.s32.totalorder %s188, %s189
    %p201 = scmp.eq.s32.totalorder %s32, 1
    %p202 = por %p200, %p201
    %p204 = scmp.ne.s32.totalorder %s189, %s203
    %p205 = scmp.eq.s32.totalorder %s32, 0
    %p206 = por %p204, %p205
    %s208 = sadd.s32 %s207, 1
    %p211 = scmp.eq.s32.totalorder %s26, 1
    %p212 = scmp.ne.s32.totalorder %s207, %s209
    %p213 = scmp.eq.s32.totalorder %s26, 0
    %p214 = por %p212, %p213
    %p215 = scmp.ne.s32.totalorder %s207, %s209
    %p216 = scmp.eq.s32.totalorder %s31, 1
    %p217 = por %p215, %p216
    %p218 = scmp.ne.s32.totalorder %s209, %s210
    %p219 = scmp.eq.s32.totalorder %s31, 0
    %p220 = por %p218, %p219
    %p221 = scmp.ne.s32.totalorder %s209, %s210
    %p222 = scmp.eq.s32.totalorder %s32, 1
    %p223 = por %p221, %p222
    %p225 = scmp.ne.s32.totalorder %s210, %s224
    %p226 = scmp.eq.s32.totalorder %s32, 0
    %p227 = por %p225, %p226
    %s229 = sadd.s32 %s228, 1
    %p232 = scmp.eq.s32.totalorder %s26, 1
    %p233 = scmp.ne.s32.totalorder %s228, %s230
    %p234 = scmp.eq.s32.totalorder %s26, 0
    %p235 = por %p233, %p234
    %p236 = scmp.ne.s32.totalorder %s228, %s230
    %p237 = scmp.eq.s32.totalorder %s31, 1
    %p238 = por %p236, %p237
    %p239 = scmp.ne.s32.totalorder %s230, %s231
    %p240 = scmp.eq.s32.totalorder %s31, 0
    %p241 = por %p239, %p240
    %p242 = scmp.ne.s32.totalorder %s230, %s231
    %p243 = scmp.eq.s32.totalorder %s32, 1
    %p244 = por %p242, %p243
    %p246 = scmp.ne.s32.totalorder %s231, %s245
    %p247 = scmp.eq.s32.totalorder %s32, 0
    %p248 = por %p246, %p247
    %s250 = sadd.s32 %s249, 1
    %p253 = scmp.eq.s32.totalorder %s26, 1
    %p254 = scmp.ne.s32.totalorder %s249, %s251
    %p255 = scmp.eq.s32.totalorder %s26, 0
    %p256 = por %p254, %p255
    %p257 = scmp.ne.s32.totalorder %s249, %s251
    %p258 = scmp.eq.s32.totalorder %s31, 1
    %p259 = por %p257, %p258
    %p260 = scmp.ne.s32.totalorder %s251, %s252
    %p261 = scmp.eq.s32.totalorder %s31, 0
    %p262 = por %p260, %p261
    %p263 = scmp.ne.s32.totalorder %s251, %s252
    %p264 = scmp.eq.s32.totalorder %s32, 1
    %p265 = por %p263, %p264
    %p267 = scmp.ne.s32.totalorder %s252, %s266
    %p268 = scmp.eq.s32.totalorder %s32, 0
    %p269 = por %p267, %p268
    %s271 = sadd.s32 %s270, 1
    %p274 = scmp.eq.s32.totalorder %s26, 1
    %p275 = scmp.ne.s32.totalorder %s270, %s272
    %p276 = scmp.eq.s32.totalorder %s26, 0
    %p277 = por %p275, %p276
    %p278 = scmp.ne.s32.totalorder %s270, %s272
    %p279 = scmp.eq.s32.totalorder %s31, 1
    %p280 = por %p278, %p279
    %p281 = scmp.ne.s32.totalorder %s272, %s273
    %p282 = scmp.eq.s32.totalorder %s31, 0
    %p283 = por %p281, %p282
    %p284 = scmp.ne.s32.totalorder %s272, %s273
    %p285 = scmp.eq.s32.totalorder %s32, 1
    %p286 = por %p284, %p285
    %p288 = scmp.ne.s32.totalorder %s273, %s287
    %p289 = scmp.eq.s32.totalorder %s32, 0
    %p290 = por %p288, %p289
    %s292 = sadd.s32 %s291, 1
    %p295 = scmp.eq.s32.totalorder %s26, 1
    %p296 = scmp.ne.s32.totalorder %s291, %s293
    %p297 = scmp.eq.s32.totalorder %s26, 0
    %p298 = por %p296, %p297
    %p299 = scmp.ne.s32.totalorder %s291, %s293
    %p300 = scmp.eq.s32.totalorder %s31, 1
    %p301 = por %p299, %p300
    %p302 = scmp.ne.s32.totalorder %s293, %s294
    %p303 = scmp.eq.s32.totalorder %s31, 0
    %p304 = por %p302, %p303
    %p305 = scmp.ne.s32.totalorder %s293, %s294
    %p306 = scmp.eq.s32.totalorder %s32, 1
    %p307 = por %p305, %p306
    %p309 = scmp.ne.s32.totalorder %s294, %s308
    %p310 = scmp.eq.s32.totalorder %s32, 0
    %p311 = por %p309, %p310
    %s312 = ssub.s32 %s26, %s33
    %p313 = scmp.eq.s32.totalorder %s312, 0
    %s315 = sadd.s32 %s314, 1
    %s316 = scalar_select %p313, %s314, %s315
    %p319 = pneg %p313
    %p320 = scmp.eq.s32.totalorder %s26, 1
    %p321 = por %p319, %p320
    %p322 = scmp.ne.s32.totalorder %s314, %s317
    %p323 = scmp.eq.s32.totalorder %s26, 0
    %p324 = por %p322, %p323
    %p325 = scmp.ne.s32.totalorder %s314, %s317
    %p326 = scmp.eq.s32.totalorder %s31, 1
    %p327 = por %p325, %p326
    %p328 = scmp.ne.s32.totalorder %s317, %s318
    %p329 = scmp.eq.s32.totalorder %s31, 0
    %p330 = por %p328, %p329
    %p331 = scmp.ne.s32.totalorder %s317, %s318
    %p332 = scmp.eq.s32.totalorder %s32, 1
    %p333 = por %p331, %p332
    %p335 = scmp.ne.s32.totalorder %s318, %s334
    %p336 = scmp.eq.s32.totalorder %s32, 0
    %p337 = por %p335, %p336
    %p338 = scmp.le.s32.totalorder 1, %s26
    %p339 = scmp.lt.s32.totalorder %s26, 3
    %p340 = pnand %p338, %p339
    %p341 = pneg %p340
    // Predicated region
    $region9: #{ltc_block_forward.1} parent=5 // pred_check
      _
    $region10: #{ltc_block_forward.1} parent=5 // pred_check_branch
      %343 = sbr.rel (%p340) target = $region12
    $region11: #{ltc_block_forward.1} parent=5 // pred_region
      %s344 = ssub.s32 %s26, 1
      // Predicated region
      $region13: #{ltc_block_forward.1} parent=11 // pred_check
        %p345 = pneg %p73
      $region14: #{ltc_block_forward.1} parent=11 // pred_check_branch
        %347 = sbr.rel (%p345) target = $region16
      $region15: #{ltc_block_forward.1} parent=11 // pred_region
        _
      $region16: #{ltc_block_forward.1} parent=11 // pred_fallthru
        _
      // Predicated region
      $region17: #{ltc_block_forward.1} parent=11 // pred_check
        %p348 = pneg %p94
      $region18: #{ltc_block_forward.1} parent=11 // pred_check_branch
        %350 = sbr.rel (%p348) target = $region20
      $region19: #{ltc_block_forward.1} parent=11 // pred_region
        _
      $region20: #{ltc_block_forward.1} parent=11 // pred_fallthru
        _
      // Predicated region
      $region21: #{ltc_block_forward.1} parent=11 // pred_check
        %p351 = pneg %p115
      $region22: #{ltc_block_forward.1} parent=11 // pred_check_branch
        %353 = sbr.rel (%p351) target = $region24
      $region23: #{ltc_block_forward.1} parent=11 // pred_region
        _
      $region24: #{ltc_block_forward.1} parent=11 // pred_fallthru
        _
      // Predicated region
      $region25: #{ltc_block_forward.1} parent=11 // pred_check
        %p354 = pneg %p136
      $region26: #{ltc_block_forward.1} parent=11 // pred_check_branch
        %356 = sbr.rel (%p354) target = $region28
      $region27: #{ltc_block_forward.1} parent=11 // pred_region
        _
      $region28: #{ltc_block_forward.1} parent=11 // pred_fallthru
        _
      // Predicated region
      $region29: #{ltc_block_forward.1} parent=11 // pred_check
        %p357 = pneg %p157
      $region30: #{ltc_block_forward.1} parent=11 // pred_check_branch
        %359 = sbr.rel (%p357) target = $region32
      $region31: #{ltc_block_forward.1} parent=11 // pred_region
        _
      $region32: #{ltc_block_forward.1} parent=11 // pred_fallthru
        _
      // Predicated region
      $region33: #{ltc_block_forward.1} parent=11 // pred_check
        %p360 = pneg %p178
      $region34: #{ltc_block_forward.1} parent=11 // pred_check_branch
        %362 = sbr.rel (%p360) target = $region36
      $region35: #{ltc_block_forward.1} parent=11 // pred_region
        _
      $region36: #{ltc_block_forward.1} parent=11 // pred_fallthru
        _
      // Predicated region
      $region37: #{ltc_block_forward.1} parent=11 // pred_check
        %p363 = pneg %p199
      $region38: #{ltc_block_forward.1} parent=11 // pred_check_branch
        %365 = sbr.rel (%p363) target = $region40
      $region39: #{ltc_block_forward.1} parent=11 // pred_region
        _
      $region40: #{ltc_block_forward.1} parent=11 // pred_fallthru
        _
      // Predicated region
      $region41: #{ltc_block_forward.1} parent=11 // pred_check
        %p366 = pneg %p220
      $region42: #{ltc_block_forward.1} parent=11 // pred_check_branch
        %368 = sbr.rel (%p366) target = $region44
      $region43: #{ltc_block_forward.1} parent=11 // pred_region
        _
      $region44: #{ltc_block_forward.1} parent=11 // pred_fallthru
        _
      // Predicated region
      $region45: #{ltc_block_forward.1} parent=11 // pred_check
        %p369 = pneg %p241
      $region46: #{ltc_block_forward.1} parent=11 // pred_check_branch
        %371 = sbr.rel (%p369) target = $region48
      $region47: #{ltc_block_forward.1} parent=11 // pred_region
        _
      $region48: #{ltc_block_forward.1} parent=11 // pred_fallthru
        _
      // Predicated region
      $region49: #{ltc_block_forward.1} parent=11 // pred_check
        %p372 = pneg %p262
      $region50: #{ltc_block_forward.1} parent=11 // pred_check_branch
        %374 = sbr.rel (%p372) target = $region52
      $region51: #{ltc_block_forward.1} parent=11 // pred_region
        _
      $region52: #{ltc_block_forward.1} parent=11 // pred_fallthru
        _
      // Predicated region
      $region53: #{ltc_block_forward.1} parent=11 // pred_check
        %p375 = pneg %p283
      $region54: #{ltc_block_forward.1} parent=11 // pred_check_branch
        %377 = sbr.rel (%p375) target = $region56
      $region55: #{ltc_block_forward.1} parent=11 // pred_region
        _
      $region56: #{ltc_block_forward.1} parent=11 // pred_fallthru
        _
      // Predicated region
      $region57: #{ltc_block_forward.1} parent=11 // pred_check
        %p378 = pneg %p304
      $region58: #{ltc_block_forward.1} parent=11 // pred_check_branch
        %380 = sbr.rel (%p378) target = $region60
      $region59: #{ltc_block_forward.1} parent=11 // pred_region
        _
      $region60: #{ltc_block_forward.1} parent=11 // pred_fallthru
        _
    $region12: #{ltc_block_forward.1} parent=5 // pred_fallthru
      _
    %p381 = scmp.lt.s32.totalorder %s26, 2
    // Predicated region
    $region61: #{ltc_block_forward.1} parent=5 // pred_check
      %p382 = pneg %p381
    $region62: #{ltc_block_forward.1} parent=5 // pred_check_branch
      %384 = sbr.rel (%p382) target = $region64
    $region63: #{ltc_block_forward.1} parent=5 // pred_region
      // Predicated region
      $region65: #{ltc_block_forward.1} parent=63 // pred_check
        %p385 = pneg %p46
      $region66: #{ltc_block_forward.1} parent=63 // pred_check_branch
        %387 = sbr.rel (%p385) target = $region68
      $region67: #{ltc_block_forward.1} parent=63 // pred_region
        %s388 = smul.u32 2, %s26
        %p389 = scmp.lt.s32.totalorder %s388, 3
        %s390 = scalar_select %p389, %s388, 3
        %s391 = smul.addr %s390, 4
        %s392 = smul.addr %s391, 8
        %s393 = scalar_lea.vmem %s1, %s392
        %s394 = smul.u32 2, %s26
      $region68: #{ltc_block_forward.1} parent=63 // pred_fallthru
        _
    $region64: #{ltc_block_forward.1} parent=5 // pred_fallthru
      _
    %p395 = scmp.le.s32.totalorder 1, %s26
    %p396 = scmp.lt.s32.totalorder %s26, 3
    %p397 = pnand %p395, %p396
    %p398 = pneg %p397
    // Predicated region
    $region69: #{ltc_block_forward.1} parent=5 // pred_check
      _
    $region70: #{ltc_block_forward.1} parent=5 // pred_check_branch
      %400 = sbr.rel (%p397) target = $region72
    $region71: #{ltc_block_forward.1} parent=5 // pred_region
      %s401 = ssub.s32 %s26, 1
      %s402 = smul.u32 2, %s31
      %p403 = scmp.lt.s32.totalorder %s402, 3
      %s404 = scalar_select %p403, %s402, 3
      %s405 = smul.addr %s404, 4
      %s406 = smul.addr %s405, 8
      %s407 = scalar_lea.vmem %s1, %s406
      %p408 = pneg %p52
      %p409 = pneg %p49
      %p410 = pneg %p73
      %p411 = pneg %p70
      %p412 = pneg %p94
      %p413 = pneg %p91
      %p414 = pneg %p115
      %p415 = pneg %p112
      %p416 = pneg %p136
      %p417 = pneg %p133
      %p418 = pneg %p157
      %p419 = pneg %p154
      %p420 = pneg %p178
      %p421 = pneg %p175
      %p422 = pneg %p199
      %p423 = pneg %p196
      %p424 = pneg %p220
      %p425 = pneg %p217
      %p426 = pneg %p241
      %p427 = pneg %p238
      %p428 = pneg %p262
      %p429 = pneg %p259
      %p430 = pneg %p283
      %p431 = pneg %p280
      %p432 = pneg %p304
      %p433 = pneg %p301
      %p434 = pneg %p330
      %p435 = pneg %p327
      %s436 = smul.u32 2, %s31
      %p437 = scmp.lt.s32.totalorder %s436, 3
      %s438 = scalar_select %p437, %s436, 3
      %s439 = smul.addr %s438, 4
      %s440 = smul.addr %s439, 8
      %s441 = scalar_lea.vmem %s14, %s440
      %s442 = smul.u32 2, %s31
      %p443 = scmp.lt.s32.totalorder %s442, 3
      %s444 = scalar_select %p443, %s442, 3
      %s445 = smul.addr %s444, 4
      %s446 = smul.addr %s445, 8
      %s447 = scalar_lea.vmem %s1, %s446
      %s448 = smul.u32 2, %s31
      %s449 = smul.u32 2, %s31
      %p450 = scmp.lt.s32.totalorder %s449, 3
      %s451 = scalar_select %p450, %s449, 3
      %s452 = smul.addr %s451, 4
      %s453 = smul.addr %s452, 8
      %s454 = scalar_lea.vmem %s14, %s453
      %s455 = smul.u32 2, %s31
      %s457 = smul.u32 %s31, 2
      %s458 = sld [smem:[#allocation3 + %s457]]
      %s459 = sadd.s32 %s457, 1
      %s460 = sld [smem:[#allocation3 + %s459]]
      %v461 = vlaneseq
      %v462 = vshrl.u32 %v461, 7
      %v463 = vadd.s32 %v462, 8
      %v464 = vadd.s32 %v462, 16
      %v465 = vadd.s32 %v462, 24
      %v466 = vadd.s32 %v462, 32
      %vm467 = vcmp.ge.s32.totalorder %v462, 0
      %vm468 = vcmp.ge.s32.totalorder %v463, 0
      %vm469 = vcmp.ge.s32.totalorder %v464, 0
      %vm470 = vcmp.ge.s32.totalorder %v465, 0
      %vm471 = vcmp.ge.s32.totalorder %v466, 0
      %v472 = vstv %s458
      %v473 = vsel %vm467, %v472, 0
      %v474 = vsel %vm468, %v472, 0
      %v475 = vsel %vm469, %v472, 0
      %v476 = vsel %vm470, %v472, 0
      %v477 = vsel %vm471, %v472, 0
      %vm478 = vcmp.ge.s32.totalorder %v462, 20
      %vm479 = vcmp.ge.s32.totalorder %v463, 20
      %vm480 = vcmp.ge.s32.totalorder %v464, 20
      %vm481 = vcmp.ge.s32.totalorder %v465, 20
      %vm482 = vcmp.ge.s32.totalorder %v466, 20
      %v483 = vsel %vm478, 1, 0
      %v484 = vsel %vm479, 1, 0
      %v485 = vsel %vm480, 1, 0
      %v486 = vsel %vm481, 1, 0
      %v487 = vsel %vm482, 1, 0
      %v488 = vstv %s460
      %v489 = vsel %vm478, %v488, %v473
      %v490 = vsel %vm479, %v488, %v474
      %v491 = vsel %vm480, %v488, %v475
      %v492 = vsel %vm481, %v488, %v476
      %v493 = vsel %vm482, %v488, %v477
      %v494 = vmul.u32 %v483, 20
      %v495 = vmul.u32 %v484, 20
      %v496 = vmul.u32 %v485, 20
      %v497 = vmul.u32 %v486, 20
      %v498 = vmul.u32 %v487, 20
      %v499 = vsub.s32 %v462, %v494
      %v500 = vsub.s32 %v463, %v495
      %v501 = vsub.s32 %v464, %v496
      %v502 = vsub.s32 %v465, %v497
      %v503 = vsub.s32 %v466, %v498
      %vm504 = vcmp.lt.s32.totalorder %v499, %v489
      %vm505 = vcmp.lt.s32.totalorder %v500, %v490
      %vm506 = vcmp.lt.s32.totalorder %v501, %v491
      %vm507 = vcmp.lt.s32.totalorder %v502, %v492
      %vm508 = vcmp.lt.s32.totalorder %v503, %v493
      %v509 = vsel %vm504, 1, 0
      %v510 = vsel %vm505, 1, 0
      %v511 = vsel %vm506, 1, 0
      %v512 = vsel %vm507, 1, 0
      %v513 = vsel %vm508, 1, 0
      %v514 = vcvt.s32.f32 %v509
      %v515 = vcvt.s32.f32 %v510
      %v516 = vcvt.s32.f32 %v511
      %v517 = vcvt.s32.f32 %v512
      %v518 = vcvt.s32.f32 %v513
      %v519 = vlaneseq
      %v520 = vand.u32 %v519, 127
      %vm521 = vcmp.ge.s32.totalorder %v520, 0
      %v522 = vsel %vm521, %v472, 0
      %vm523 = vcmp.ge.s32.totalorder %v520, 20
      %v524 = vsel %vm523, 1, 0
      %v525 = vsel %vm523, %v488, %v522
      %v526 = vmul.u32 %v524, 20
      %v527 = vsub.s32 %v520, %v526
      %vm528 = vcmp.eq.s32.totalorder %v483, %v524
      %vm529 = vcmp.eq.s32.totalorder %v484, %v524
      %vm530 = vcmp.eq.s32.totalorder %v485, %v524
      %vm531 = vcmp.eq.s32.totalorder %v486, %v524
      %vm532 = vcmp.eq.s32.totalorder %v487, %v524
      %vm533 = vcmp.lt.s32.totalorder %v527, %v525
      %vm534 = vmand %vm528, %vm533
      %vm535 = vmand %vm529, %vm533
      %vm536 = vmand %vm530, %vm533
      %vm537 = vmand %vm531, %vm533
      %vm538 = vmand %vm532, %vm533
      %v539 = vand.u32 %v499, 7
      %v540 = vand.u32 %v500, 7
      %v541 = vand.u32 %v501, 7
      %v542 = vand.u32 %v502, 7
      %v543 = vand.u32 %v503, 7
      %v544 = vsub.s32 %v499, %v539
      %v545 = vsub.s32 %v500, %v540
      %v546 = vsub.s32 %v501, %v541
      %v547 = vsub.s32 %v502, %v542
      %v548 = vsub.s32 %v503, %v543
      %v549 = vsub.s32 %v544, 4
      %v550 = vsub.s32 %v545, 4
      %v551 = vsub.s32 %v546, 4
      %v552 = vsub.s32 %v547, 4
      %v553 = vsub.s32 %v548, 4
      %vm554 = vcmp.ge.s32.totalorder %v527, %v549
      %vm555 = vcmp.ge.s32.totalorder %v527, %v550
      %vm556 = vcmp.ge.s32.totalorder %v527, %v551
      %vm557 = vcmp.ge.s32.totalorder %v527, %v552
      %vm558 = vcmp.ge.s32.totalorder %v527, %v553
      %vm559 = vmand %vm534, %vm554
      %vm560 = vmand %vm535, %vm555
      %vm561 = vmand %vm536, %vm556
      %vm562 = vmand %vm537, %vm557
      %vm563 = vmand %vm538, %vm558
      %v564 = vadd.s32 %v549, 16
      %v565 = vadd.s32 %v550, 16
      %v566 = vadd.s32 %v551, 16
      %v567 = vadd.s32 %v552, 16
      %v568 = vadd.s32 %v553, 16
      %vm569 = vcmp.lt.s32.totalorder %v527, %v564
      %vm570 = vcmp.lt.s32.totalorder %v527, %v565
      %vm571 = vcmp.lt.s32.totalorder %v527, %v566
      %vm572 = vcmp.lt.s32.totalorder %v527, %v567
      %vm573 = vcmp.lt.s32.totalorder %v527, %v568
      %vm574 = vmand %vm559, %vm569
      %vm575 = vmand %vm560, %vm570
      %vm576 = vmand %vm561, %vm571
      %vm577 = vmand %vm562, %vm572
      %vm578 = vmand %vm563, %vm573
      %v579 = vand.u32 %v499, 3
      %v580 = vand.u32 %v500, 3
      %v581 = vand.u32 %v501, 3
      %v582 = vand.u32 %v502, 3
      %v583 = vand.u32 %v503, 3
      %v584 = vand.u32 %v527, 3
      %vm585 = vcmp.eq.s32.totalorder %v579, %v584
      %vm586 = vcmp.eq.s32.totalorder %v580, %v584
      %vm587 = vcmp.eq.s32.totalorder %v581, %v584
      %vm588 = vcmp.eq.s32.totalorder %v582, %v584
      %vm589 = vcmp.eq.s32.totalorder %v583, %v584
      %vm590 = vmand %vm534, %vm585
      %vm591 = vmand %vm535, %vm586
      %vm592 = vmand %vm536, %vm587
      %vm593 = vmand %vm537, %vm588
      %vm594 = vmand %vm538, %vm589
      %v595 = vsel %vm574, 0.0, -1e+30
      %v596 = vsel %vm575, 0.0, -1e+30
      %v597 = vsel %vm576, 0.0, -1e+30
      %v598 = vsel %vm577, 0.0, -1e+30
      %v599 = vsel %vm578, 0.0, -1e+30
      %v600 = vsel %vm590, 0.0, -1e+30
      %v601 = vsel %vm591, 0.0, -1e+30
      %v602 = vsel %vm592, 0.0, -1e+30
      %v603 = vsel %vm593, 0.0, -1e+30
      %v604 = vsel %vm594, 0.0, -1e+30
      %v605 = vld [vmem:[%s447] sm:$0xff]
      %v606 = vld [vmem:[%s447 + $0x8] sm:$0xff]
      %v607 = vld [vmem:[%s447 + $0x10] sm:$0xff]
      %v608 = vld [vmem:[%s447 + $0x18] sm:$0xff]
      %609 = vxpose.xlu0.b32.start [1/16] %v605, 128
      %610 = vxpose.xlu0.b32.cont [2/16] %v606, 128
      %611 = vxpose.xlu0.b32.cont [3/16] %v607, 128
      %612 = vxpose.xlu0.b32.cont [4/16] %v608, 128
      %613 = vxpose.xlu0.b32.cont [5/16] 0.0, 128
      %614 = vxpose.xlu0.b32.cont [6/16] 0.0, 128
      %615 = vxpose.xlu0.b32.cont [7/16] 0.0, 128
      %616 = vxpose.xlu0.b32.cont [8/16] 0.0, 128
      %617 = vxpose.xlu0.b32.cont [9/16] 0.0, 128
      %618 = vxpose.xlu0.b32.cont [10/16] 0.0, 128
      %619 = vxpose.xlu0.b32.cont [11/16] 0.0, 128
      %620 = vxpose.xlu0.b32.cont [12/16] 0.0, 128
      %621 = vxpose.xlu0.b32.cont [13/16] 0.0, 128
      %622 = vxpose.xlu0.b32.cont [14/16] 0.0, 128
      %623 = vxpose.xlu0.b32.cont [15/16] 0.0, 128
      %624 = vxpose.xlu0.b32.end [16/16] 0.0, 128
      %v625 = vpop.trf.xlu0
      %v626 = vpop.trf.xlu0
      %v627 = vpop.trf.xlu0
      %v628 = vpop.trf.xlu0
      %v629 = vpop.trf.xlu0
      %v630 = vpop.trf.xlu0
      %v631 = vpop.trf.xlu0
      %v632 = vpop.trf.xlu0
      %v633 = vpop.trf.xlu0
      %v634 = vpop.trf.xlu0
      %v635 = vpop.trf.xlu0
      %v636 = vpop.trf.xlu0
      %v637 = vpop.trf.xlu0
      %v638 = vpop.trf.xlu0
      %v639 = vpop.trf.xlu0
      %v640 = vpop.trf.xlu0
      %s641 = scalar_lea.vmem %s447, 32
      %v642 = vld [vmem:[%s641] sm:$0xff]
      %v643 = vld [vmem:[%s641 + $0x8] sm:$0xff]
      %v644 = vld [vmem:[%s641 + $0x10] sm:$0xff]
      %v645 = vld [vmem:[%s641 + $0x18] sm:$0xff]
      %646 = vxpose.xlu0.b32.start [1/16] %v642, 128
      %647 = vxpose.xlu0.b32.cont [2/16] %v643, 128
      %648 = vxpose.xlu0.b32.cont [3/16] %v644, 128
      %649 = vxpose.xlu0.b32.cont [4/16] %v645, 128
      %650 = vxpose.xlu0.b32.cont [5/16] 0.0, 128
      %651 = vxpose.xlu0.b32.cont [6/16] 0.0, 128
      %652 = vxpose.xlu0.b32.cont [7/16] 0.0, 128
      %653 = vxpose.xlu0.b32.cont [8/16] 0.0, 128
      %654 = vxpose.xlu0.b32.cont [9/16] 0.0, 128
      %655 = vxpose.xlu0.b32.cont [10/16] 0.0, 128
      %656 = vxpose.xlu0.b32.cont [11/16] 0.0, 128
      %657 = vxpose.xlu0.b32.cont [12/16] 0.0, 128
      %658 = vxpose.xlu0.b32.cont [13/16] 0.0, 128
      %659 = vxpose.xlu0.b32.cont [14/16] 0.0, 128
      %660 = vxpose.xlu0.b32.cont [15/16] 0.0, 128
      %661 = vxpose.xlu0.b32.end [16/16] 0.0, 128
      %v662 = vpop.trf.xlu0
      %v663 = vpop.trf.xlu0
      %v664 = vpop.trf.xlu0
      %v665 = vpop.trf.xlu0
      %v666 = vpop.trf.xlu0
      %v667 = vpop.trf.xlu0
      %v668 = vpop.trf.xlu0
      %v669 = vpop.trf.xlu0
      %v670 = vpop.trf.xlu0
      %v671 = vpop.trf.xlu0
      %v672 = vpop.trf.xlu0
      %v673 = vpop.trf.xlu0
      %v674 = vpop.trf.xlu0
      %v675 = vpop.trf.xlu0
      %v676 = vpop.trf.xlu0
      %v677 = vpop.trf.xlu0
      %vm681 = vcmask 1043456
      %v682 = vrot.slane %v662, 4
      %v683 = vrot.slane %v663, 4
      %v684 = vsel %vm681, %v682, %v683
      %v685 = vrot.slane %v664, 4
      %v686 = vsel %vm681, %v683, %v685
      %v690 = vsel %vm681, %v627, %v682
      %v691 = vmul.f32 %v625, %v514
      %v692 = vmul.f32 %v626, %v515
      %v693 = vmul.f32 %v690, %v516
      %v694 = vmul.f32 %v684, %v517
      %v695 = vmul.f32 %v686, %v518
      %vm696 = vcmp.ge.s32.totalorder %v499, 2
      %vm697 = vcmp.ge.s32.totalorder %v500, 2
      %vm698 = vcmp.ge.s32.totalorder %v501, 2
      %vm699 = vcmp.ge.s32.totalorder %v502, 2
      %vm700 = vcmp.ge.s32.totalorder %v503, 2
      %v701 = vrot.slane %v691, 6
      %v702 = vrot.slane %v692, 6
      %v703 = vrot.slane %v693, 6
      %v704 = vrot.slane %v694, 6
      %v705 = vrot.slane %v695, 6
      %vm706 = vcmp.lt.s32.totalorder %v462, 2
      %v707 = vsel %vm706, %v704, %v705
      %v708 = vsel %vm706, %v703, %v704
      %v709 = vsel %vm706, %v702, %v703
      %v710 = vsel %vm706, %v701, %v702
      %v711 = vsel %vm706, %v705, %v701
      %v712 = vsel %vm696, 1, 0
      %v713 = vsel %vm697, 1, 0
      %v714 = vsel %vm698, 1, 0
      %v715 = vsel %vm699, 1, 0
      %v716 = vsel %vm700, 1, 0
      %vm717 = vcmp.eq.s32.totalorder %v712, 1
      %vm718 = vcmp.eq.s32.totalorder %v713, 1
      %vm719 = vcmp.eq.s32.totalorder %v714, 1
      %vm720 = vcmp.eq.s32.totalorder %v715, 1
      %vm721 = vcmp.eq.s32.totalorder %v716, 1
      %v722 = vsel %vm717, %v711, 0.0
      %v723 = vsel %vm718, %v710, 0.0
      %v724 = vsel %vm719, %v709, 0.0
      %v725 = vsel %vm720, %v708, 0.0
      %v726 = vsel %vm721, %v707, 0.0
      %vm727 = vcmp.lt.s32.totalorder %v499, 18
      %vm728 = vcmp.lt.s32.totalorder %v500, 18
      %vm729 = vcmp.lt.s32.totalorder %v501, 18
      %vm730 = vcmp.lt.s32.totalorder %v502, 18
      %vm731 = vcmp.lt.s32.totalorder %v503, 18
      %v732 = vrot.slane %v691, 2
      %v733 = vrot.slane %v692, 2
      %v734 = vrot.slane %v693, 2
      %v735 = vrot.slane %v694, 2
      %v736 = vrot.slane %v695, 2
      %vm737 = vcmp.lt.s32.totalorder %v462, 6
      %v738 = vsel %vm737, %v735, %v736
      %v739 = vsel %vm737, %v734, %v735
      %v740 = vsel %vm737, %v733, %v734
      %v741 = vsel %vm737, %v732, %v733
      %v742 = vsel %vm737, %v736, %v732
      %v743 = vsel %vm727, 1, 0
      %v744 = vsel %vm728, 1, 0
      %v745 = vsel %vm729, 1, 0
      %v746 = vsel %vm730, 1, 0
      %v747 = vsel %vm731, 1, 0
      %vm748 = vcmp.eq.s32.totalorder %v743, 1
      %vm749 = vcmp.eq.s32.totalorder %v744, 1
      %vm750 = vcmp.eq.s32.totalorder %v745, 1
      %vm751 = vcmp.eq.s32.totalorder %v746, 1
      %vm752 = vcmp.eq.s32.totalorder %v747, 1
      %v753 = vsel %vm748, %v741, 0.0
      %v754 = vsel %vm749, %v740, 0.0
      %v755 = vsel %vm750, %v739, 0.0
      %v756 = vsel %vm751, %v738, 0.0
      %v757 = vsel %vm752, %v742, 0.0
      %v758 = vpack.c.bf16 %v723, %v722
      %v759 = vpack.c.bf16 %v725, %v724
      %v760 = vpack.c.bf16 %v726, %v726
      %v761 = vld [vmem:[%s2] sm:$0xf]
      %v762 = vld [vmem:[%s2 + $0x4] sm:$0xf]
      %v763 = vld [vmem:[%s2 + $0x8] sm:$0xf]
      %v764 = vld [vmem:[%s2 + $0xc] sm:$0xf]
      %v765 = vpack.c.bf16 %v692, %v691
      %v766 = vpack.c.bf16 %v694, %v693
      %v767 = vpack.c.bf16 %v695, %v695
      %s768 = scalar_lea.vmem %s2, 16
      %v769 = vld [vmem:[%s768] sm:$0xf]
      %v770 = vld [vmem:[%s768 + $0x4] sm:$0xf]
      %v771 = vld [vmem:[%s768 + $0x8] sm:$0xf]
      %v772 = vld [vmem:[%s768 + $0xc] sm:$0xf]
      %v777 = vunpack.c.l.b16 %v769
      %v778 = vunpack.c.l.b16 %v770
      %v779 = vunpack.c.l.b16 %v771
      %v780 = vunpack.c.l.b16 %v772
      %v781 = vpack.c.b16 %v778, %v777
      %v782 = vpack.c.b16 %v780, %v779
      %vm785 = vcmask 261120
      %v787 = vsel %vm785, %v765, 0
      %v790 = vsel %vm785, %v766, 0
      %v793 = vsel %vm785, %v767, 0
      %795 = vmatprep.subr.bf16.mxu0 0
      %796 = vmatpush1.bf16.msra.mxu0 %v781
      %797 = vmatprep.subr.bf16.mxu0 0
      %798 = vmatpush1.bf16.msra.mxu0 %v782
      %799 = vmatprep.subr.bf16.mxu0 0
      %800 = vmatpush1.bf16.msra.mxu0 0
      %801 = vmatprep.subr.bf16.mxu0 0
      %802 = vmatpush1.bf16.msra.mxu0 0
      %803 = vmatprep.subr.bf16.mxu0 0
      %804 = vmatpush1.bf16.msra.mxu0 0
      %805 = vmatprep.subr.bf16.mxu0 0
      %806 = vmatpush1.bf16.msra.mxu0 0
      %807 = vmatprep.subr.bf16.mxu0 0
      %808 = vmatpush1.bf16.msra.mxu0 0
      %809 = vmatprep.subr.bf16.mxu0 0
      %810 = vmatpush1.bf16.msra.mxu0 0
      %811 = vmatprep.subr.bf16.mxu0 0
      %812 = vmatpush1.bf16.msra.mxu0 0
      %813 = vmatprep.subr.bf16.mxu0 0
      %814 = vmatpush1.bf16.msra.mxu0 0
      %815 = vmatprep.subr.bf16.mxu0 0
      %816 = vmatpush1.bf16.msra.mxu0 0
      %817 = vmatprep.subr.bf16.mxu0 0
      %818 = vmatpush1.bf16.msra.mxu0 0
      %819 = vmatprep.subr.bf16.mxu0 0
      %820 = vmatpush1.bf16.msra.mxu0 0
      %821 = vmatprep.subr.bf16.mxu0 0
      %822 = vmatpush1.bf16.msra.mxu0 0
      %823 = vmatprep.subr.bf16.mxu0 0
      %824 = vmatpush1.bf16.msra.mxu0 0
      %825 = vmatprep.subr.bf16.mxu0 0
      %826 = vmatpush1.bf16.msra.mxu0 0
      %827 = vmatprep.mubr.bf16.mxu0 0
      %828 = vmatmul.mubr.bf16.gmra.mrb[0].mxu0 %v787
      %v829 = vpop.f32.mrb[0].mxu0
      %v830 = vadd.f32 0.0, %v829
      %v831 = vpop.f32.mrb[0].mxu0
      %v832 = vpop.f32.mrb[0].mxu0
      %v833 = vadd.f32 0.0, %v832
      %v834 = vpop.f32.mrb[0].mxu0
      %835 = vmatprep.mubr.bf16.mxu0 0
      %836 = vmatmul.mubr.bf16.gmra.mrb[0].mxu0 %v790
      %v837 = vpop.f32.mrb[0].mxu0
      %v838 = vadd.f32 0.0, %v837
      %v839 = vpop.f32.mrb[0].mxu0
      %v840 = vpop.f32.mrb[0].mxu0
      %v841 = vadd.f32 0.0, %v840
      %v842 = vpop.f32.mrb[0].mxu0
      %843 = vmatprep.mubr.bf16.mxu0 0
      %844 = vmatmul.mubr.bf16.gmra.mrb[0].mxu0 %v793
      %v845 = vpop.f32.mrb[0].mxu0
      %v846 = vadd.f32 0.0, %v845
      %v847 = vpop.f32.mrb[0].mxu0
      %v848 = vpop.f32.mrb[0].mxu0
      %v849 = vpop.f32.mrb[0].mxu0
      %850 = vdwg.mxu0
      %v855 = vunpack.c.l.b16 %v761
      %v856 = vunpack.c.l.b16 %v762
      %v857 = vunpack.c.l.b16 %v763
      %v858 = vunpack.c.l.b16 %v764
      %v859 = vpack.c.b16 %v856, %v855
      %v860 = vpack.c.b16 %v858, %v857
      %v864 = vsel %vm785, %v758, 0
      %v867 = vsel %vm785, %v759, 0
      %v870 = vsel %vm785, %v760, 0
      %872 = vmatprep.subr.bf16.mxu0 0
      %873 = vmatpush1.bf16.msra.mxu0 %v859
      %874 = vmatprep.subr.bf16.mxu0 0
      %875 = vmatpush1.bf16.msra.mxu0 %v860
      %876 = vmatprep.subr.bf16.mxu0 0
      %877 = vmatpush1.bf16.msra.mxu0 0
      %878 = vmatprep.subr.bf16.mxu0 0
      %879 = vmatpush1.bf16.msra.mxu0 0
      %880 = vmatprep.subr.bf16.mxu0 0
      %881 = vmatpush1.bf16.msra.mxu0 0
      %882 = vmatprep.subr.bf16.mxu0 0
      %883 = vmatpush1.bf16.msra.mxu0 0
      %884 = vmatprep.subr.bf16.mxu0 0
      %885 = vmatpush1.bf16.msra.mxu0 0
      %886 = vmatprep.subr.bf16.mxu0 0
      %887 = vmatpush1.bf16.msra.mxu0 0
      %888 = vmatprep.subr.bf16.mxu0 0
      %889 = vmatpush1.bf16.msra.mxu0 0
      %890 = vmatprep.subr.bf16.mxu0 0
      %891 = vmatpush1.bf16.msra.mxu0 0
      %892 = vmatprep.subr.bf16.mxu0 0
      %893 = vmatpush1.bf16.msra.mxu0 0
      %894 = vmatprep.subr.bf16.mxu0 0
      %895 = vmatpush1.bf16.msra.mxu0 0
      %896 = vmatprep.subr.bf16.mxu0 0
      %897 = vmatpush1.bf16.msra.mxu0 0
      %898 = vmatprep.subr.bf16.mxu0 0
      %899 = vmatpush1.bf16.msra.mxu0 0
      %900 = vmatprep.subr.bf16.mxu0 0
      %901 = vmatpush1.bf16.msra.mxu0 0
      %902 = vmatprep.subr.bf16.mxu0 0
      %903 = vmatpush1.bf16.msra.mxu0 0
      %904 = vmatprep.mubr.bf16.mxu0 0
      %905 = vmatmul.mubr.bf16.gmra.mrb[0].mxu0 %v864
      %v906 = vpop.f32.mrb[0].mxu0
      %v907 = vadd.f32 %v830, %v906
      %v908 = vpop.f32.mrb[0].mxu0
      %v909 = vpop.f32.mrb[0].mxu0
      %v910 = vadd.f32 %v833, %v909
      %v911 = vpop.f32.mrb[0].mxu0
      %912 = vmatprep.mubr.bf16.mxu0 0
      %913 = vmatmul.mubr.bf16.gmra.mrb[0].mxu0 %v867
      %v914 = vpop.f32.mrb[0].mxu0
      %v915 = vadd.f32 %v838, %v914
      %v916 = vpop.f32.mrb[0].mxu0
      %v917 = vpop.f32.mrb[0].mxu0
      %v918 = vadd.f32 %v841, %v917
      %v919 = vpop.f32.mrb[0].mxu0
      %920 = vmatprep.mubr.bf16.mxu0 0
      %921 = vmatmul.mubr.bf16.gmra.mrb[0].mxu0 %v870
      %v922 = vpop.f32.mrb[0].mxu0
      %v923 = vadd.f32 %v846, %v922
      %v924 = vpop.f32.mrb[0].mxu0
      %v925 = vpop.f32.mrb[0].mxu0
      %v926 = vpop.f32.mrb[0].mxu0
      %927 = vdwg.mxu0
      %v928 = vpack.c.bf16 %v754, %v753
      %v929 = vpack.c.bf16 %v756, %v755
      %v930 = vpack.c.bf16 %v757, %v757
      %s931 = scalar_lea.vmem %s2, 32
      %v932 = vld [vmem:[%s931] sm:$0xf]
      %v933 = vld [vmem:[%s931 + $0x4] sm:$0xf]
      %v934 = vld [vmem:[%s931 + $0x8] sm:$0xf]
      %v935 = vld [vmem:[%s931 + $0xc] sm:$0xf]
      %v940 = vunpack.c.l.b16 %v932
      %v941 = vunpack.c.l.b16 %v933
      %v942 = vunpack.c.l.b16 %v934
      %v943 = vunpack.c.l.b16 %v935
      %v944 = vpack.c.b16 %v941, %v940
      %v945 = vpack.c.b16 %v943, %v942
      %v949 = vsel %vm785, %v928, 0
      %v952 = vsel %vm785, %v929, 0
      %v955 = vsel %vm785, %v930, 0
      %957 = vmatprep.subr.bf16.mxu0 0
      %958 = vmatpush1.bf16.msra.mxu0 %v944
      %959 = vmatprep.subr.bf16.mxu0 0
      %960 = vmatpush1.bf16.msra.mxu0 %v945
      %961 = vmatprep.subr.bf16.mxu0 0
      %962 = vmatpush1.bf16.msra.mxu0 0
      %963 = vmatprep.subr.bf16.mxu0 0
      %964 = vmatpush1.bf16.msra.mxu0 0
      %965 = vmatprep.subr.bf16.mxu0 0
      %966 = vmatpush1.bf16.msra.mxu0 0
      %967 = vmatprep.subr.bf16.mxu0 0
      %968 = vmatpush1.bf16.msra.mxu0 0
      %969 = vmatprep.subr.bf16.mxu0 0
      %970 = vmatpush1.bf16.msra.mxu0 0
      %971 = vmatprep.subr.bf16.mxu0 0
      %972 = vmatpush1.bf16.msra.mxu0 0
      %973 = vmatprep.subr.bf16.mxu0 0
      %974 = vmatpush1.bf16.msra.mxu0 0
      %975 = vmatprep.subr.bf16.mxu0 0
      %976 = vmatpush1.bf16.msra.mxu0 0
      %977 = vmatprep.subr.bf16.mxu0 0
      %978 = vmatpush1.bf16.msra.mxu0 0
      %979 = vmatprep.subr.bf16.mxu0 0
      %980 = vmatpush1.bf16.msra.mxu0 0
      %981 = vmatprep.subr.bf16.mxu0 0
      %982 = vmatpush1.bf16.msra.mxu0 0
      %983 = vmatprep.subr.bf16.mxu0 0
      %984 = vmatpush1.bf16.msra.mxu0 0
      %985 = vmatprep.subr.bf16.mxu0 0
      %986 = vmatpush1.bf16.msra.mxu0 0
      %987 = vmatprep.subr.bf16.mxu0 0
      %988 = vmatpush1.bf16.msra.mxu0 0
      %989 = vmatprep.mubr.bf16.mxu0 0
      %990 = vmatmul.mubr.bf16.gmra.mrb[0].mxu0 %v949
      %v991 = vpop.f32.mrb[0].mxu0
      %v992 = vadd.f32 0.0, %v991
      %v993 = vpop.f32.mrb[0].mxu0
      %v994 = vpop.f32.mrb[0].mxu0
      %v995 = vadd.f32 0.0, %v994
      %v996 = vpop.f32.mrb[0].mxu0
      %997 = vmatprep.mubr.bf16.mxu0 0
      %998 = vmatmul.mubr.bf16.gmra.mrb[0].mxu0 %v952
      %v999 = vpop.f32.mrb[0].mxu0
      %v1000 = vadd.f32 0.0, %v999
      %v1001 = vpop.f32.mrb[0].mxu0
      %v1002 = vpop.f32.mrb[0].mxu0
      %v1003 = vadd.f32 0.0, %v1002
      %v1004 = vpop.f32.mrb[0].mxu0
      %1005 = vmatprep.mubr.bf16.mxu0 0
      %1006 = vmatmul.mubr.bf16.gmra.mrb[0].mxu0 %v955
      %v1007 = vpop.f32.mrb[0].mxu0
      %v1008 = vadd.f32 0.0, %v1007
      %v1009 = vpop.f32.mrb[0].mxu0
      %v1010 = vpop.f32.mrb[0].mxu0
      %v1011 = vpop.f32.mrb[0].mxu0
      %1012 = vdwg.mxu0
      %v1013 = vadd.f32 %v907, %v992
      %v1014 = vadd.f32 %v910, %v995
      %v1015 = vadd.f32 %v915, %v1000
      %v1016 = vadd.f32 %v918, %v1003
      %v1017 = vadd.f32 %v923, %v1008
      %v1018 = vld [vmem:[%s3] sm:$0x1]
      %v1020 = vlaneseq
      %v1021 = vshrl.u32 %v1020, 7
      %v1022 = vsub.s32 0, %v1021
      %v1023 = vrot.slane %v1018, %v1022
      %v1025 = vadd.f32 %v1013, %v1023
      %v1026 = vadd.f32 %v1014, %v1023
      %v1027 = vadd.f32 %v1015, %v1023
      %v1028 = vadd.f32 %v1016, %v1023
      %v1029 = vadd.f32 %v1017, %v1023
      %v1030 = vmul.f32 %v1025, 0.5
      %v1031 = vmul.f32 %v1026, 0.5
      %v1032 = vmul.f32 %v1027, 0.5
      %v1033 = vmul.f32 %v1028, 0.5
      %v1034 = vmul.f32 %v1029, 0.5
      %v1035 = vmul.f32 %v1025, 0.044715
      %v1036 = vmul.f32 %v1026, 0.044715
      %v1037 = vmul.f32 %v1027, 0.044715
      %v1038 = vmul.f32 %v1028, 0.044715
      %v1039 = vmul.f32 %v1029, 0.044715
      %v1040 = vmul.f32 %v1035, %v1025
      %v1041 = vmul.f32 %v1036, %v1026
      %v1042 = vmul.f32 %v1037, %v1027
      %v1043 = vmul.f32 %v1038, %v1028
      %v1044 = vmul.f32 %v1039, %v1029
      %v1045 = vmul.f32 %v1040, %v1025
      %v1046 = vmul.f32 %v1041, %v1026
      %v1047 = vmul.f32 %v1042, %v1027
      %v1048 = vmul.f32 %v1043, %v1028
      %v1049 = vmul.f32 %v1044, %v1029
      %v1050 = vadd.f32 %v1025, %v1045
      %v1051 = vadd.f32 %v1026, %v1046
      %v1052 = vadd.f32 %v1027, %v1047
      %v1053 = vadd.f32 %v1028, %v1048
      %v1054 = vadd.f32 %v1029, %v1049
      %v1055 = vmul.f32 %v1050, 0.7978846
      %v1056 = vmul.f32 %v1051, 0.7978846
      %v1057 = vmul.f32 %v1052, 0.7978846
      %v1058 = vmul.f32 %v1053, 0.7978846
      %v1059 = vmul.f32 %v1054, 0.7978846
      %v1060 = vtanh.pop %v1055
      %v1061 = vtanh.pop %v1056
      %v1062 = vtanh.pop %v1057
      %v1063 = vtanh.pop %v1058
      %v1064 = vtanh.pop %v1059
      %v1065 = vadd.f32 %v1060, 1.0
      %v1066 = vadd.f32 %v1061, 1.0
      %v1067 = vadd.f32 %v1062, 1.0
      %v1068 = vadd.f32 %v1063, 1.0
      %v1069 = vadd.f32 %v1064, 1.0
      %v1070 = vmul.f32 %v1030, %v1065
      %v1071 = vmul.f32 %v1031, %v1066
      %v1072 = vmul.f32 %v1032, %v1067
      %v1073 = vmul.f32 %v1033, %v1068
      %v1074 = vmul.f32 %v1034, %v1069
      %v1075 = vmul.f32 %v1070, %v514
      %v1076 = vmul.f32 %v1071, %v515
      %v1077 = vmul.f32 %v1072, %v516
      %v1078 = vmul.f32 %v1073, %v517
      %v1079 = vmul.f32 %v1074, %v518
      %v1080 = vpack.c.bf16 %v1076, %v1075
      %v1081 = vpack.c.bf16 %v1078, %v1077
      %v1082 = vpack.c.bf16 %v1079, %v1079
      %v1083 = vld [vmem:[%s4] sm:$0xf]
      %v1084 = vld [vmem:[%s4 + $0x4] sm:$0xf]
      %v1085 = vld [vmem:[%s4 + $0x8] sm:$0xf]
      %v1086 = vld [vmem:[%s4 + $0xc] sm:$0xf]
      %v1087 = vld [vmem:[%s5] sm:$0x1]
      %v1088 = vld [vmem:[%s6] sm:$0xf]
      %v1089 = vld [vmem:[%s6 + $0x4] sm:$0xf]
      %v1090 = vld [vmem:[%s7] sm:$0x1]
      %v1092 = vlaneseq
      %v1093 = vshrl.u32 %v1092, 7
      %v1094 = vsub.s32 0, %v1093
      %v1095 = vrot.slane %v1087, %v1094
      %v1101 = vunpack.c.l.b16 %v1083
      %v1102 = vunpack.c.l.b16 %v1084
      %v1103 = vunpack.c.l.b16 %v1085
      %v1104 = vunpack.c.l.b16 %v1086
      %v1105 = vpack.c.b16 %v1102, %v1101
      %v1106 = vpack.c.b16 %v1104, %v1103
      %v1110 = vsel %vm785, %v1080, 0
      %v1113 = vsel %vm785, %v1081, 0
      %v1116 = vsel %vm785, %v1082, 0
      %1118 = vmatprep.subr.bf16.mxu0 0
      %1119 = vmatpush1.bf16.msra.mxu0 %v1105
      %1120 = vmatprep.subr.bf16.mxu0 0
      %1121 = vmatpush1.bf16.msra.mxu0 %v1106
      %1122 = vmatprep.subr.bf16.mxu0 0
      %1123 = vmatpush1.bf16.msra.mxu0 0
      %1124 = vmatprep.subr.bf16.mxu0 0
      %1125 = vmatpush1.bf16.msra.mxu0 0
      %1126 = vmatprep.subr.bf16.mxu0 0
      %1127 = vmatpush1.bf16.msra.mxu0 0
      %1128 = vmatprep.subr.bf16.mxu0 0
      %1129 = vmatpush1.bf16.msra.mxu0 0
      %1130 = vmatprep.subr.bf16.mxu0 0
      %1131 = vmatpush1.bf16.msra.mxu0 0
      %1132 = vmatprep.subr.bf16.mxu0 0
      %1133 = vmatpush1.bf16.msra.mxu0 0
      %1134 = vmatprep.subr.bf16.mxu0 0
      %1135 = vmatpush1.bf16.msra.mxu0 0
      %1136 = vmatprep.subr.bf16.mxu0 0
      %1137 = vmatpush1.bf16.msra.mxu0 0
      %1138 = vmatprep.subr.bf16.mxu0 0
      %1139 = vmatpush1.bf16.msra.mxu0 0
      %1140 = vmatprep.subr.bf16.mxu0 0
      %1141 = vmatpush1.bf16.msra.mxu0 0
      %1142 = vmatprep.subr.bf16.mxu0 0
      %1143 = vmatpush1.bf16.msra.mxu0 0
      %1144 = vmatprep.subr.bf16.mxu0 0
      %1145 = vmatpush1.bf16.msra.mxu0 0
      %1146 = vmatprep.subr.bf16.mxu0 0
      %1147 = vmatpush1.bf16.msra.mxu0 0
      %1148 = vmatprep.subr.bf16.mxu0 0
      %1149 = vmatpush1.bf16.msra.mxu0 0
      %1150 = vmatprep.mubr.bf16.mxu0 0
      %1151 = vmatmul.mubr.bf16.gmra.mrb[0].mxu0 %v1110
      %v1152 = vpop.f32.mrb[0].mxu0
      %v1153 = vadd.f32 %v1095, %v1152
      %v1154 = vpop.f32.mrb[0].mxu0
      %v1155 = vpop.f32.mrb[0].mxu0
      %v1156 = vadd.f32 %v1095, %v1155
      %v1157 = vpop.f32.mrb[0].mxu0
      %1158 = vmatprep.mubr.bf16.mxu0 0
      %1159 = vmatmul.mubr.bf16.gmra.mrb[0].mxu0 %v1113
      %v1160 = vpop.f32.mrb[0].mxu0
      %v1161 = vadd.f32 %v1095, %v1160
      %v1162 = vpop.f32.mrb[0].mxu0
      %v1163 = vpop.f32.mrb[0].mxu0
      %v1164 = vadd.f32 %v1095, %v1163
      %v1165 = vpop.f32.mrb[0].mxu0
      %1166 = vmatprep.mubr.bf16.mxu0 0
      %1167 = vmatmul.mubr.bf16.gmra.mrb[0].mxu0 %v1116
      %v1168 = vpop.f32.mrb[0].mxu0
      %v1169 = vadd.f32 %v1095, %v1168
      %v1170 = vpop.f32.mrb[0].mxu0
      %v1171 = vpop.f32.mrb[0].mxu0
      %v1172 = vpop.f32.mrb[0].mxu0
      %1173 = vdwg.mxu0
      %v1174 = vpack.c.bf16 %v1156, %v1153
      %v1175 = vpack.c.bf16 %v1164, %v1161
      %v1176 = vpack.c.bf16 %v1169, %v1169
      %1180 = vrot.lane.b32.xlu0 %v1174, 112
      %v1181 = vpop.permute.xlu0 %1180
      %1182 = vrot.lane.b32.xlu0 %v1175, 112
      %v1183 = vpop.permute.xlu0 %1182
      %1184 = vrot.lane.b32.xlu0 %v1176, 112
      %v1185 = vpop.permute.xlu0 %1184
      %vm1186 = vcmask 64512
      %v1188 = vsel %vm1186, %v1174, 0
      %v1191 = vsel %vm1186, %v1175, 0
      %v1194 = vsel %vm1186, %v1176, 0
      %v1197 = vsel %vm1186, %v1181, 0
      %v1200 = vsel %vm1186, %v1183, 0
      %v1203 = vsel %vm1186, %v1185, 0
      %1205 = vmatprep.subr.bf16.mxu0 0
      %1206 = vmatpush1.bf16.xpose.msra.mxu0 %v1197
      %1207 = vmatprep.subr.bf16.mxu0 0
      %1208 = vmatpush1.bf16.xpose.msra.mxu0 %v1200
      %1209 = vmatprep.subr.bf16.mxu0 0
      %1210 = vmatpush1.bf16.xpose.msra.mxu0 %v1203
      %1211 = vmatprep.subr.bf16.mxu0 0
      %1212 = vmatpush1.bf16.xpose.msra.mxu0 0
      %1213 = vmatprep.subr.bf16.mxu0 0
      %1214 = vmatpush1.bf16.xpose.msra.mxu0 0
      %1215 = vmatprep.subr.bf16.mxu0 0
      %1216 = vmatpush1.bf16.xpose.msra.mxu0 0
      %1217 = vmatprep.subr.bf16.mxu0 0
      %1218 = vmatpush1.bf16.xpose.msra.mxu0 0
      %1219 = vmatprep.subr.bf16.mxu0 0
      %1220 = vmatpush1.bf16.xpose.msra.mxu0 0
      %1221 = vmatprep.subr.bf16.mxu0 0
      %1222 = vmatpush1.bf16.xpose.msra.mxu0 0
      %1223 = vmatprep.subr.bf16.mxu0 0
      %1224 = vmatpush1.bf16.xpose.msra.mxu0 0
      %1225 = vmatprep.subr.bf16.mxu0 0
      %1226 = vmatpush1.bf16.xpose.msra.mxu0 0
      %1227 = vmatprep.subr.bf16.mxu0 0
      %1228 = vmatpush1.bf16.xpose.msra.mxu0 0
      %1229 = vmatprep.subr.bf16.mxu0 0
      %1230 = vmatpush1.bf16.xpose.msra.mxu0 0
      %1231 = vmatprep.subr.bf16.mxu0 0
      %1232 = vmatpush1.bf16.xpose.msra.mxu0 0
      %1233 = vmatprep.subr.bf16.mxu0 0
      %1234 = vmatpush1.bf16.xpose.msra.mxu0 0
      %1235 = vmatprep.subr.bf16.mxu0 0
      %1236 = vmatpush1.bf16.xpose.msra.mxu0 0
      %1237 = vmatprep.mubr.bf16.mxu0 0
      %1238 = vmatmul.mubr.bf16.gmra.mrb[0].mxu0 %v1188
      %v1239 = vpop.f32.mrb[0].mxu0
      %v1240 = vadd.f32 0.0, %v1239
      %v1241 = vpop.f32.mrb[0].mxu0
      %v1242 = vpop.f32.mrb[0].mxu0
      %v1243 = vadd.f32 0.0, %v1242
      %v1244 = vpop.f32.mrb[0].mxu0
      %1245 = vmatprep.mubr.bf16.mxu0 0
      %1246 = vmatmul.mubr.bf16.gmra.mrb[0].mxu0 %v1191
      %v1247 = vpop.f32.mrb[0].mxu0
      %v1248 = vadd.f32 0.0, %v1247
      %v1249 = vpop.f32.mrb[0].mxu0
      %v1250 = vpop.f32.mrb[0].mxu0
      %v1251 = vadd.f32 0.0, %v1250
      %v1252 = vpop.f32.mrb[0].mxu0
      %1253 = vmatprep.mubr.bf16.mxu0 0
      %1254 = vmatmul.mubr.bf16.gmra.mrb[0].mxu0 %v1194
      %v1255 = vpop.f32.mrb[0].mxu0
      %v1256 = vadd.f32 0.0, %v1255
      %v1257 = vpop.f32.mrb[0].mxu0
      %v1258 = vpop.f32.mrb[0].mxu0
      %v1259 = vpop.f32.mrb[0].mxu0
      %1260 = vdwg.mxu0
      %v1261 = vmul.f32 %v1240, 0.35355338
      %v1262 = vmul.f32 %v1243, 0.35355338
      %v1263 = vmul.f32 %v1248, 0.35355338
      %v1264 = vmul.f32 %v1251, 0.35355338
      %v1265 = vmul.f32 %v1256, 0.35355338
      %v1266 = vadd.f32 %v1261, %v595
      %v1267 = vadd.f32 %v1262, %v596
      %v1268 = vadd.f32 %v1263, %v597
      %v1269 = vadd.f32 %v1264, %v598
      %v1270 = vadd.f32 %v1265, %v599
      %vm1271 = vcmask 326656
      %v1272 = vsel %vm1271, %v1266, -inf
      %1273 = vmax.xlane.f32.xlu0 %v1272
      %v1274 = vpop.xlane.xlu0 %1273
      %v1275 = vsel %vm1271, %v1267, -inf
      %1276 = vmax.xlane.f32.xlu0 %v1275
      %v1277 = vpop.xlane.xlu0 %1276
      %v1278 = vsel %vm1271, %v1268, -inf
      %1279 = vmax.xlane.f32.xlu0 %v1278
      %v1280 = vpop.xlane.xlu0 %1279
      %v1281 = vsel %vm1271, %v1269, -inf
      %1282 = vmax.xlane.f32.xlu0 %v1281
      %v1283 = vpop.xlane.xlu0 %1282
      %v1284 = vsel %vm1271, %v1270, -inf
      %1285 = vmax.xlane.f32.xlu0 %v1284
      %v1286 = vpop.xlane.xlu0 %1285
      %v1287 = vsub.f32 %v1266, %v1274
      %v1288 = vsub.f32 %v1267, %v1277
      %v1289 = vsub.f32 %v1268, %v1280
      %v1290 = vsub.f32 %v1269, %v1283
      %v1291 = vsub.f32 %v1270, %v1286
      %v1292 = vmul.f32 %v1287, 1.442695
      %v1293 = vpow.pop %v1292
      %v1294 = vmul.f32 %v1288, 1.442695
      %v1295 = vpow.pop %v1294
      %v1296 = vmul.f32 %v1289, 1.442695
      %v1297 = vpow.pop %v1296
      %v1298 = vmul.f32 %v1290, 1.442695
      %v1299 = vpow.pop %v1298
      %v1300 = vmul.f32 %v1291, 1.442695
      %v1301 = vpow.pop %v1300
      %v1302 = vsel %vm1271, %v1293, 0.0
      %1303 = vadd.xlane.f32.xlu0 %v1302
      %v1304 = vpop.xlane.xlu0 %1303
      %v1305 = vsel %vm1271, %v1295, 0.0
      %1306 = vadd.xlane.f32.xlu0 %v1305
      %v1307 = vpop.xlane.xlu0 %1306
      %v1308 = vsel %vm1271, %v1297, 0.0
      %1309 = vadd.xlane.f32.xlu0 %v1308
      %v1310 = vpop.xlane.xlu0 %1309
      %v1311 = vsel %vm1271, %v1299, 0.0
      %1312 = vadd.xlane.f32.xlu0 %v1311
      %v1313 = vpop.xlane.xlu0 %1312
      %v1314 = vsel %vm1271, %v1301, 0.0
      %1315 = vadd.xlane.f32.xlu0 %v1314
      %v1316 = vpop.xlane.xlu0 %1315
      %v1317 = vrcp.pop %v1304
      %v1318 = vrcp.pop %v1307
      %v1319 = vrcp.pop %v1310
      %v1320 = vrcp.pop %v1313
      %v1321 = vrcp.pop %v1316
      %v1322 = vmul.f32 %v1293, %v1317
      %v1323 = vmul.f32 %v1295, %v1318
      %v1324 = vmul.f32 %v1297, %v1319
      %v1325 = vmul.f32 %v1299, %v1320
      %v1326 = vmul.f32 %v1301, %v1321
      %v1327 = vpack.c.bf16 %v1323, %v1322
      %v1328 = vpack.c.bf16 %v1325, %v1324
      %v1329 = vpack.c.bf16 %v1326, %v1326
      %1330 = vrot.lane.b32.xlu0 %v1174, 96
      %v1331 = vpop.permute.xlu0 %1330
      %1332 = vrot.lane.b32.xlu0 %v1175, 96
      %v1333 = vpop.permute.xlu0 %1332
      %1334 = vrot.lane.b32.xlu0 %v1176, 96
      %v1335 = vpop.permute.xlu0 %1334
      %v1339 = vsel %vm1271, %v1327, 0
      %v1342 = vsel %vm1271, %v1328, 0
      %v1345 = vsel %vm1271, %v1329, 0
      %v1348 = vsel %vm681, %v1335, 0
      %1350 = vmatprep.subr.bf16.mxu0 0
      %1351 = vmatpush1.bf16.msra.mxu0 %v1331
      %1352 = vmatprep.subr.bf16.mxu0 0
      %1353 = vmatpush1.bf16.msra.mxu0 %v1333
      %1354 = vmatprep.subr.bf16.mxu0 0
      %1355 = vmatpush1.bf16.msra.mxu0 %v1348
      %1356 = vmatprep.subr.bf16.mxu0 0
      %1357 = vmatpush1.bf16.msra.mxu0 0
      %1358 = vmatprep.subr.bf16.mxu0 0
      %1359 = vmatpush1.bf16.msra.mxu0 0
      %1360 = vmatprep.subr.bf16.mxu0 0
      %1361 = vmatpush1.bf16.msra.mxu0 0
      %1362 = vmatprep.subr.bf16.mxu0 0
      %1363 = vmatpush1.bf16.msra.mxu0 0
      %1364 = vmatprep.subr.bf16.mxu0 0
      %1365 = vmatpush1.bf16.msra.mxu0 0
      %1366 = vmatprep.subr.bf16.mxu0 0
      %1367 = vmatpush1.bf16.msra.mxu0 0
      %1368 = vmatprep.subr.bf16.mxu0 0
      %1369 = vmatpush1.bf16.msra.mxu0 0
      %1370 = vmatprep.subr.bf16.mxu0 0
      %1371 = vmatpush1.bf16.msra.mxu0 0
      %1372 = vmatprep.subr.bf16.mxu0 0
      %1373 = vmatpush1.bf16.msra.mxu0 0
      %1374 = vmatprep.subr.bf16.mxu0 0
      %1375 = vmatpush1.bf16.msra.mxu0 0
      %1376 = vmatprep.subr.bf16.mxu0 0
      %1377 = vmatpush1.bf16.msra.mxu0 0
      %1378 = vmatprep.subr.bf16.mxu0 0
      %1379 = vmatpush1.bf16.msra.mxu0 0
      %1380 = vmatprep.subr.bf16.mxu0 0
      %1381 = vmatpush1.bf16.msra.mxu0 0
      %1382 = vmatprep.mubr.bf16.mxu0 0
      %1383 = vmatmul.mubr.bf16.gmra.mrb[0].mxu0 %v1339
      %v1384 = vpop.f32.mrb[0].mxu0
      %v1385 = vadd.f32 0.0, %v1384
      %v1386 = vpop.f32.mrb[0].mxu0
      %v1387 = vpop.f32.mrb[0].mxu0
      %v1388 = vadd.f32 0.0, %v1387
      %v1389 = vpop.f32.mrb[0].mxu0
      %1390 = vmatprep.mubr.bf16.mxu0 0
      %1391 = vmatmul.mubr.bf16.gmra.mrb[0].mxu0 %v1342
      %v1392 = vpop.f32.mrb[0].mxu0
      %v1393 = vadd.f32 0.0, %v1392
      %v1394 = vpop.f32.mrb[0].mxu0
      %v1395 = vpop.f32.mrb[0].mxu0
      %v1396 = vadd.f32 0.0, %v1395
      %v1397 = vpop.f32.mrb[0].mxu0
      %1398 = vmatprep.mubr.bf16.mxu0 0
      %1399 = vmatmul.mubr.bf16.gmra.mrb[0].mxu0 %v1345
      %v1400 = vpop.f32.mrb[0].mxu0
      %v1401 = vadd.f32 0.0, %v1400
      %v1402 = vpop.f32.mrb[0].mxu0
      %v1403 = vpop.f32.mrb[0].mxu0
      %v1404 = vpop.f32.mrb[0].mxu0
      %1405 = vdwg.mxu0
      %v1406 = vmul.f32 %v1385, 0.5
      %v1407 = vmul.f32 %v1388, 0.5
      %v1408 = vmul.f32 %v1393, 0.5
      %v1409 = vmul.f32 %v1396, 0.5
      %v1410 = vmul.f32 %v1401, 0.5
      %v1411 = vmul.f32 %v1385, 0.044715
      %v1412 = vmul.f32 %v1388, 0.044715
      %v1413 = vmul.f32 %v1393, 0.044715
      %v1414 = vmul.f32 %v1396, 0.044715
      %v1415 = vmul.f32 %v1401, 0.044715
      %v1416 = vmul.f32 %v1411, %v1385
      %v1417 = vmul.f32 %v1412, %v1388
      %v1418 = vmul.f32 %v1413, %v1393
      %v1419 = vmul.f32 %v1414, %v1396
      %v1420 = vmul.f32 %v1415, %v1401
      %v1421 = vmul.f32 %v1416, %v1385
      %v1422 = vmul.f32 %v1417, %v1388
      %v1423 = vmul.f32 %v1418, %v1393
      %v1424 = vmul.f32 %v1419, %v1396
      %v1425 = vmul.f32 %v1420, %v1401
      %v1426 = vadd.f32 %v1385, %v1421
      %v1427 = vadd.f32 %v1388, %v1422
      %v1428 = vadd.f32 %v1393, %v1423
      %v1429 = vadd.f32 %v1396, %v1424
      %v1430 = vadd.f32 %v1401, %v1425
      %v1431 = vmul.f32 %v1426, 0.7978846
      %v1432 = vmul.f32 %v1427, 0.7978846
      %v1433 = vmul.f32 %v1428, 0.7978846
      %v1434 = vmul.f32 %v1429, 0.7978846
      %v1435 = vmul.f32 %v1430, 0.7978846
      %v1436 = vtanh.pop %v1431
      %v1437 = vtanh.pop %v1432
      %v1438 = vtanh.pop %v1433
      %v1439 = vtanh.pop %v1434
      %v1440 = vtanh.pop %v1435
      %v1441 = vadd.f32 %v1436, 1.0
      %v1442 = vadd.f32 %v1437, 1.0
      %v1443 = vadd.f32 %v1438, 1.0
      %v1444 = vadd.f32 %v1439, 1.0
      %v1445 = vadd.f32 %v1440, 1.0
      %v1446 = vmul.f32 %v1406, %v1441
      %v1447 = vmul.f32 %v1407, %v1442
      %v1448 = vmul.f32 %v1408, %v1443
      %v1449 = vmul.f32 %v1409, %v1444
      %v1450 = vmul.f32 %v1410, %v1445
      %v1451 = vpack.c.bf16 %v1447, %v1446
      %v1452 = vpack.c.bf16 %v1449, %v1448
      %v1453 = vpack.c.bf16 %v1450, %v1450
      %1454 = vrot.lane.b32.xlu0 %v1174, 120
      %v1455 = vpop.permute.xlu0 %1454
      %1456 = vrot.lane.b32.xlu0 %v1175, 120
      %v1457 = vpop.permute.xlu0 %1456
      %1458 = vrot.lane.b32.xlu0 %v1176, 120
      %v1459 = vpop.permute.xlu0 %1458
      %1460 = vrot.lane.b32.xlu0 %v1174, 104
      %v1461 = vpop.permute.xlu0 %1460
      %1462 = vrot.lane.b32.xlu0 %v1175, 104
      %v1463 = vpop.permute.xlu0 %1462
      %1464 = vrot.lane.b32.xlu0 %v1176, 104
      %v1465 = vpop.permute.xlu0 %1464
      %v1467 = vsel %vm1186, %v1455, 0
      %v1470 = vsel %vm1186, %v1457, 0
      %v1473 = vsel %vm1186, %v1459, 0
      %v1476 = vsel %vm1186, %v1461, 0
      %v1479 = vsel %vm1186, %v1463, 0
      %v1482 = vsel %vm1186, %v1465, 0
      %1484 = vmatprep.subr.bf16.mxu0 0
      %1485 = vmatpush1.bf16.xpose.msra.mxu0 %v1476
      %1486 = vmatprep.subr.bf16.mxu0 0
      %1487 = vmatpush1.bf16.xpose.msra.mxu0 %v1479
      %1488 = vmatprep.subr.bf16.mxu0 0
      %1489 = vmatpush1.bf16.xpose.msra.mxu0 %v1482
      %1490 = vmatprep.subr.bf16.mxu0 0
      %1491 = vmatpush1.bf16.xpose.msra.mxu0 0
      %1492 = vmatprep.subr.bf16.mxu0 0
      %1493 = vmatpush1.bf16.xpose.msra.mxu0 0
      %1494 = vmatprep.subr.bf16.mxu0 0
      %1495 = vmatpush1.bf16.xpose.msra.mxu0 0
      %1496 = vmatprep.subr.bf16.mxu0 0
      %1497 = vmatpush1.bf16.xpose.msra.mxu0 0
      %1498 = vmatprep.subr.bf16.mxu0 0
      %1499 = vmatpush1.bf16.xpose.msra.mxu0 0
      %1500 = vmatprep.subr.bf16.mxu0 0
      %1501 = vmatpush1.bf16.xpose.msra.mxu0 0
      %1502 = vmatprep.subr.bf16.mxu0 0
      %1503 = vmatpush1.bf16.xpose.msra.mxu0 0
      %1504 = vmatprep.subr.bf16.mxu0 0
      %1505 = vmatpush1.bf16.xpose.msra.mxu0 0
      %1506 = vmatprep.subr.bf16.mxu0 0
      %1507 = vmatpush1.bf16.xpose.msra.mxu0 0
      %1508 = vmatprep.subr.bf16.mxu0 0
      %1509 = vmatpush1.bf16.xpose.msra.mxu0 0
      %1510 = vmatprep.subr.bf16.mxu0 0
      %1511 = vmatpush1.bf16.xpose.msra.mxu0 0
      %1512 = vmatprep.subr.bf16.mxu0 0
      %1513 = vmatpush1.bf16.xpose.msra.mxu0 0
      %1514 = vmatprep.subr.bf16.mxu0 0
      %1515 = vmatpush1.bf16.xpose.msra.mxu0 0
      %1516 = vmatprep.mubr.bf16.mxu0 0
      %1517 = vmatmul.mubr.bf16.gmra.mrb[0].mxu0 %v1467
      %v1518 = vpop.f32.mrb[0].mxu0
      %v1519 = vadd.f32 0.0, %v1518
      %v1520 = vpop.f32.mrb[0].mxu0
      %v1521 = vpop.f32.mrb[0].mxu0
      %v1522 = vadd.f32 0.0, %v1521
      %v1523 = vpop.f32.mrb[0].mxu0
      %1524 = vmatprep.mubr.bf16.mxu0 0
      %1525 = vmatmul.mubr.bf16.gmra.mrb[0].mxu0 %v1470
      %v1526 = vpop.f32.mrb[0].mxu0
      %v1527 = vadd.f32 0.0, %v1526
      %v1528 = vpop.f32.mrb[0].mxu0
      %v1529 = vpop.f32.mrb[0].mxu0
      %v1530 = vadd.f32 0.0, %v1529
      %v1531 = vpop.f32.mrb[0].mxu0
      %1532 = vmatprep.mubr.bf16.mxu0 0
      %1533 = vmatmul.mubr.bf16.gmra.mrb[0].mxu0 %v1473
      %v1534 = vpop.f32.mrb[0].mxu0
      %v1535 = vadd.f32 0.0, %v1534
      %v1536 = vpop.f32.mrb[0].mxu0
      %v1537 = vpop.f32.mrb[0].mxu0
      %v1538 = vpop.f32.mrb[0].mxu0
      %1539 = vdwg.mxu0
      %v1540 = vmul.f32 %v1519, 0.35355338
      %v1541 = vmul.f32 %v1522, 0.35355338
      %v1542 = vmul.f32 %v1527, 0.35355338
      %v1543 = vmul.f32 %v1530, 0.35355338
      %v1544 = vmul.f32 %v1535, 0.35355338
      %v1545 = vadd.f32 %v1540, %v595
      %v1546 = vadd.f32 %v1541, %v596
      %v1547 = vadd.f32 %v1542, %v597
      %v1548 = vadd.f32 %v1543, %v598
      %v1549 = vadd.f32 %v1544, %v599
      %v1550 = vsel %vm1271, %v1545, -inf
      %1551 = vmax.xlane.f32.xlu0 %v1550
      %v1552 = vpop.xlane.xlu0 %1551
      %v1553 = vsel %vm1271, %v1546, -inf
      %1554 = vmax.xlane.f32.xlu0 %v1553
      %v1555 = vpop.xlane.xlu0 %1554
      %v1556 = vsel %vm1271, %v1547, -inf
      %1557 = vmax.xlane.f32.xlu0 %v1556
      %v1558 = vpop.xlane.xlu0 %1557
      %v1559 = vsel %vm1271, %v1548, -inf
      %1560 = vmax.xlane.f32.xlu0 %v1559
      %v1561 = vpop.xlane.xlu0 %1560
      %v1562 = vsel %vm1271, %v1549, -inf
      %1563 = vmax.xlane.f32.xlu0 %v1562
      %v1564 = vpop.xlane.xlu0 %1563
      %v1565 = vsub.f32 %v1545, %v1552
      %v1566 = vsub.f32 %v1546, %v1555
      %v1567 = vsub.f32 %v1547, %v1558
      %v1568 = vsub.f32 %v1548, %v1561
      %v1569 = vsub.f32 %v1549, %v1564
      %v1570 = vmul.f32 %v1565, 1.442695
      %v1571 = vpow.pop %v1570
      %v1572 = vmul.f32 %v1566, 1.442695
      %v1573 = vpow.pop %v1572
      %v1574 = vmul.f32 %v1567, 1.442695
      %v1575 = vpow.pop %v1574
      %v1576 = vmul.f32 %v1568, 1.442695
      %v1577 = vpow.pop %v1576
      %v1578 = vmul.f32 %v1569, 1.442695
      %v1579 = vpow.pop %v1578
      %v1580 = vsel %vm1271, %v1571, 0.0
      %1581 = vadd.xlane.f32.xlu0 %v1580
      %v1582 = vpop.xlane.xlu0 %1581
      %v1583 = vsel %vm1271, %v1573, 0.0
      %1584 = vadd.xlane.f32.xlu0 %v1583
      %v1585 = vpop.xlane.xlu0 %1584
      %v1586 = vsel %vm1271, %v1575, 0.0
      %1587 = vadd.xlane.f32.xlu0 %v1586
      %v1588 = vpop.xlane.xlu0 %1587
      %v1589 = vsel %vm1271, %v1577, 0.0
      %1590 = vadd.xlane.f32.xlu0 %v1589
      %v1591 = vpop.xlane.xlu0 %1590
      %v1592 = vsel %vm1271, %v1579, 0.0
      %1593 = vadd.xlane.f32.xlu0 %v1592
      %v1594 = vpop.xlane.xlu0 %1593
      %v1595 = vrcp.pop %v1582
      %v1596 = vrcp.pop %v1585
      %v1597 = vrcp.pop %v1588
      %v1598 = vrcp.pop %v1591
      %v1599 = vrcp.pop %v1594
      %v1600 = vmul.f32 %v1571, %v1595
      %v1601 = vmul.f32 %v1573, %v1596
      %v1602 = vmul.f32 %v1575, %v1597
      %v1603 = vmul.f32 %v1577, %v1598
      %v1604 = vmul.f32 %v1579, %v1599
      %v1605 = vpack.c.bf16 %v1601, %v1600
      %v1606 = vpack.c.bf16 %v1603, %v1602
      %v1607 = vpack.c.bf16 %v1604, %v1604
      %1608 = vrot.lane.b32.xlu0 %v1174, 88
      %v1609 = vpop.permute.xlu0 %1608
      %1610 = vrot.lane.b32.xlu0 %v1175, 88
      %v1611 = vpop.permute.xlu0 %1610
      %1612 = vrot.lane.b32.xlu0 %v1176, 88
      %v1613 = vpop.permute.xlu0 %1612
      %v1617 = vsel %vm1271, %v1605, 0
      %v1620 = vsel %vm1271, %v1606, 0
      %v1623 = vsel %vm1271, %v1607, 0
      %v1626 = vsel %vm681, %v1613, 0
      %1628 = vmatprep.subr.bf16.mxu0 0
      %1629 = vmatpush1.bf16.msra.mxu0 %v1609
      %1630 = vmatprep.subr.bf16.mxu0 0
      %1631 = vmatpush1.bf16.msra.mxu0 %v1611
      %1632 = vmatprep.subr.bf16.mxu0 0
      %1633 = vmatpush1.bf16.msra.mxu0 %v1626
      %1634 = vmatprep.subr.bf16.mxu0 0
      %1635 = vmatpush1.bf16.msra.mxu0 0
      %1636 = vmatprep.subr.bf16.mxu0 0
      %1637 = vmatpush1.bf16.msra.mxu0 0
      %1638 = vmatprep.subr.bf16.mxu0 0
      %1639 = vmatpush1.bf16.msra.mxu0 0
      %1640 = vmatprep.subr.bf16.mxu0 0
      %1641 = vmatpush1.bf16.msra.mxu0 0
      %1642 = vmatprep.subr.bf16.mxu0 0
      %1643 = vmatpush1.bf16.msra.mxu0 0
      %1644 = vmatprep.subr.bf16.mxu0 0
      %1645 = vmatpush1.bf16.msra.mxu0 0
      %1646 = vmatprep.subr.bf16.mxu0 0
      %1647 = vmatpush1.bf16.msra.mxu0 0
      %1648 = vmatprep.subr.bf16.mxu0 0
      %1649 = vmatpush1.bf16.msra.mxu0 0
      %1650 = vmatprep.subr.bf16.mxu0 0
      %1651 = vmatpush1.bf16.msra.mxu0 0
      %1652 = vmatprep.subr.bf16.mxu0 0
      %1653 = vmatpush1.bf16.msra.mxu0 0
      %1654 = vmatprep.subr.bf16.mxu0 0
      %1655 = vmatpush1.bf16.msra.mxu0 0
      %1656 = vmatprep.subr.bf16.mxu0 0
      %1657 = vmatpush1.bf16.msra.mxu0 0
      %1658 = vmatprep.subr.bf16.mxu0 0
      %1659 = vmatpush1.bf16.msra.mxu0 0
      %1660 = vmatprep.mubr.bf16.mxu0 0
      %1661 = vmatmul.mubr.bf16.gmra.mrb[0].mxu0 %v1617
      %v1662 = vpop.f32.mrb[0].mxu0
      %v1663 = vadd.f32 0.0, %v1662
      %v1664 = vpop.f32.mrb[0].mxu0
      %v1665 = vpop.f32.mrb[0].mxu0
      %v1666 = vadd.f32 0.0, %v1665
      %v1667 = vpop.f32.mrb[0].mxu0
      %1668 = vmatprep.mubr.bf16.mxu0 0
      %1669 = vmatmul.mubr.bf16.gmra.mrb[0].mxu0 %v1620
      %v1670 = vpop.f32.mrb[0].mxu0
      %v1671 = vadd.f32 0.0, %v1670
      %v1672 = vpop.f32.mrb[0].mxu0
      %v1673 = vpop.f32.mrb[0].mxu0
      %v1674 = vadd.f32 0.0, %v1673
      %v1675 = vpop.f32.mrb[0].mxu0
      %1676 = vmatprep.mubr.bf16.mxu0 0
      %1677 = vmatmul.mubr.bf16.gmra.mrb[0].mxu0 %v1623
      %v1678 = vpop.f32.mrb[0].mxu0
      %v1679 = vadd.f32 0.0, %v1678
      %v1680 = vpop.f32.mrb[0].mxu0
      %v1681 = vpop.f32.mrb[0].mxu0
      %v1682 = vpop.f32.mrb[0].mxu0
      %1683 = vdwg.mxu0
      %v1684 = vmul.f32 %v1663, 0.5
      %v1685 = vmul.f32 %v1666, 0.5
      %v1686 = vmul.f32 %v1671, 0.5
      %v1687 = vmul.f32 %v1674, 0.5
      %v1688 = vmul.f32 %v1679, 0.5
      %v1689 = vmul.f32 %v1663, 0.044715
      %v1690 = vmul.f32 %v1666, 0.044715
      %v1691 = vmul.f32 %v1671, 0.044715
      %v1692 = vmul.f32 %v1674, 0.044715
      %v1693 = vmul.f32 %v1679, 0.044715
      %v1694 = vmul.f32 %v1689, %v1663
      %v1695 = vmul.f32 %v1690, %v1666
      %v1696 = vmul.f32 %v1691, %v1671
      %v1697 = vmul.f32 %v1692, %v1674
      %v1698 = vmul.f32 %v1693, %v1679
      %v1699 = vmul.f32 %v1694, %v1663
      %v1700 = vmul.f32 %v1695, %v1666
      %v1701 = vmul.f32 %v1696, %v1671
      %v1702 = vmul.f32 %v1697, %v1674
      %v1703 = vmul.f32 %v1698, %v1679
      %v1704 = vadd.f32 %v1663, %v1699
      %v1705 = vadd.f32 %v1666, %v1700
      %v1706 = vadd.f32 %v1671, %v1701
      %v1707 = vadd.f32 %v1674, %v1702
      %v1708 = vadd.f32 %v1679, %v1703
      %v1709 = vmul.f32 %v1704, 0.7978846
      %v1710 = vmul.f32 %v1705, 0.7978846
      %v1711 = vmul.f32 %v1706, 0.7978846
      %v1712 = vmul.f32 %v1707, 0.7978846
      %v1713 = vmul.f32 %v1708, 0.7978846
      %v1714 = vtanh.pop %v1709
      %v1715 = vtanh.pop %v1710
      %v1716 = vtanh.pop %v1711
      %v1717 = vtanh.pop %v1712
      %v1718 = vtanh.pop %v1713
      %v1719 = vadd.f32 %v1714, 1.0
      %v1720 = vadd.f32 %v1715, 1.0
      %v1721 = vadd.f32 %v1716, 1.0
      %v1722 = vadd.f32 %v1717, 1.0
      %v1723 = vadd.f32 %v1718, 1.0
      %v1724 = vmul.f32 %v1684, %v1719
      %v1725 = vmul.f32 %v1685, %v1720
      %v1726 = vmul.f32 %v1686, %v1721
      %v1727 = vmul.f32 %v1687, %v1722
      %v1728 = vmul.f32 %v1688, %v1723
      %v1729 = vpack.c.bf16 %v1725, %v1724
      %v1730 = vpack.c.bf16 %v1727, %v1726
      %v1731 = vpack.c.bf16 %v1728, %v1728
      %v1733 = vsel %vm1186, %v1729, 0
      %v1736 = vsel %vm1186, %v1730, 0
      %v1739 = vsel %vm1186, %v1731, 0
      %v1742 = vsel %vm681, %v1089, 0
      %1744 = vmatprep.subr.bf16.mxu0 0
      %1745 = vmatpush1.bf16.msra.mxu0 %v1742
      %1746 = vmatprep.subr.bf16.mxu0 0
      %1747 = vmatpush1.bf16.msra.mxu0 0
      %1748 = vmatprep.subr.bf16.mxu0 0
      %1749 = vmatpush1.bf16.msra.mxu0 0
      %1750 = vmatprep.subr.bf16.mxu0 0
      %1751 = vmatpush1.bf16.msra.mxu0 0
      %1752 = vmatprep.subr.bf16.mxu0 0
      %1753 = vmatpush1.bf16.msra.mxu0 0
      %1754 = vmatprep.subr.bf16.mxu0 0
      %1755 = vmatpush1.bf16.msra.mxu0 0
      %1756 = vmatprep.subr.bf16.mxu0 0
      %1757 = vmatpush1.bf16.msra.mxu0 0
      %1758 = vmatprep.subr.bf16.mxu0 0
      %1759 = vmatpush1.bf16.msra.mxu0 0
      %1760 = vmatprep.subr.bf16.mxu0 0
      %1761 = vmatpush1.bf16.msra.mxu0 0
      %1762 = vmatprep.subr.bf16.mxu0 0
      %1763 = vmatpush1.bf16.msra.mxu0 0
      %1764 = vmatprep.subr.bf16.mxu0 0
      %1765 = vmatpush1.bf16.msra.mxu0 0
      %1766 = vmatprep.subr.bf16.mxu0 0
      %1767 = vmatpush1.bf16.msra.mxu0 0
      %1768 = vmatprep.subr.bf16.mxu0 0
      %1769 = vmatpush1.bf16.msra.mxu0 0
      %1770 = vmatprep.subr.bf16.mxu0 0
      %1771 = vmatpush1.bf16.msra.mxu0 0
      %1772 = vmatprep.subr.bf16.mxu0 0
      %1773 = vmatpush1.bf16.msra.mxu0 0
      %1774 = vmatprep.subr.bf16.mxu0 0
      %1775 = vmatpush1.bf16.msra.mxu0 0
      %1776 = vmatprep.mubr.bf16.mxu0 0
      %1777 = vmatmul.mubr.bf16.gmra.mrb[0].mxu0 %v1733
      %v1778 = vpop.f32.mrb[0].mxu0
      %v1779 = vadd.f32 0.0, %v1778
      %v1780 = vpop.f32.mrb[0].mxu0
      %v1781 = vpop.f32.mrb[0].mxu0
      %v1782 = vadd.f32 0.0, %v1781
      %v1783 = vpop.f32.mrb[0].mxu0
      %1784 = vmatprep.mubr.bf16.mxu0 0
      %1785 = vmatmul.mubr.bf16.gmra.mrb[0].mxu0 %v1736
      %v1786 = vpop.f32.mrb[0].mxu0
      %v1787 = vadd.f32 0.0, %v1786
      %v1788 = vpop.f32.mrb[0].mxu0
      %v1789 = vpop.f32.mrb[0].mxu0
      %v1790 = vadd.f32 0.0, %v1789
      %v1791 = vpop.f32.mrb[0].mxu0
      %1792 = vmatprep.mubr.bf16.mxu0 0
      %1793 = vmatmul.mubr.bf16.gmra.mrb[0].mxu0 %v1739
      %v1794 = vpop.f32.mrb[0].mxu0
      %v1795 = vadd.f32 0.0, %v1794
      %v1796 = vpop.f32.mrb[0].mxu0
      %v1797 = vpop.f32.mrb[0].mxu0
      %v1798 = vpop.f32.mrb[0].mxu0
      %1799 = vdwg.mxu0
      %v1801 = vsel %vm1186, %v1451, 0
      %v1804 = vsel %vm1186, %v1452, 0
      %v1807 = vsel %vm1186, %v1453, 0
      %v1810 = vsel %vm681, %v1088, 0
      %1812 = vmatprep.subr.bf16.mxu0 0
      %1813 = vmatpush1.bf16.msra.mxu0 %v1810
      %1814 = vmatprep.subr.bf16.mxu0 0
      %1815 = vmatpush1.bf16.msra.mxu0 0
      %1816 = vmatprep.subr.bf16.mxu0 0
      %1817 = vmatpush1.bf16.msra.mxu0 0
      %1818 = vmatprep.subr.bf16.mxu0 0
      %1819 = vmatpush1.bf16.msra.mxu0 0
      %1820 = vmatprep.subr.bf16.mxu0 0
      %1821 = vmatpush1.bf16.msra.mxu0 0
      %1822 = vmatprep.subr.bf16.mxu0 0
      %1823 = vmatpush1.bf16.msra.mxu0 0
      %1824 = vmatprep.subr.bf16.mxu0 0
      %1825 = vmatpush1.bf16.msra.mxu0 0
      %1826 = vmatprep.subr.bf16.mxu0 0
      %1827 = vmatpush1.bf16.msra.mxu0 0
      %1828 = vmatprep.subr.bf16.mxu0 0
      %1829 = vmatpush1.bf16.msra.mxu0 0
      %1830 = vmatprep.subr.bf16.mxu0 0
      %1831 = vmatpush1.bf16.msra.mxu0 0
      %1832 = vmatprep.subr.bf16.mxu0 0
      %1833 = vmatpush1.bf16.msra.mxu0 0
      %1834 = vmatprep.subr.bf16.mxu0 0
      %1835 = vmatpush1.bf16.msra.mxu0 0
      %1836 = vmatprep.subr.bf16.mxu0 0
      %1837 = vmatpush1.bf16.msra.mxu0 0
      %1838 = vmatprep.subr.bf16.mxu0 0
      %1839 = vmatpush1.bf16.msra.mxu0 0
      %1840 = vmatprep.subr.bf16.mxu0 0
      %1841 = vmatpush1.bf16.msra.mxu0 0
      %1842 = vmatprep.subr.bf16.mxu0 0
      %1843 = vmatpush1.bf16.msra.mxu0 0
      %1844 = vmatprep.mubr.bf16.mxu0 0
      %1845 = vmatmul.mubr.bf16.gmra.mrb[0].mxu0 %v1801
      %v1846 = vpop.f32.mrb[0].mxu0
      %v1847 = vadd.f32 %v1779, %v1846
      %v1848 = vpop.f32.mrb[0].mxu0
      %v1849 = vpop.f32.mrb[0].mxu0
      %v1850 = vadd.f32 %v1782, %v1849
      %v1851 = vpop.f32.mrb[0].mxu0
      %1852 = vmatprep.mubr.bf16.mxu0 0
      %1853 = vmatmul.mubr.bf16.gmra.mrb[0].mxu0 %v1804
      %v1854 = vpop.f32.mrb[0].mxu0
      %v1855 = vadd.f32 %v1787, %v1854
      %v1856 = vpop.f32.mrb[0].mxu0
      %v1857 = vpop.f32.mrb[0].mxu0
      %v1858 = vadd.f32 %v1790, %v1857
      %v1859 = vpop.f32.mrb[0].mxu0
      %1860 = vmatprep.mubr.bf16.mxu0 0
      %1861 = vmatmul.mubr.bf16.gmra.mrb[0].mxu0 %v1807
      %v1862 = vpop.f32.mrb[0].mxu0
      %v1863 = vadd.f32 %v1795, %v1862
      %v1864 = vpop.f32.mrb[0].mxu0
      %v1865 = vpop.f32.mrb[0].mxu0
      %v1866 = vpop.f32.mrb[0].mxu0
      %1867 = vdwg.mxu0
      %v1869 = vlaneseq
      %v1870 = vshrl.u32 %v1869, 7
      %v1871 = vsub.s32 0, %v1870
      %v1872 = vrot.slane %v1090, %v1871
      %v1874 = vadd.f32 %v1847, %v1872
      %v1875 = vadd.f32 %v1850, %v1872
      %v1876 = vadd.f32 %v1855, %v1872
      %v1877 = vadd.f32 %v1858, %v1872
      %v1878 = vadd.f32 %v1863, %v1872
      %v1879 = vmul.f32 %v1874, %v514
      %v1880 = vmul.f32 %v1875, %v515
      %v1881 = vmul.f32 %v1876, %v516
      %v1882 = vmul.f32 %v1877, %v517
      %v1883 = vmul.f32 %v1878, %v518
      %v1884 = vadd.f32 %v1879, %v1075
      %v1885 = vadd.f32 %v1880, %v1076
      %v1886 = vadd.f32 %v1881, %v1077
      %v1887 = vadd.f32 %v1882, %v1078
      %v1888 = vadd.f32 %v1883, %v1079
      %v1889 = vpack.c.bf16 %v1885, %v1884
      %v1890 = vpack.c.bf16 %v1887, %v1886
      %v1891 = vpack.c.bf16 %v1888, %v1888
      %v1892 = vld [vmem:[%s8] sm:$0xf]
      %v1893 = vld [vmem:[%s8 + $0x4] sm:$0xf]
      %v1894 = vld [vmem:[%s8 + $0x8] sm:$0xf]
      %v1895 = vld [vmem:[%s8 + $0xc] sm:$0xf]
      %v1896 = vld [vmem:[%s9] sm:$0x1]
      %v1897 = vld [vmem:[%s10] sm:$0xf]
      %v1898 = vld [vmem:[%s10 + $0x4] sm:$0xf]
      %v1899 = vld [vmem:[%s11] sm:$0x1]
      %v1901 = vlaneseq
      %v1902 = vshrl.u32 %v1901, 7
      %v1903 = vsub.s32 0, %v1902
      %v1904 = vrot.slane %v1896, %v1903
      %v1910 = vunpack.c.l.b16 %v1892
      %v1911 = vunpack.c.l.b16 %v1893
      %v1912 = vunpack.c.l.b16 %v1894
      %v1913 = vunpack.c.l.b16 %v1895
      %v1914 = vpack.c.b16 %v1911, %v1910
      %v1915 = vpack.c.b16 %v1913, %v1912
      %v1919 = vsel %vm785, %v1889, 0
      %v1922 = vsel %vm785, %v1890, 0
      %v1925 = vsel %vm785, %v1891, 0
      %1927 = vmatprep.subr.bf16.mxu0 0
      %1928 = vmatpush1.bf16.msra.mxu0 %v1914
      %1929 = vmatprep.subr.bf16.mxu0 0
      %1930 = vmatpush1.bf16.msra.mxu0 %v1915
      %1931 = vmatprep.subr.bf16.mxu0 0
      %1932 = vmatpush1.bf16.msra.mxu0 0
      %1933 = vmatprep.subr.bf16.mxu0 0
      %1934 = vmatpush1.bf16.msra.mxu0 0
      %1935 = vmatprep.subr.bf16.mxu0 0
      %1936 = vmatpush1.bf16.msra.mxu0 0
      %1937 = vmatprep.subr.bf16.mxu0 0
      %1938 = vmatpush1.bf16.msra.mxu0 0
      %1939 = vmatprep.subr.bf16.mxu0 0
      %1940 = vmatpush1.bf16.msra.mxu0 0
      %1941 = vmatprep.subr.bf16.mxu0 0
      %1942 = vmatpush1.bf16.msra.mxu0 0
      %1943 = vmatprep.subr.bf16.mxu0 0
      %1944 = vmatpush1.bf16.msra.mxu0 0
      %1945 = vmatprep.subr.bf16.mxu0 0
      %1946 = vmatpush1.bf16.msra.mxu0 0
      %1947 = vmatprep.subr.bf16.mxu0 0
      %1948 = vmatpush1.bf16.msra.mxu0 0
      %1949 = vmatprep.subr.bf16.mxu0 0
      %1950 = vmatpush1.bf16.msra.mxu0 0
      %1951 = vmatprep.subr.bf16.mxu0 0
      %1952 = vmatpush1.bf16.msra.mxu0 0
      %1953 = vmatprep.subr.bf16.mxu0 0
      %1954 = vmatpush1.bf16.msra.mxu0 0
      %1955 = vmatprep.subr.bf16.mxu0 0
      %1956 = vmatpush1.bf16.msra.mxu0 0
      %1957 = vmatprep.subr.bf16.mxu0 0
      %1958 = vmatpush1.bf16.msra.mxu0 0
      %1959 = vmatprep.mubr.bf16.mxu0 0
      %1960 = vmatmul.mubr.bf16.gmra.mrb[0].mxu0 %v1919
      %v1961 = vpop.f32.mrb[0].mxu0
      %v1962 = vadd.f32 %v1904, %v1961
      %v1963 = vpop.f32.mrb[0].mxu0
      %v1964 = vpop.f32.mrb[0].mxu0
      %v1965 = vadd.f32 %v1904, %v1964
      %v1966 = vpop.f32.mrb[0].mxu0
      %1967 = vmatprep.mubr.bf16.mxu0 0
      %1968 = vmatmul.mubr.bf16.gmra.mrb[0].mxu0 %v1922
      %v1969 = vpop.f32.mrb[0].mxu0
      %v1970 = vadd.f32 %v1904, %v1969
      %v1971 = vpop.f32.mrb[0].mxu0
      %v1972 = vpop.f32.mrb[0].mxu0
      %v1973 = vadd.f32 %v1904, %v1972
      %v1974 = vpop.f32.mrb[0].mxu0
      %1975 = vmatprep.mubr.bf16.mxu0 0
      %1976 = vmatmul.mubr.bf16.gmra.mrb[0].mxu0 %v1925
      %v1977 = vpop.f32.mrb[0].mxu0
      %v1978 = vadd.f32 %v1904, %v1977
      %v1979 = vpop.f32.mrb[0].mxu0
      %v1980 = vpop.f32.mrb[0].mxu0
      %v1981 = vpop.f32.mrb[0].mxu0
      %1982 = vdwg.mxu0
      %v1983 = vpack.c.bf16 %v1965, %v1962
      %v1984 = vpack.c.bf16 %v1973, %v1970
      %v1985 = vpack.c.bf16 %v1978, %v1978
      %1989 = vrot.lane.b32.xlu0 %v1983, 112
      %v1990 = vpop.permute.xlu0 %1989
      %1991 = vrot.lane.b32.xlu0 %v1984, 112
      %v1992 = vpop.permute.xlu0 %1991
      %1993 = vrot.lane.b32.xlu0 %v1985, 112
      %v1994 = vpop.permute.xlu0 %1993
      %v1996 = vsel %vm1186, %v1983, 0
      %v1999 = vsel %vm1186, %v1984, 0
      %v2002 = vsel %vm1186, %v1985, 0
      %v2005 = vsel %vm1186, %v1990, 0
      %v2008 = vsel %vm1186, %v1992, 0
      %v2011 = vsel %vm1186, %v1994, 0
      %2013 = vmatprep.subr.bf16.mxu0 0
      %2014 = vmatpush1.bf16.xpose.msra.mxu0 %v2005
      %2015 = vmatprep.subr.bf16.mxu0 0
      %2016 = vmatpush1.bf16.xpose.msra.mxu0 %v2008
      %2017 = vmatprep.subr.bf16.mxu0 0
      %2018 = vmatpush1.bf16.xpose.msra.mxu0 %v2011
      %2019 = vmatprep.subr.bf16.mxu0 0
      %2020 = vmatpush1.bf16.xpose.msra.mxu0 0
      %2021 = vmatprep.subr.bf16.mxu0 0
      %2022 = vmatpush1.bf16.xpose.msra.mxu0 0
      %2023 = vmatprep.subr.bf16.mxu0 0
      %2024 = vmatpush1.bf16.xpose.msra.mxu0 0
      %2025 = vmatprep.subr.bf16.mxu0 0
      %2026 = vmatpush1.bf16.xpose.msra.mxu0 0
      %2027 = vmatprep.subr.bf16.mxu0 0
      %2028 = vmatpush1.bf16.xpose.msra.mxu0 0
      %2029 = vmatprep.subr.bf16.mxu0 0
      %2030 = vmatpush1.bf16.xpose.msra.mxu0 0
      %2031 = vmatprep.subr.bf16.mxu0 0
      %2032 = vmatpush1.bf16.xpose.msra.mxu0 0
      %2033 = vmatprep.subr.bf16.mxu0 0
      %2034 = vmatpush1.bf16.xpose.msra.mxu0 0
      %2035 = vmatprep.subr.bf16.mxu0 0
      %2036 = vmatpush1.bf16.xpose.msra.mxu0 0
      %2037 = vmatprep.subr.bf16.mxu0 0
      %2038 = vmatpush1.bf16.xpose.msra.mxu0 0
      %2039 = vmatprep.subr.bf16.mxu0 0
      %2040 = vmatpush1.bf16.xpose.msra.mxu0 0
      %2041 = vmatprep.subr.bf16.mxu0 0
      %2042 = vmatpush1.bf16.xpose.msra.mxu0 0
      %2043 = vmatprep.subr.bf16.mxu0 0
      %2044 = vmatpush1.bf16.xpose.msra.mxu0 0
      %2045 = vmatprep.mubr.bf16.mxu0 0
      %2046 = vmatmul.mubr.bf16.gmra.mrb[0].mxu0 %v1996
      %v2047 = vpop.f32.mrb[0].mxu0
      %v2048 = vadd.f32 0.0, %v2047
      %v2049 = vpop.f32.mrb[0].mxu0
      %v2050 = vpop.f32.mrb[0].mxu0
      %v2051 = vadd.f32 0.0, %v2050
      %v2052 = vpop.f32.mrb[0].mxu0
      %2053 = vmatprep.mubr.bf16.mxu0 0
      %2054 = vmatmul.mubr.bf16.gmra.mrb[0].mxu0 %v1999
      %v2055 = vpop.f32.mrb[0].mxu0
      %v2056 = vadd.f32 0.0, %v2055
      %v2057 = vpop.f32.mrb[0].mxu0
      %v2058 = vpop.f32.mrb[0].mxu0
      %v2059 = vadd.f32 0.0, %v2058
      %v2060 = vpop.f32.mrb[0].mxu0
      %2061 = vmatprep.mubr.bf16.mxu0 0
      %2062 = vmatmul.mubr.bf16.gmra.mrb[0].mxu0 %v2002
      %v2063 = vpop.f32.mrb[0].mxu0
      %v2064 = vadd.f32 0.0, %v2063
      %v2065 = vpop.f32.mrb[0].mxu0
      %v2066 = vpop.f32.mrb[0].mxu0
      %v2067 = vpop.f32.mrb[0].mxu0
      %2068 = vdwg.mxu0
      %v2069 = vmul.f32 %v2048, 0.35355338
      %v2070 = vmul.f32 %v2051, 0.35355338
      %v2071 = vmul.f32 %v2056, 0.35355338
      %v2072 = vmul.f32 %v2059, 0.35355338
      %v2073 = vmul.f32 %v2064, 0.35355338
      %v2074 = vadd.f32 %v2069, %v600
      %v2075 = vadd.f32 %v2070, %v601
      %v2076 = vadd.f32 %v2071, %v602
      %v2077 = vadd.f32 %v2072, %v603
      %v2078 = vadd.f32 %v2073, %v604
      %v2079 = vsel %vm1271, %v2074, -inf
      %2080 = vmax.xlane.f32.xlu0 %v2079
      %v2081 = vpop.xlane.xlu0 %2080
      %v2082 = vsel %vm1271, %v2075, -inf
      %2083 = vmax.xlane.f32.xlu0 %v2082
      %v2084 = vpop.xlane.xlu0 %2083
      %v2085 = vsel %vm1271, %v2076, -inf
      %2086 = vmax.xlane.f32.xlu0 %v2085
      %v2087 = vpop.xlane.xlu0 %2086
      %v2088 = vsel %vm1271, %v2077, -inf
      %2089 = vmax.xlane.f32.xlu0 %v2088
      %v2090 = vpop.xlane.xlu0 %2089
      %v2091 = vsel %vm1271, %v2078, -inf
      %2092 = vmax.xlane.f32.xlu0 %v2091
      %v2093 = vpop.xlane.xlu0 %2092
      %v2094 = vsub.f32 %v2074, %v2081
      %v2095 = vsub.f32 %v2075, %v2084
      %v2096 = vsub.f32 %v2076, %v2087
      %v2097 = vsub.f32 %v2077, %v2090
      %v2098 = vsub.f32 %v2078, %v2093
      %v2099 = vmul.f32 %v2094, 1.442695
      %v2100 = vpow.pop %v2099
      %v2101 = vmul.f32 %v2095, 1.442695
      %v2102 = vpow.pop %v2101
      %v2103 = vmul.f32 %v2096, 1.442695
      %v2104 = vpow.pop %v2103
      %v2105 = vmul.f32 %v2097, 1.442695
      %v2106 = vpow.pop %v2105
      %v2107 = vmul.f32 %v2098, 1.442695
      %v2108 = vpow.pop %v2107
      %v2109 = vsel %vm1271, %v2100, 0.0
      %2110 = vadd.xlane.f32.xlu0 %v2109
      %v2111 = vpop.xlane.xlu0 %2110
      %v2112 = vsel %vm1271, %v2102, 0.0
      %2113 = vadd.xlane.f32.xlu0 %v2112
      %v2114 = vpop.xlane.xlu0 %2113
      %v2115 = vsel %vm1271, %v2104, 0.0
      %2116 = vadd.xlane.f32.xlu0 %v2115
      %v2117 = vpop.xlane.xlu0 %2116
      %v2118 = vsel %vm1271, %v2106, 0.0
      %2119 = vadd.xlane.f32.xlu0 %v2118
      %v2120 = vpop.xlane.xlu0 %2119
      %v2121 = vsel %vm1271, %v2108, 0.0
      %2122 = vadd.xlane.f32.xlu0 %v2121
      %v2123 = vpop.xlane.xlu0 %2122
      %v2124 = vrcp.pop %v2111
      %v2125 = vrcp.pop %v2114
      %v2126 = vrcp.pop %v2117
      %v2127 = vrcp.pop %v2120
      %v2128 = vrcp.pop %v2123
      %v2129 = vmul.f32 %v2100, %v2124
      %v2130 = vmul.f32 %v2102, %v2125
      %v2131 = vmul.f32 %v2104, %v2126
      %v2132 = vmul.f32 %v2106, %v2127
      %v2133 = vmul.f32 %v2108, %v2128
      %v2134 = vpack.c.bf16 %v2130, %v2129
      %v2135 = vpack.c.bf16 %v2132, %v2131
      %v2136 = vpack.c.bf16 %v2133, %v2133
      %2137 = vrot.lane.b32.xlu0 %v1983, 96
      %v2138 = vpop.permute.xlu0 %2137
      %2139 = vrot.lane.b32.xlu0 %v1984, 96
      %v2140 = vpop.permute.xlu0 %2139
      %2141 = vrot.lane.b32.xlu0 %v1985, 96
      %v2142 = vpop.permute.xlu0 %2141
      %v2146 = vsel %vm1271, %v2134, 0
      %v2149 = vsel %vm1271, %v2135, 0
      %v2152 = vsel %vm1271, %v2136, 0
      %v2155 = vsel %vm681, %v2142, 0
      %2157 = vmatprep.subr.bf16.mxu0 0
      %2158 = vmatpush1.bf16.msra.mxu0 %v2138
      %2159 = vmatprep.subr.bf16.mxu0 0
      %2160 = vmatpush1.bf16.msra.mxu0 %v2140
      %2161 = vmatprep.subr.bf16.mxu0 0
      %2162 = vmatpush1.bf16.msra.mxu0 %v2155
      %2163 = vmatprep.subr.bf16.mxu0 0
      %2164 = vmatpush1.bf16.msra.mxu0 0
      %2165 = vmatprep.subr.bf16.mxu0 0
      %2166 = vmatpush1.bf16.msra.mxu0 0
      %2167 = vmatprep.subr.bf16.mxu0 0
      %2168 = vmatpush1.bf16.msra.mxu0 0
      %2169 = vmatprep.subr.bf16.mxu0 0
      %2170 = vmatpush1.bf16.msra.mxu0 0
      %2171 = vmatprep.subr.bf16.mxu0 0
      %2172 = vmatpush1.bf16.msra.mxu0 0
      %2173 = vmatprep.subr.bf16.mxu0 0
      %2174 = vmatpush1.bf16.msra.mxu0 0
      %2175 = vmatprep.subr.bf16.mxu0 0
      %2176 = vmatpush1.bf16.msra.mxu0 0
      %2177 = vmatprep.subr.bf16.mxu0 0
      %2178 = vmatpush1.bf16.msra.mxu0 0
      %2179 = vmatprep.subr.bf16.mxu0 0
      %2180 = vmatpush1.bf16.msra.mxu0 0
      %2181 = vmatprep.subr.bf16.mxu0 0
      %2182 = vmatpush1.bf16.msra.mxu0 0
      %2183 = vmatprep.subr.bf16.mxu0 0
      %2184 = vmatpush1.bf16.msra.mxu0 0
      %2185 = vmatprep.subr.bf16.mxu0 0
      %2186 = vmatpush1.bf16.msra.mxu0 0
      %2187 = vmatprep.subr.bf16.mxu0 0
      %2188 = vmatpush1.bf16.msra.mxu0 0
      %2189 = vmatprep.mubr.bf16.mxu0 0
      %2190 = vmatmul.mubr.bf16.gmra.mrb[0].mxu0 %v2146
      %v2191 = vpop.f32.mrb[0].mxu0
      %v2192 = vadd.f32 0.0, %v2191
      %v2193 = vpop.f32.mrb[0].mxu0
      %v2194 = vpop.f32.mrb[0].mxu0
      %v2195 = vadd.f32 0.0, %v2194
      %v2196 = vpop.f32.mrb[0].mxu0
      %2197 = vmatprep.mubr.bf16.mxu0 0
      %2198 = vmatmul.mubr.bf16.gmra.mrb[0].mxu0 %v2149
      %v2199 = vpop.f32.mrb[0].mxu0
      %v2200 = vadd.f32 0.0, %v2199
      %v2201 = vpop.f32.mrb[0].mxu0
      %v2202 = vpop.f32.mrb[0].mxu0
      %v2203 = vadd.f32 0.0, %v2202
      %v2204 = vpop.f32.mrb[0].mxu0
      %2205 = vmatprep.mubr.bf16.mxu0 0
      %2206 = vmatmul.mubr.bf16.gmra.mrb[0].mxu0 %v2152
      %v2207 = vpop.f32.mrb[0].mxu0
      %v2208 = vadd.f32 0.0, %v2207
      %v2209 = vpop.f32.mrb[0].mxu0
      %v2210 = vpop.f32.mrb[0].mxu0
      %v2211 = vpop.f32.mrb[0].mxu0
      %2212 = vdwg.mxu0
      %v2213 = vmul.f32 %v2192, 0.5
      %v2214 = vmul.f32 %v2195, 0.5
      %v2215 = vmul.f32 %v2200, 0.5
      %v2216 = vmul.f32 %v2203, 0.5
      %v2217 = vmul.f32 %v2208, 0.5
      %v2218 = vmul.f32 %v2192, 0.044715
      %v2219 = vmul.f32 %v2195, 0.044715
      %v2220 = vmul.f32 %v2200, 0.044715
      %v2221 = vmul.f32 %v2203, 0.044715
      %v2222 = vmul.f32 %v2208, 0.044715
      %v2223 = vmul.f32 %v2218, %v2192
      %v2224 = vmul.f32 %v2219, %v2195
      %v2225 = vmul.f32 %v2220, %v2200
      %v2226 = vmul.f32 %v2221, %v2203
      %v2227 = vmul.f32 %v2222, %v2208
      %v2228 = vmul.f32 %v2223, %v2192
      %v2229 = vmul.f32 %v2224, %v2195
      %v2230 = vmul.f32 %v2225, %v2200
      %v2231 = vmul.f32 %v2226, %v2203
      %v2232 = vmul.f32 %v2227, %v2208
      %v2233 = vadd.f32 %v2192, %v2228
      %v2234 = vadd.f32 %v2195, %v2229
      %v2235 = vadd.f32 %v2200, %v2230
      %v2236 = vadd.f32 %v2203, %v2231
      %v2237 = vadd.f32 %v2208, %v2232
      %v2238 = vmul.f32 %v2233, 0.7978846
      %v2239 = vmul.f32 %v2234, 0.7978846
      %v2240 = vmul.f32 %v2235, 0.7978846
      %v2241 = vmul.f32 %v2236, 0.7978846
      %v2242 = vmul.f32 %v2237, 0.7978846
      %v2243 = vtanh.pop %v2238
      %v2244 = vtanh.pop %v2239
      %v2245 = vtanh.pop %v2240
      %v2246 = vtanh.pop %v2241
      %v2247 = vtanh.pop %v2242
      %v2248 = vadd.f32 %v2243, 1.0
      %v2249 = vadd.f32 %v2244, 1.0
      %v2250 = vadd.f32 %v2245, 1.0
      %v2251 = vadd.f32 %v2246, 1.0
      %v2252 = vadd.f32 %v2247, 1.0
      %v2253 = vmul.f32 %v2213, %v2248
      %v2254 = vmul.f32 %v2214, %v2249
      %v2255 = vmul.f32 %v2215, %v2250
      %v2256 = vmul.f32 %v2216, %v2251
      %v2257 = vmul.f32 %v2217, %v2252
      %v2258 = vpack.c.bf16 %v2254, %v2253
      %v2259 = vpack.c.bf16 %v2256, %v2255
      %v2260 = vpack.c.bf16 %v2257, %v2257
      %2261 = vrot.lane.b32.xlu0 %v1983, 120
      %v2262 = vpop.permute.xlu0 %2261
      %2263 = vrot.lane.b32.xlu0 %v1984, 120
      %v2264 = vpop.permute.xlu0 %2263
      %2265 = vrot.lane.b32.xlu0 %v1985, 120
      %v2266 = vpop.permute.xlu0 %2265
      %2267 = vrot.lane.b32.xlu0 %v1983, 104
      %v2268 = vpop.permute.xlu0 %2267
      %2269 = vrot.lane.b32.xlu0 %v1984, 104
      %v2270 = vpop.permute.xlu0 %2269
      %2271 = vrot.lane.b32.xlu0 %v1985, 104
      %v2272 = vpop.permute.xlu0 %2271
      %v2274 = vsel %vm1186, %v2262, 0
      %v2277 = vsel %vm1186, %v2264, 0
      %v2280 = vsel %vm1186, %v2266, 0
      %v2283 = vsel %vm1186, %v2268, 0
      %v2286 = vsel %vm1186, %v2270, 0
      %v2289 = vsel %vm1186, %v2272, 0
      %2291 = vmatprep.subr.bf16.mxu0 0
      %2292 = vmatpush1.bf16.xpose.msra.mxu0 %v2283
      %2293 = vmatprep.subr.bf16.mxu0 0
      %2294 = vmatpush1.bf16.xpose.msra.mxu0 %v2286
      %2295 = vmatprep.subr.bf16.mxu0 0
      %2296 = vmatpush1.bf16.xpose.msra.mxu0 %v2289
      %2297 = vmatprep.subr.bf16.mxu0 0
      %2298 = vmatpush1.bf16.xpose.msra.mxu0 0
      %2299 = vmatprep.subr.bf16.mxu0 0
      %2300 = vmatpush1.bf16.xpose.msra.mxu0 0
      %2301 = vmatprep.subr.bf16.mxu0 0
      %2302 = vmatpush1.bf16.xpose.msra.mxu0 0
      %2303 = vmatprep.subr.bf16.mxu0 0
      %2304 = vmatpush1.bf16.xpose.msra.mxu0 0
      %2305 = vmatprep.subr.bf16.mxu0 0
      %2306 = vmatpush1.bf16.xpose.msra.mxu0 0
      %2307 = vmatprep.subr.bf16.mxu0 0
      %2308 = vmatpush1.bf16.xpose.msra.mxu0 0
      %2309 = vmatprep.subr.bf16.mxu0 0
      %2310 = vmatpush1.bf16.xpose.msra.mxu0 0
      %2311 = vmatprep.subr.bf16.mxu0 0
      %2312 = vmatpush1.bf16.xpose.msra.mxu0 0
      %2313 = vmatprep.subr.bf16.mxu0 0
      %2314 = vmatpush1.bf16.xpose.msra.mxu0 0
      %2315 = vmatprep.subr.bf16.mxu0 0
      %2316 = vmatpush1.bf16.xpose.msra.mxu0 0
      %2317 = vmatprep.subr.bf16.mxu0 0
      %2318 = vmatpush1.bf16.xpose.msra.mxu0 0
      %2319 = vmatprep.subr.bf16.mxu0 0
      %2320 = vmatpush1.bf16.xpose.msra.mxu0 0
      %2321 = vmatprep.subr.bf16.mxu0 0
      %2322 = vmatpush1.bf16.xpose.msra.mxu0 0
      %2323 = vmatprep.mubr.bf16.mxu0 0
      %2324 = vmatmul.mubr.bf16.gmra.mrb[0].mxu0 %v2274
      %v2325 = vpop.f32.mrb[0].mxu0
      %v2326 = vadd.f32 0.0, %v2325
      %v2327 = vpop.f32.mrb[0].mxu0
      %v2328 = vpop.f32.mrb[0].mxu0
      %v2329 = vadd.f32 0.0, %v2328
      %v2330 = vpop.f32.mrb[0].mxu0
      %2331 = vmatprep.mubr.bf16.mxu0 0
      %2332 = vmatmul.mubr.bf16.gmra.mrb[0].mxu0 %v2277
      %v2333 = vpop.f32.mrb[0].mxu0
      %v2334 = vadd.f32 0.0, %v2333
      %v2335 = vpop.f32.mrb[0].mxu0
      %v2336 = vpop.f32.mrb[0].mxu0
      %v2337 = vadd.f32 0.0, %v2336
      %v2338 = vpop.f32.mrb[0].mxu0
      %2339 = vmatprep.mubr.bf16.mxu0 0
      %2340 = vmatmul.mubr.bf16.gmra.mrb[0].mxu0 %v2280
      %v2341 = vpop.f32.mrb[0].mxu0
      %v2342 = vadd.f32 0.0, %v2341
      %v2343 = vpop.f32.mrb[0].mxu0
      %v2344 = vpop.f32.mrb[0].mxu0
      %v2345 = vpop.f32.mrb[0].mxu0
      %2346 = vdwg.mxu0
      %v2347 = vmul.f32 %v2326, 0.35355338
      %v2348 = vmul.f32 %v2329, 0.35355338
      %v2349 = vmul.f32 %v2334, 0.35355338
      %v2350 = vmul.f32 %v2337, 0.35355338
      %v2351 = vmul.f32 %v2342, 0.35355338
      %v2352 = vadd.f32 %v2347, %v600
      %v2353 = vadd.f32 %v2348, %v601
      %v2354 = vadd.f32 %v2349, %v602
      %v2355 = vadd.f32 %v2350, %v603
      %v2356 = vadd.f32 %v2351, %v604
      %v2357 = vsel %vm1271, %v2352, -inf
      %2358 = vmax.xlane.f32.xlu0 %v2357
      %v2359 = vpop.xlane.xlu0 %2358
      %v2360 = vsel %vm1271, %v2353, -inf
      %2361 = vmax.xlane.f32.xlu0 %v2360
      %v2362 = vpop.xlane.xlu0 %2361
      %v2363 = vsel %vm1271, %v2354, -inf
      %2364 = vmax.xlane.f32.xlu0 %v2363
      %v2365 = vpop.xlane.xlu0 %2364
      %v2366 = vsel %vm1271, %v2355, -inf
      %2367 = vmax.xlane.f32.xlu0 %v2366
      %v2368 = vpop.xlane.xlu0 %2367
      %v2369 = vsel %vm1271, %v2356, -inf
      %2370 = vmax.xlane.f32.xlu0 %v2369
      %v2371 = vpop.xlane.xlu0 %2370
      %v2372 = vsub.f32 %v2352, %v2359
      %v2373 = vsub.f32 %v2353, %v2362
      %v2374 = vsub.f32 %v2354, %v2365
      %v2375 = vsub.f32 %v2355, %v2368
      %v2376 = vsub.f32 %v2356, %v2371
      %v2377 = vmul.f32 %v2372, 1.442695
      %v2378 = vpow.pop %v2377
      %v2379 = vmul.f32 %v2373, 1.442695
      %v2380 = vpow.pop %v2379
      %v2381 = vmul.f32 %v2374, 1.442695
      %v2382 = vpow.pop %v2381
      %v2383 = vmul.f32 %v2375, 1.442695
      %v2384 = vpow.pop %v2383
      %v2385 = vmul.f32 %v2376, 1.442695
      %v2386 = vpow.pop %v2385
      %v2387 = vsel %vm1271, %v2378, 0.0
      %2388 = vadd.xlane.f32.xlu0 %v2387
      %v2389 = vpop.xlane.xlu0 %2388
      %v2390 = vsel %vm1271, %v2380, 0.0
      %2391 = vadd.xlane.f32.xlu0 %v2390
      %v2392 = vpop.xlane.xlu0 %2391
      %v2393 = vsel %vm1271, %v2382, 0.0
      %2394 = vadd.xlane.f32.xlu0 %v2393
      %v2395 = vpop.xlane.xlu0 %2394
      %v2396 = vsel %vm1271, %v2384, 0.0
      %2397 = vadd.xlane.f32.xlu0 %v2396
      %v2398 = vpop.xlane.xlu0 %2397
      %v2399 = vsel %vm1271, %v2386, 0.0
      %2400 = vadd.xlane.f32.xlu0 %v2399
      %v2401 = vpop.xlane.xlu0 %2400
      %v2402 = vrcp.pop %v2389
      %v2403 = vrcp.pop %v2392
      %v2404 = vrcp.pop %v2395
      %v2405 = vrcp.pop %v2398
      %v2406 = vrcp.pop %v2401
      %v2407 = vmul.f32 %v2378, %v2402
      %v2408 = vmul.f32 %v2380, %v2403
      %v2409 = vmul.f32 %v2382, %v2404
      %v2410 = vmul.f32 %v2384, %v2405
      %v2411 = vmul.f32 %v2386, %v2406
      %v2412 = vpack.c.bf16 %v2408, %v2407
      %v2413 = vpack.c.bf16 %v2410, %v2409
      %v2414 = vpack.c.bf16 %v2411, %v2411
      %2415 = vrot.lane.b32.xlu0 %v1983, 88
      %v2416 = vpop.permute.xlu0 %2415
      %2417 = vrot.lane.b32.xlu0 %v1984, 88
      %v2418 = vpop.permute.xlu0 %2417
      %2419 = vrot.lane.b32.xlu0 %v1985, 88
      %v2420 = vpop.permute.xlu0 %2419
      %v2424 = vsel %vm1271, %v2412, 0
      %v2427 = vsel %vm1271, %v2413, 0
      %v2430 = vsel %vm1271, %v2414, 0
      %v2433 = vsel %vm681, %v2420, 0
      %2435 = vmatprep.subr.bf16.mxu0 0
      %2436 = vmatpush1.bf16.msra.mxu0 %v2416
      %2437 = vmatprep.subr.bf16.mxu0 0
      %2438 = vmatpush1.bf16.msra.mxu0 %v2418
      %2439 = vmatprep.subr.bf16.mxu0 0
      %2440 = vmatpush1.bf16.msra.mxu0 %v2433
      %2441 = vmatprep.subr.bf16.mxu0 0
      %2442 = vmatpush1.bf16.msra.mxu0 0
      %2443 = vmatprep.subr.bf16.mxu0 0
      %2444 = vmatpush1.bf16.msra.mxu0 0
      %2445 = vmatprep.subr.bf16.mxu0 0
      %2446 = vmatpush1.bf16.msra.mxu0 0
      %2447 = vmatprep.subr.bf16.mxu0 0
      %2448 = vmatpush1.bf16.msra.mxu0 0
      %2449 = vmatprep.subr.bf16.mxu0 0
      %2450 = vmatpush1.bf16.msra.mxu0 0
      %2451 = vmatprep.subr.bf16.mxu0 0
      %2452 = vmatpush1.bf16.msra.mxu0 0
      %2453 = vmatprep.subr.bf16.mxu0 0
      %2454 = vmatpush1.bf16.msra.mxu0 0
      %2455 = vmatprep.subr.bf16.mxu0 0
      %2456 = vmatpush1.bf16.msra.mxu0 0
      %2457 = vmatprep.subr.bf16.mxu0 0
      %2458 = vmatpush1.bf16.msra.mxu0 0
      %2459 = vmatprep.subr.bf16.mxu0 0
      %2460 = vmatpush1.bf16.msra.mxu0 0
      %2461 = vmatprep.subr.bf16.mxu0 0
      %2462 = vmatpush1.bf16.msra.mxu0 0
      %2463 = vmatprep.subr.bf16.mxu0 0
      %2464 = vmatpush1.bf16.msra.mxu0 0
      %2465 = vmatprep.subr.bf16.mxu0 0
      %2466 = vmatpush1.bf16.msra.mxu0 0
      %2467 = vmatprep.mubr.bf16.mxu0 0
      %2468 = vmatmul.mubr.bf16.gmra.mrb[0].mxu0 %v2424
      %v2469 = vpop.f32.mrb[0].mxu0
      %v2470 = vadd.f32 0.0, %v2469
      %v2471 = vpop.f32.mrb[0].mxu0
      %v2472 = vpop.f32.mrb[0].mxu0
      %v2473 = vadd.f32 0.0, %v2472
      %v2474 = vpop.f32.mrb[0].mxu0
      %2475 = vmatprep.mubr.bf16.mxu0 0
      %2476 = vmatmul.mubr.bf16.gmra.mrb[0].mxu0 %v2427
      %v2477 = vpop.f32.mrb[0].mxu0
      %v2478 = vadd.f32 0.0, %v2477
      %v2479 = vpop.f32.mrb[0].mxu0
      %v2480 = vpop.f32.mrb[0].mxu0
      %v2481 = vadd.f32 0.0, %v2480
      %v2482 = vpop.f32.mrb[0].mxu0
      %2483 = vmatprep.mubr.bf16.mxu0 0
      %2484 = vmatmul.mubr.bf16.gmra.mrb[0].mxu0 %v2430
      %v2485 = vpop.f32.mrb[0].mxu0
      %v2486 = vadd.f32 0.0, %v2485
      %v2487 = vpop.f32.mrb[0].mxu0
      %v2488 = vpop.f32.mrb[0].mxu0
      %v2489 = vpop.f32.mrb[0].mxu0
      %2490 = vdwg.mxu0
      %v2491 = vmul.f32 %v2470, 0.5
      %v2492 = vmul.f32 %v2473, 0.5
      %v2493 = vmul.f32 %v2478, 0.5
      %v2494 = vmul.f32 %v2481, 0.5
      %v2495 = vmul.f32 %v2486, 0.5
      %v2496 = vmul.f32 %v2470, 0.044715
      %v2497 = vmul.f32 %v2473, 0.044715
      %v2498 = vmul.f32 %v2478, 0.044715
      %v2499 = vmul.f32 %v2481, 0.044715
      %v2500 = vmul.f32 %v2486, 0.044715
      %v2501 = vmul.f32 %v2496, %v2470
      %v2502 = vmul.f32 %v2497, %v2473
      %v2503 = vmul.f32 %v2498, %v2478
      %v2504 = vmul.f32 %v2499, %v2481
      %v2505 = vmul.f32 %v2500, %v2486
      %v2506 = vmul.f32 %v2501, %v2470
      %v2507 = vmul.f32 %v2502, %v2473
      %v2508 = vmul.f32 %v2503, %v2478
      %v2509 = vmul.f32 %v2504, %v2481
      %v2510 = vmul.f32 %v2505, %v2486
      %v2511 = vadd.f32 %v2470, %v2506
      %v2512 = vadd.f32 %v2473, %v2507
      %v2513 = vadd.f32 %v2478, %v2508
      %v2514 = vadd.f32 %v2481, %v2509
      %v2515 = vadd.f32 %v2486, %v2510
      %v2516 = vmul.f32 %v2511, 0.7978846
      %v2517 = vmul.f32 %v2512, 0.7978846
      %v2518 = vmul.f32 %v2513, 0.7978846
      %v2519 = vmul.f32 %v2514, 0.7978846
      %v2520 = vmul.f32 %v2515, 0.7978846
      %v2521 = vtanh.pop %v2516
      %v2522 = vtanh.pop %v2517
      %v2523 = vtanh.pop %v2518
      %v2524 = vtanh.pop %v2519
      %v2525 = vtanh.pop %v2520
      %v2526 = vadd.f32 %v2521, 1.0
      %v2527 = vadd.f32 %v2522, 1.0
      %v2528 = vadd.f32 %v2523, 1.0
      %v2529 = vadd.f32 %v2524, 1.0
      %v2530 = vadd.f32 %v2525, 1.0
      %v2531 = vmul.f32 %v2491, %v2526
      %v2532 = vmul.f32 %v2492, %v2527
      %v2533 = vmul.f32 %v2493, %v2528
      %v2534 = vmul.f32 %v2494, %v2529
      %v2535 = vmul.f32 %v2495, %v2530
      %v2536 = vpack.c.bf16 %v2532, %v2531
      %v2537 = vpack.c.bf16 %v2534, %v2533
      %v2538 = vpack.c.bf16 %v2535, %v2535
      %v2540 = vsel %vm1186, %v2536, 0
      %v2543 = vsel %vm1186, %v2537, 0
      %v2546 = vsel %vm1186, %v2538, 0
      %v2549 = vsel %vm681, %v1898, 0
      %2551 = vmatprep.subr.bf16.mxu0 0
      %2552 = vmatpush1.bf16.msra.mxu0 %v2549
      %2553 = vmatprep.subr.bf16.mxu0 0
      %2554 = vmatpush1.bf16.msra.mxu0 0
      %2555 = vmatprep.subr.bf16.mxu0 0
      %2556 = vmatpush1.bf16.msra.mxu0 0
      %2557 = vmatprep.subr.bf16.mxu0 0
      %2558 = vmatpush1.bf16.msra.mxu0 0
      %2559 = vmatprep.subr.bf16.mxu0 0
      %2560 = vmatpush1.bf16.msra.mxu0 0
      %2561 = vmatprep.subr.bf16.mxu0 0
      %2562 = vmatpush1.bf16.msra.mxu0 0
      %2563 = vmatprep.subr.bf16.mxu0 0
      %2564 = vmatpush1.bf16.msra.mxu0 0
      %2565 = vmatprep.subr.bf16.mxu0 0
      %2566 = vmatpush1.bf16.msra.mxu0 0
      %2567 = vmatprep.subr.bf16.mxu0 0
      %2568 = vmatpush1.bf16.msra.mxu0 0
      %2569 = vmatprep.subr.bf16.mxu0 0
      %2570 = vmatpush1.bf16.msra.mxu0 0
      %2571 = vmatprep.subr.bf16.mxu0 0
      %2572 = vmatpush1.bf16.msra.mxu0 0
      %2573 = vmatprep.subr.bf16.mxu0 0
      %2574 = vmatpush1.bf16.msra.mxu0 0
      %2575 = vmatprep.subr.bf16.mxu0 0
      %2576 = vmatpush1.bf16.msra.mxu0 0
      %2577 = vmatprep.subr.bf16.mxu0 0
      %2578 = vmatpush1.bf16.msra.mxu0 0
      %2579 = vmatprep.subr.bf16.mxu0 0
      %2580 = vmatpush1.bf16.msra.mxu0 0
      %2581 = vmatprep.subr.bf16.mxu0 0
      %2582 = vmatpush1.bf16.msra.mxu0 0
      %2583 = vmatprep.mubr.bf16.mxu0 0
      %2584 = vmatmul.mubr.bf16.gmra.mrb[0].mxu0 %v2540
      %v2585 = vpop.f32.mrb[0].mxu0
      %v2586 = vadd.f32 0.0, %v2585
      %v2587 = vpop.f32.mrb[0].mxu0
      %v2588 = vpop.f32.mrb[0].mxu0
      %v2589 = vadd.f32 0.0, %v2588
      %v2590 = vpop.f32.mrb[0].mxu0
      %2591 = vmatprep.mubr.bf16.mxu0 0
      %2592 = vmatmul.mubr.bf16.gmra.mrb[0].mxu0 %v2543
      %v2593 = vpop.f32.mrb[0].mxu0
      %v2594 = vadd.f32 0.0, %v2593
      %v2595 = vpop.f32.mrb[0].mxu0
      %v2596 = vpop.f32.mrb[0].mxu0
      %v2597 = vadd.f32 0.0, %v2596
      %v2598 = vpop.f32.mrb[0].mxu0
      %2599 = vmatprep.mubr.bf16.mxu0 0
      %2600 = vmatmul.mubr.bf16.gmra.mrb[0].mxu0 %v2546
      %v2601 = vpop.f32.mrb[0].mxu0
      %v2602 = vadd.f32 0.0, %v2601
      %v2603 = vpop.f32.mrb[0].mxu0
      %v2604 = vpop.f32.mrb[0].mxu0
      %v2605 = vpop.f32.mrb[0].mxu0
      %2606 = vdwg.mxu0
      %v2608 = vsel %vm1186, %v2258, 0
      %v2611 = vsel %vm1186, %v2259, 0
      %v2614 = vsel %vm1186, %v2260, 0
      %v2617 = vsel %vm681, %v1897, 0
      %2619 = vmatprep.subr.bf16.mxu0 0
      %2620 = vmatpush1.bf16.msra.mxu0 %v2617
      %2621 = vmatprep.subr.bf16.mxu0 0
      %2622 = vmatpush1.bf16.msra.mxu0 0
      %2623 = vmatprep.subr.bf16.mxu0 0
      %2624 = vmatpush1.bf16.msra.mxu0 0
      %2625 = vmatprep.subr.bf16.mxu0 0
      %2626 = vmatpush1.bf16.msra.mxu0 0
      %2627 = vmatprep.subr.bf16.mxu0 0
      %2628 = vmatpush1.bf16.msra.mxu0 0
      %2629 = vmatprep.subr.bf16.mxu0 0
      %2630 = vmatpush1.bf16.msra.mxu0 0
      %2631 = vmatprep.subr.bf16.mxu0 0
      %2632 = vmatpush1.bf16.msra.mxu0 0
      %2633 = vmatprep.subr.bf16.mxu0 0
      %2634 = vmatpush1.bf16.msra.mxu0 0
      %2635 = vmatprep.subr.bf16.mxu0 0
      %2636 = vmatpush1.bf16.msra.mxu0 0
      %2637 = vmatprep.subr.bf16.mxu0 0
      %2638 = vmatpush1.bf16.msra.mxu0 0
      %2639 = vmatprep.subr.bf16.mxu0 0
      %2640 = vmatpush1.bf16.msra.mxu0 0
      %2641 = vmatprep.subr.bf16.mxu0 0
      %2642 = vmatpush1.bf16.msra.mxu0 0
      %2643 = vmatprep.subr.bf16.mxu0 0
      %2644 = vmatpush1.bf16.msra.mxu0 0
      %2645 = vmatprep.subr.bf16.mxu0 0
      %2646 = vmatpush1.bf16.msra.mxu0 0
      %2647 = vmatprep.subr.bf16.mxu0 0
      %2648 = vmatpush1.bf16.msra.mxu0 0
      %2649 = vmatprep.subr.bf16.mxu0 0
      %2650 = vmatpush1.bf16.msra.mxu0 0
      %2651 = vmatprep.mubr.bf16.mxu0 0
      %2652 = vmatmul.mubr.bf16.gmra.mrb[0].mxu0 %v2608
      %v2653 = vpop.f32.mrb[0].mxu0
      %v2654 = vadd.f32 %v2586, %v2653
      %v2655 = vpop.f32.mrb[0].mxu0
      %v2656 = vpop.f32.mrb[0].mxu0
      %v2657 = vadd.f32 %v2589, %v2656
      %v2658 = vpop.f32.mrb[0].mxu0
      %2659 = vmatprep.mubr.bf16.mxu0 0
      %2660 = vmatmul.mubr.bf16.gmra.mrb[0].mxu0 %v2611
      %v2661 = vpop.f32.mrb[0].mxu0
      %v2662 = vadd.f32 %v2594, %v2661
      %v2663 = vpop.f32.mrb[0].mxu0
      %v2664 = vpop.f32.mrb[0].mxu0
      %v2665 = vadd.f32 %v2597, %v2664
      %v2666 = vpop.f32.mrb[0].mxu0
      %2667 = vmatprep.mubr.bf16.mxu0 0
      %2668 = vmatmul.mubr.bf16.gmra.mrb[0].mxu0 %v2614
      %v2669 = vpop.f32.mrb[0].mxu0
      %v2670 = vadd.f32 %v2602, %v2669
      %v2671 = vpop.f32.mrb[0].mxu0
      %v2672 = vpop.f32.mrb[0].mxu0
      %v2673 = vpop.f32.mrb[0].mxu0
      %2674 = vdwg.mxu0
      %v2676 = vlaneseq
      %v2677 = vshrl.u32 %v2676, 7
      %v2678 = vsub.s32 0, %v2677
      %v2679 = vrot.slane %v1899, %v2678
      %v2681 = vadd.f32 %v2654, %v2679
      %v2682 = vadd.f32 %v2657, %v2679
      %v2683 = vadd.f32 %v2662, %v2679
      %v2684 = vadd.f32 %v2665, %v2679
      %v2685 = vadd.f32 %v2670, %v2679
      %v2686 = vmul.f32 %v2681, %v514
      %v2687 = vmul.f32 %v2682, %v515
      %v2688 = vmul.f32 %v2683, %v516
      %v2689 = vmul.f32 %v2684, %v517
      %v2690 = vmul.f32 %v2685, %v518
      %v2691 = vadd.f32 %v1884, %v2686
      %v2692 = vadd.f32 %v1885, %v2687
      %v2693 = vadd.f32 %v1886, %v2688
      %v2694 = vadd.f32 %v1887, %v2689
      %v2695 = vadd.f32 %v1888, %v2690
      %v2696 = vpack.c.bf16 %v2692, %v2691
      %v2697 = vpack.c.bf16 %v2694, %v2693
      %v2698 = vpack.c.bf16 %v2695, %v2695
      %v2699 = vld [vmem:[%s12] sm:$0xf]
      %v2700 = vld [vmem:[%s12 + $0x4] sm:$0xf]
      %v2701 = vld [vmem:[%s12 + $0x8] sm:$0xf]
      %v2702 = vld [vmem:[%s12 + $0xc] sm:$0xf]
      %v2703 = vld [vmem:[%s13] sm:$0x1]
      %v2705 = vlaneseq
      %v2706 = vshrl.u32 %v2705, 7
      %v2707 = vsub.s32 0, %v2706
      %v2708 = vrot.slane %v2703, %v2707
      %v2714 = vunpack.c.l.b16 %v2699
      %v2715 = vunpack.c.l.b16 %v2700
      %v2716 = vunpack.c.l.b16 %v2701
      %v2717 = vunpack.c.l.b16 %v2702
      %v2718 = vpack.c.b16 %v2715, %v2714
      %v2719 = vpack.c.b16 %v2717, %v2716
      %v2723 = vsel %vm785, %v2696, 0
      %v2726 = vsel %vm785, %v2697, 0
      %v2729 = vsel %vm785, %v2698, 0
      %2731 = vmatprep.subr.bf16.mxu0 0
      %2732 = vmatpush1.bf16.msra.mxu0 %v2718
      %2733 = vmatprep.subr.bf16.mxu0 0
      %2734 = vmatpush1.bf16.msra.mxu0 %v2719
      %2735 = vmatprep.subr.bf16.mxu0 0
      %2736 = vmatpush1.bf16.msra.mxu0 0
      %2737 = vmatprep.subr.bf16.mxu0 0
      %2738 = vmatpush1.bf16.msra.mxu0 0
      %2739 = vmatprep.subr.bf16.mxu0 0
      %2740 = vmatpush1.bf16.msra.mxu0 0
      %2741 = vmatprep.subr.bf16.mxu0 0
      %2742 = vmatpush1.bf16.msra.mxu0 0
      %2743 = vmatprep.subr.bf16.mxu0 0
      %2744 = vmatpush1.bf16.msra.mxu0 0
      %2745 = vmatprep.subr.bf16.mxu0 0
      %2746 = vmatpush1.bf16.msra.mxu0 0
      %2747 = vmatprep.subr.bf16.mxu0 0
      %2748 = vmatpush1.bf16.msra.mxu0 0
      %2749 = vmatprep.subr.bf16.mxu0 0
      %2750 = vmatpush1.bf16.msra.mxu0 0
      %2751 = vmatprep.subr.bf16.mxu0 0
      %2752 = vmatpush1.bf16.msra.mxu0 0
      %2753 = vmatprep.subr.bf16.mxu0 0
      %2754 = vmatpush1.bf16.msra.mxu0 0
      %2755 = vmatprep.subr.bf16.mxu0 0
      %2756 = vmatpush1.bf16.msra.mxu0 0
      %2757 = vmatprep.subr.bf16.mxu0 0
      %2758 = vmatpush1.bf16.msra.mxu0 0
      %2759 = vmatprep.subr.bf16.mxu0 0
      %2760 = vmatpush1.bf16.msra.mxu0 0
      %2761 = vmatprep.subr.bf16.mxu0 0
      %2762 = vmatpush1.bf16.msra.mxu0 0
      %2763 = vmatprep.mubr.bf16.mxu0 0
      %2764 = vmatmul.mubr.bf16.gmra.mrb[0].mxu0 %v2723
      %v2765 = vpop.f32.mrb[0].mxu0
      %v2766 = vadd.f32 %v2708, %v2765
      %v2767 = vpop.f32.mrb[0].mxu0
      %v2768 = vpop.f32.mrb[0].mxu0
      %v2769 = vadd.f32 %v2708, %v2768
      %v2770 = vpop.f32.mrb[0].mxu0
      %2771 = vmatprep.mubr.bf16.mxu0 0
      %2772 = vmatmul.mubr.bf16.gmra.mrb[0].mxu0 %v2726
      %v2773 = vpop.f32.mrb[0].mxu0
      %v2774 = vadd.f32 %v2708, %v2773
      %v2775 = vpop.f32.mrb[0].mxu0
      %v2776 = vpop.f32.mrb[0].mxu0
      %v2777 = vadd.f32 %v2708, %v2776
      %v2778 = vpop.f32.mrb[0].mxu0
      %2779 = vmatprep.mubr.bf16.mxu0 0
      %2780 = vmatmul.mubr.bf16.gmra.mrb[0].mxu0 %v2729
      %v2781 = vpop.f32.mrb[0].mxu0
      %v2782 = vadd.f32 %v2708, %v2781
      %v2783 = vpop.f32.mrb[0].mxu0
      %v2784 = vpop.f32.mrb[0].mxu0
      %v2785 = vpop.f32.mrb[0].mxu0
      %2786 = vdwg.mxu0
      %v2787 = vadd.f32 %v2766, %v691
      %v2788 = vadd.f32 %v2769, %v692
      %v2789 = vadd.f32 %v2774, %v693
      %v2790 = vadd.f32 %v2777, %v694
      %v2791 = vadd.f32 %v2782, %v695
      %v2792 = vmul.f32 %v2787, %v514
      %v2793 = vmul.f32 %v2788, %v515
      %v2794 = vmul.f32 %v2789, %v516
      %v2795 = vmul.f32 %v2790, %v517
      %v2796 = vmul.f32 %v2791, %v518
      %2797 = vxpose.xlu0.b32.start [1/16] %v2792, 128
      %2798 = vxpose.xlu0.b32.cont [2/16] %v2793, 128
      %2799 = vxpose.xlu0.b32.cont [3/16] %v2794, 128
      %2800 = vxpose.xlu0.b32.cont [4/16] 0.0, 128
      %2801 = vxpose.xlu0.b32.cont [5/16] 0.0, 128
      %2802 = vxpose.xlu0.b32.cont [6/16] 0.0, 128
      %2803 = vxpose.xlu0.b32.cont [7/16] 0.0, 128
      %2804 = vxpose.xlu0.b32.cont [8/16] 0.0, 128
      %2805 = vxpose.xlu0.b32.cont [9/16] 0.0, 128
      %2806 = vxpose.xlu0.b32.cont [10/16] 0.0, 128
      %2807 = vxpose.xlu0.b32.cont [11/16] 0.0, 128
      %2808 = vxpose.xlu0.b32.cont [12/16] 0.0, 128
      %2809 = vxpose.xlu0.b32.cont [13/16] 0.0, 128
      %2810 = vxpose.xlu0.b32.cont [14/16] 0.0, 128
      %2811 = vxpose.xlu0.b32.cont [15/16] 0.0, 128
      %2812 = vxpose.xlu0.b32.end [16/16] 0.0, 128
      %v2813 = vpop.trf.xlu0
      %v2814 = vpop.trf.xlu0
      %v2815 = vpop.trf.xlu0
      %v2816 = vpop.trf.xlu0
      %v2817 = vpop.trf.xlu0
      %v2818 = vpop.trf.xlu0
      %v2819 = vpop.trf.xlu0
      %v2820 = vpop.trf.xlu0
      %v2821 = vpop.trf.xlu0
      %v2822 = vpop.trf.xlu0
      %v2823 = vpop.trf.xlu0
      %v2824 = vpop.trf.xlu0
      %v2825 = vpop.trf.xlu0
      %v2826 = vpop.trf.xlu0
      %v2827 = vpop.trf.xlu0
      %v2828 = vpop.trf.xlu0
      %vm2829 = vcmask 162816
      %2830 = vst.msk [vmem:[%s454] sm:$0xff] %vm2829, %v2813
      %2831 = vst.msk [vmem:[%s454 + $0x8] sm:$0xff] %vm2829, %v2814
      %2832 = vst.msk [vmem:[%s454 + $0x10] sm:$0xff] %vm2829, %v2815
      %2833 = vst.msk [vmem:[%s454 + $0x18] sm:$0xff] %vm2829, %v2816
      %v2837 = vrot.slane %v2794, 4
      %v2838 = vrot.slane %v2795, 4
      %v2839 = vsel %vm681, %v2837, %v2838
      %v2840 = vrot.slane %v2796, 4
      %v2841 = vsel %vm681, %v2838, %v2840
      %2845 = vxpose.xlu0.b32.start [1/16] %v2839, 128
      %2846 = vxpose.xlu0.b32.cont [2/16] %v2841, 128
      %2847 = vxpose.xlu0.b32.cont [3/16] %v2840, 128
      %2848 = vxpose.xlu0.b32.cont [4/16] 0.0, 128
      %2849 = vxpose.xlu0.b32.cont [5/16] 0.0, 128
      %2850 = vxpose.xlu0.b32.cont [6/16] 0.0, 128
      %2851 = vxpose.xlu0.b32.cont [7/16] 0.0, 128
      %2852 = vxpose.xlu0.b32.cont [8/16] 0.0, 128
      %2853 = vxpose.xlu0.b32.cont [9/16] 0.0, 128
      %2854 = vxpose.xlu0.b32.cont [10/16] 0.0, 128
      %2855 = vxpose.xlu0.b32.cont [11/16] 0.0, 128
      %2856 = vxpose.xlu0.b32.cont [12/16] 0.0, 128
      %2857 = vxpose.xlu0.b32.cont [13/16] 0.0, 128
      %2858 = vxpose.xlu0.b32.cont [14/16] 0.0, 128
      %2859 = vxpose.xlu0.b32.cont [15/16] 0.0, 128
      %2860 = vxpose.xlu0.b32.end [16/16] 0.0, 128
      %v2861 = vpop.trf.xlu0
      %v2862 = vpop.trf.xlu0
      %v2863 = vpop.trf.xlu0
      %v2864 = vpop.trf.xlu0
      %v2865 = vpop.trf.xlu0
      %v2866 = vpop.trf.xlu0
      %v2867 = vpop.trf.xlu0
      %v2868 = vpop.trf.xlu0
      %v2869 = vpop.trf.xlu0
      %v2870 = vpop.trf.xlu0
      %v2871 = vpop.trf.xlu0
      %v2872 = vpop.trf.xlu0
      %v2873 = vpop.trf.xlu0
      %v2874 = vpop.trf.xlu0
      %v2875 = vpop.trf.xlu0
      %v2876 = vpop.trf.xlu0
      %s2877 = scalar_lea.vmem %s454, 32
      %2878 = vst.msk [vmem:[%s2877] sm:$0xff] %vm2829, %v2861
      %2879 = vst.msk [vmem:[%s2877 + $0x8] sm:$0xff] %vm2829, %v2862
      %2880 = vst.msk [vmem:[%s2877 + $0x10] sm:$0xff] %vm2829, %v2863
      %2881 = vst.msk [vmem:[%s2877 + $0x18] sm:$0xff] %vm2829, %v2864
      %s2882 = smul.u32 2, %s31
      %p2883 = scmp.lt.s32.totalorder %s2882, 3
      %s2884 = scalar_select %p2883, %s2882, 3
      %s2885 = smul.addr %s2884, 4
      %s2886 = smul.addr %s2885, 8
      %s2887 = scalar_lea.vmem %s14, %s2886
      // Predicated region
      $region73: #{ltc_block_forward.1} parent=71 // pred_check
        %p2888 = pneg %p327
      $region74: #{ltc_block_forward.1} parent=71 // pred_check_branch
        %2890 = sbr.rel (%p2888) target = $region76
      $region75: #{ltc_block_forward.1} parent=71 // pred_region
        %s2891 = smul.u32 2, %s31
      $region76: #{ltc_block_forward.1} parent=71 // pred_fallthru
        _
    $region72: #{ltc_block_forward.1} parent=5 // pred_fallthru
      _
    %p2892 = scmp.le.s32.totalorder 2, %s26
    // Predicated region
    $region77: #{ltc_block_forward.1} parent=5 // pred_check
      %p2893 = pneg %p2892
    $region78: #{ltc_block_forward.1} parent=5 // pred_check_branch
      %2895 = sbr.rel (%p2893) target = $region80
    $region79: #{ltc_block_forward.1} parent=5 // pred_region
      %s2896 = ssub.s32 %s26, 2
      // Predicated region
      $region81: #{ltc_block_forward.1} parent=79 // pred_check
        %p2897 = pneg %p333
      $region82: #{ltc_block_forward.1} parent=79 // pred_check_branch
        %2899 = sbr.rel (%p2897) target = $region84
      $region83: #{ltc_block_forward.1} parent=79 // pred_region
        %s2900 = smul.u32 2, %s32
        %p2901 = scmp.lt.s32.totalorder %s2900, 3
        %s2902 = scalar_select %p2901, %s2900, 3
        %s2903 = smul.addr %s2902, 4
        %s2904 = smul.addr %s2903, 8
        %s2905 = scalar_lea.vmem %s14, %s2904
      $region84: #{ltc_block_forward.1} parent=79 // pred_fallthru
        _
    $region80: #{ltc_block_forward.1} parent=5 // pred_fallthru
      _
  $region6: #{ltc_block_forward.1} parent=0 // loop_footer
    %s30 = sadd.s32 1, %s26
  $region7: #{ltc_block_forward.1} parent=0 // loop_footer_branch
    %25 = sbr.rel target = $region3
  $region8: #{ltc_block_forward.1} parent=0 // loop_exit
    _

</llo_original>
